<compile_context>
chip_gen: v7x
topology: tpu7x:2x2x1
jax: 0.10.0
libtpu: 0.0.40
codegen_flags: <defaults>
</compile_context>

<pallas_src>
import math
from functools import partial

import jax
import jax.numpy as jnp
from jax.experimental import pallas as pl
from jax.experimental.pallas import tpu as pltpu


def _layernorm(x, gamma, beta, eps=1e-5):
    mu = jnp.mean(x, axis=-1, keepdims=True)
    var = jnp.mean((x - mu) ** 2, axis=-1, keepdims=True)
    return (x - mu) * jax.lax.rsqrt(var + eps) * gamma + beta


def _residual_block_kernel(
    x_ref,                      # (Bt, L, D)  f32/bf16
    ln1_g_ref, ln1_b_ref,       # (1, D)      f32
    w_in_ref, b_in_ref,         # (D, 3D) bf16, (1, 3D) f32  (scale folded into Q)
    w_out_ref, b_out_ref,       # (D, D)  bf16, (1, D)  f32
    ln2_g_ref, ln2_b_ref,       # (1, D)      f32
    w_fc_ref, b_fc_ref,         # (D, 4D) bf16, (1, 4D) f32
    w_proj_ref, b_proj_ref,     # (4D, D) bf16, (1, D)  f32
    out_ref,                    # (Bt, L, D)  same dtype as input
    attn_scratch,               # (Bt*L, D)   f32 VMEM scratch (per-head writes)
    *, n_head: int,
):
    Bt, L, D = x_ref.shape
    H = n_head
    Dh = D // H
    M = Bt * L

    # Token-major view: row = b*L + l.  All residual / LN math in f32.
    x = x_ref[...].astype(jnp.float32).reshape(M, D)

    # ---- attention branch -------------------------------------------------
    h1 = _layernorm(x, ln1_g_ref[0], ln1_b_ref[0])

    # QKV projection: weights already transposed to (D, 3D), Q part pre-scaled.
    qkv = jnp.dot(h1.astype(jnp.bfloat16), w_in_ref[...],
                  preferred_element_type=jnp.float32) + b_in_ref[0]      # (M, 3D) f32
    qkv_bf = qkv.astype(jnp.bfloat16)                                    # cast once

    # Per-head attention over the Bt folded batch elements.  Heads stay a
    # small static loop; outputs go straight into the (M, D) f32 scratch.
    # TODO(synk): fold the head axis into the einsum batch dim once the
    # (L, H, Dh) -> (H, L, Dh) relayout lowers reliably in Mosaic.
    for h in range(H):
        qh = qkv_bf[:, h * Dh:(h + 1) * Dh].reshape(Bt, L, Dh)
        kh = qkv_bf[:, D + h * Dh:D + (h + 1) * Dh].reshape(Bt, L, Dh)
        vh = qkv_bf[:, 2 * D + h * Dh:2 * D + (h + 1) * Dh].reshape(Bt, L, Dh)

        s = jnp.einsum("bqd,bkd->bqk", qh, kh,
                       preferred_element_type=jnp.float32)               # (Bt, L, L)
        s = s - jnp.max(s, axis=-1, keepdims=True)
        p = jnp.exp(s)
        denom = jnp.sum(p, axis=-1, keepdims=True)                       # (Bt, L, 1)
        o = jnp.einsum("bqk,bkd->bqd", p.astype(jnp.bfloat16), vh,
                       preferred_element_type=jnp.float32)               # (Bt, L, Dh)
        # Deferred softmax normalization: scale the small (Bt,L,Dh) output.
        o = o * pl.reciprocal(denom, approx=True)
        attn_scratch[:, h * Dh:(h + 1) * Dh] = o.reshape(M, Dh)

    attn = jnp.dot(attn_scratch[...].astype(jnp.bfloat16), w_out_ref[...],
                   preferred_element_type=jnp.float32) + b_out_ref[0]
    x1 = x + attn

    # ---- MLP branch ---------------------------------------------------------
    h2 = _layernorm(x1, ln2_g_ref[0], ln2_b_ref[0])
    fc = jnp.dot(h2.astype(jnp.bfloat16), w_fc_ref[...],
                 preferred_element_type=jnp.float32) + b_fc_ref[0]       # (M, 4D)
    fc = fc.astype(jnp.bfloat16)
    fc = fc * jax.nn.sigmoid(1.702 * fc)                                 # QuickGELU (bf16)
    mlp = jnp.dot(fc, w_proj_ref[...],
                  preferred_element_type=jnp.float32) + b_proj_ref[0]

    out_ref[...] = (x1 + mlp).reshape(Bt, L, D).astype(out_ref.dtype)


def _prepare_params(params, n_head):
    """Host-side: transpose weights, fold 1/sqrt(Dh) into Q, cast weights to bf16."""
    D = params["ln1_g"].shape[-1]
    Dh = D // n_head
    scale = 1.0 / math.sqrt(Dh)
    col_scale = jnp.concatenate(
        [jnp.full((D,), scale, jnp.float32), jnp.ones((2 * D,), jnp.float32)])
    w_in_t = params["w_in"].T * col_scale[None, :]          # (D, 3D)
    b_in = params["b_in"] * col_scale[None, :]              # (1, 3D)
    return dict(
        ln1_g=params["ln1_g"].astype(jnp.float32),
        ln1_b=params["ln1_b"].astype(jnp.float32),
        w_in=w_in_t.astype(jnp.bfloat16),
        b_in=b_in.astype(jnp.float32),
        w_out=params["w_out"].T.astype(jnp.bfloat16),       # (D, D)
        b_out=params["b_out"].astype(jnp.float32),
        ln2_g=params["ln2_g"].astype(jnp.float32),
        ln2_b=params["ln2_b"].astype(jnp.float32),
        w_fc=params["w_fc"].T.astype(jnp.bfloat16),         # (D, 4D)
        b_fc=params["b_fc"].astype(jnp.float32),
        w_proj=params["w_proj"].T.astype(jnp.bfloat16),     # (4D, D)
        b_proj=params["b_proj"].astype(jnp.float32),
    )


def _choose_block_batch(N, L, target_rows=512):
    """Largest divisor Bt of N with Bt*L <= target_rows AND grid (N//Bt) >= 2.

    Keeping the grid >= 2 is what lets the single 'parallel' axis shard across
    v7x's two TensorCores and gives the activation pipeline something to
    overlap.  target_rows=512 keeps M = Bt*L comfortably above one MXU tile.
    """
    best = 1
    for cand in range(1, N + 1):
        if N % cand != 0:
            continue
        if cand * L > max(target_rows, L):
            continue
        if N >= 2 and N // cand < 2:
            continue
        best = cand
    return best


def _vmem_capacity_bytes():
    try:
        return int(pltpu.get_tpu_info().vmem_capacity_bytes)
    except Exception:
        return 64 << 20   # conservative (v7x per-TC VMEM)


def _weight_spec(shape, single_buffer):
    """Full-array BlockSpec for a grid-invariant weight; single-buffered if possible."""
    idx_map = lambda b: (0,) * len(shape)
    if single_buffer:
        try:
            return pl.BlockSpec(shape, idx_map, pipeline_mode=pl.Buffered(1))
        except (TypeError, AttributeError):
            pass   # older jax without pipeline_mode / Buffered
    return pl.BlockSpec(shape, idx_map)


def residual_attention_block_nld(x_nld, params, n_head: int, block_batch=None,
                                 activation_dtype=None):
    """Core entry point. x_nld: (N, L, D).

    activation_dtype: optionally stream activations at the pallas_call boundary
    in a narrower dtype (e.g. jnp.bfloat16) to halve HBM traffic; LN/residual
    math stays f32 inside the kernel.
    """
    if activation_dtype is not None:
        x_nld = x_nld.astype(activation_dtype)
    N, L, D = x_nld.shape
    assert D % n_head == 0, "d_model must be divisible by n_head"
    p = _prepare_params(params, n_head)

    Bt = _choose_block_batch(N, L) if block_batch is None else block_batch
    assert N % Bt == 0, "block_batch must divide the batch size"
    M = Bt * L

    weights = [p["ln1_g"], p["ln1_b"],
               p["w_in"], p["b_in"], p["w_out"], p["b_out"],
               p["ln2_g"], p["ln2_b"],
               p["w_fc"], p["b_fc"], p["w_proj"], p["b_proj"]]

    # ---- VMEM budget -------------------------------------------------------
    # weights: single-buffered (grid-invariant); activations: double-buffered
    # in/out blocks; intermediates: x/h1/x1/h2 (~4x M*D), qkv f32+bf16 (~4.5x),
    # fc f32+bf16 (~6x), attn scratch (1x) plus per-head (Bt,L,L) scores.
    weight_bytes = sum(int(w.size) * w.dtype.itemsize for w in weights)
    io_bytes = 2 * 2 * Bt * L * D * x_nld.dtype.itemsize
    inter_bytes = (16 * M * D + Bt * L * L) * 4
    est = weight_bytes + io_bytes + inter_bytes + (4 << 20)
    vmem_cap = _vmem_capacity_bytes()
    vmem_limit = int(min(max(est, 32 << 20), int(0.85 * vmem_cap)))
    # TODO(synk): if est exceeds 0.85*vmem_cap (very large D on v7x), tile the
    # MLP hidden dim instead of relying on the compiler to spill.

    def _call(single_buffer_weights):
        in_specs = [pl.BlockSpec((Bt, L, D), lambda b: (b, 0, 0))] + [
            _weight_spec(w.shape, single_buffer_weights) for w in weights]
        return pl.pallas_call(
            partial(_residual_block_kernel, n_head=n_head),
            out_shape=jax.ShapeDtypeStruct((N, L, D), x_nld.dtype),
            grid=(N // Bt,),
            in_specs=in_specs,
            out_specs=pl.BlockSpec((Bt, L, D), lambda b: (b, 0, 0)),
            scratch_shapes=[pltpu.VMEM((M, D), jnp.float32)],
            compiler_params=pltpu.CompilerParams(
                dimension_semantics=("parallel",),
                vmem_limit_bytes=vmem_limit),
        )(x_nld, *weights)

    try:
        return _call(True)
    except Exception:
        # Fallback for environments where single-buffered (Buffered(1)) weight
        # blocks are rejected at lowering time.
        return _call(False)


def residual_attention_block(x_lnd, params, n_head: int, block_batch=None,
                             activation_dtype=None):
    """Module-compatible entry point. x_lnd: (L, N, D) (seq-first).

    Note: in a full model keep activations in (N, L, D) and call
    residual_attention_block_nld directly to avoid these HBM transposes.
    """
    x_nld = jnp.transpose(x_lnd, (1, 0, 2))
    out = residual_attention_block_nld(x_nld, params, n_head, block_batch,
                                       activation_dtype=activation_dtype)
    return jnp.transpose(out, (1, 0, 2)).astype(x_lnd.dtype)


# ---------------- pure-JAX reference (for correctness check) ----------------
def _reference(x_lnd, params, n_head):
    L, N, D = x_lnd.shape
    Dh = D // n_head

    def ln(x, g, b):
        mu = x.mean(-1, keepdims=True)
        var = ((x - mu) ** 2).mean(-1, keepdims=True)
        return (x - mu) / jnp.sqrt(var + 1e-5) * g[0] + b[0]

    x = x_lnd
    h1 = ln(x, params["ln1_g"], params["ln1_b"])
    qkv = h1 @ params["w_in"].T + params["b_in"][0]
    q, k, v = jnp.split(qkv, 3, axis=-1)                 # each (L, N, D)

    def heads(t):   # (L, N, D) -> (N, H, L, Dh)
        return jnp.transpose(t.reshape(L, N, n_head, Dh), (1, 2, 0, 3))

    qh, kh, vh = heads(q) / math.sqrt(Dh), heads(k), heads(v)
    s = jnp.einsum("nhld,nhmd->nhlm", qh, kh)
    p = jax.nn.softmax(s, axis=-1)
    o = jnp.einsum("nhlm,nhmd->nhld", p, vh)             # (N, H, L, Dh)
    o = jnp.transpose(o, (2, 0, 1, 3)).reshape(L, N, D)
    attn = o @ params["w_out"].T + params["b_out"][0]
    x1 = x + attn

    h2 = ln(x1, params["ln2_g"], params["ln2_b"])
    fc = h2 @ params["w_fc"].T + params["b_fc"][0]
    fc = fc * jax.nn.sigmoid(1.702 * fc)
    mlp = fc @ params["w_proj"].T + params["b_proj"][0]
    return x1 + mlp


if __name__ == "__main__":
    L, N, D, H = 8, 4, 32, 4    # seq, batch, d_model, n_head

    key = jax.random.PRNGKey(0)
    keys = jax.random.split(key, 8)

    params = {
        "ln1_g": jnp.ones((1, D), jnp.float32),
        "ln1_b": jnp.zeros((1, D), jnp.float32),
        "w_in":  0.02 * jax.random.normal(keys[0], (3 * D, D), jnp.float32),
        "b_in":  0.01 * jax.random.normal(keys[1], (1, 3 * D), jnp.float32),
        "w_out": 0.02 * jax.random.normal(keys[2], (D, D), jnp.float32),
        "b_out": 0.01 * jax.random.normal(keys[3], (1, D), jnp.float32),
        "ln2_g": jnp.ones((1, D), jnp.float32),
        "ln2_b": jnp.zeros((1, D), jnp.float32),
        "w_fc":  0.02 * jax.random.normal(keys[4], (4 * D, D), jnp.float32),
        "b_fc":  0.01 * jax.random.normal(keys[5], (1, 4 * D), jnp.float32),
        "w_proj": 0.02 * jax.random.normal(keys[6], (D, 4 * D), jnp.float32),
        "b_proj": 0.01 * jax.random.normal(keys[7], (1, D), jnp.float32),
    }

    x = jax.random.normal(jax.random.PRNGKey(42), (L, N, D), jnp.float32)

    out = residual_attention_block(x, params, n_head=H)   # Bt auto-chosen (=2, grid=2)
    out = jax.block_until_ready(out)

    ref = _reference(x, params, H)
    assert out.shape == (L, N, D)
    # bf16 MXU feeds + bf16 QuickGELU + approx reciprocal -> looser tolerance
    # than pure f32.
    assert jnp.allclose(out, ref, atol=1e-2, rtol=1e-2), "mismatch vs reference"

    print("KERNEL_OK")
</pallas_src>

<mosaic_0001>
module attributes {stable_mosaic.version = 11 : i64} {
  func.func @_residual_block_kernel(%arg0: i32, %arg1: memref<2x8x32xf32, #tpu.memory_space<vmem>>, %arg2: memref<1x32xf32, #tpu.memory_space<vmem>>, %arg3: memref<1x32xf32, #tpu.memory_space<vmem>>, %arg4: memref<32x96xbf16, #tpu.memory_space<vmem>>, %arg5: memref<1x96xf32, #tpu.memory_space<vmem>>, %arg6: memref<32x32xbf16, #tpu.memory_space<vmem>>, %arg7: memref<1x32xf32, #tpu.memory_space<vmem>>, %arg8: memref<1x32xf32, #tpu.memory_space<vmem>>, %arg9: memref<1x32xf32, #tpu.memory_space<vmem>>, %arg10: memref<32x128xbf16, #tpu.memory_space<vmem>>, %arg11: memref<1x128xf32, #tpu.memory_space<vmem>>, %arg12: memref<128x32xbf16, #tpu.memory_space<vmem>>, %arg13: memref<1x32xf32, #tpu.memory_space<vmem>>, %arg14: memref<2x8x32xf32, #tpu.memory_space<vmem>>, %arg15: memref<16x32xf32, #tpu.memory_space<vmem>>) attributes {dimension_semantics = [#tpu.dimension_semantics<parallel>], iteration_bounds = array<i64: 2>, scalar_prefetch = 0 : i64, scratch_operands = 1 : i64, tpu.core_type = #tpu.core_type<tc>, window_params = [{transform_indices = @transform_0, window_bounds = array<i64: 2, 8, 32>}, {pipeline_mode = #tpu.pipeline_mode<synchronous>, transform_indices = @transform_1, window_bounds = array<i64: 1, 32>}, {pipeline_mode = #tpu.pipeline_mode<synchronous>, transform_indices = @transform_2, window_bounds = array<i64: 1, 32>}, {pipeline_mode = #tpu.pipeline_mode<synchronous>, transform_indices = @transform_3, window_bounds = array<i64: 32, 96>}, {pipeline_mode = #tpu.pipeline_mode<synchronous>, transform_indices = @transform_4, window_bounds = array<i64: 1, 96>}, {pipeline_mode = #tpu.pipeline_mode<synchronous>, transform_indices = @transform_5, window_bounds = array<i64: 32, 32>}, {pipeline_mode = #tpu.pipeline_mode<synchronous>, transform_indices = @transform_6, window_bounds = array<i64: 1, 32>}, {pipeline_mode = #tpu.pipeline_mode<synchronous>, transform_indices = @transform_7, window_bounds = array<i64: 1, 32>}, {pipeline_mode = #tpu.pipeline_mode<synchronous>, transform_indices = @transform_8, window_bounds = array<i64: 1, 32>}, {pipeline_mode = #tpu.pipeline_mode<synchronous>, transform_indices = @transform_9, window_bounds = array<i64: 32, 128>}, {pipeline_mode = #tpu.pipeline_mode<synchronous>, transform_indices = @transform_10, window_bounds = array<i64: 1, 128>}, {pipeline_mode = #tpu.pipeline_mode<synchronous>, transform_indices = @transform_11, window_bounds = array<i64: 128, 32>}, {pipeline_mode = #tpu.pipeline_mode<synchronous>, transform_indices = @transform_12, window_bounds = array<i64: 1, 32>}, {transform_indices = @transform_13, window_bounds = array<i64: 2, 8, 32>}]} {
    %c0 = arith.constant 0 : index
    %c0_0 = arith.constant 0 : index
    %c0_1 = arith.constant 0 : index
    %0 = vector.load %arg1[%c0, %c0_0, %c0_1] : memref<2x8x32xf32, #tpu.memory_space<vmem>>, vector<2x8x32xf32>
    %1 = vector.shape_cast %0 : vector<2x8x32xf32> to vector<16x32xf32>
    %c0_2 = arith.constant 0 : index
    %c0_3 = arith.constant 0 : index
    %2 = vector.load %arg2[%c0_2, %c0_3] : memref<1x32xf32, #tpu.memory_space<vmem>>, vector<1x32xf32>
    %3 = vector.shape_cast %2 : vector<1x32xf32> to vector<32xf32>
    %c0_4 = arith.constant 0 : index
    %c0_5 = arith.constant 0 : index
    %4 = vector.load %arg3[%c0_4, %c0_5] : memref<1x32xf32, #tpu.memory_space<vmem>>, vector<1x32xf32>
    %5 = vector.shape_cast %4 : vector<1x32xf32> to vector<32xf32>
    %cst = arith.constant dense<0.000000e+00> : vector<16xf32>
    %6 = vector.multi_reduction <add>, %1, %cst [1] : vector<16x32xf32> to vector<16xf32>
    %7 = vector.shape_cast %6 : vector<16xf32> to vector<16x1xf32>
    %cst_6 = arith.constant 3.200000e+01 : f32
    %8 = vector.broadcast %cst_6 : f32 to vector<16x1xf32>
    %9 = arith.divf %7, %8 : vector<16x1xf32>
    %10 = vector.broadcast %9 : vector<16x1xf32> to vector<16x32xf32>
    %11 = arith.subf %1, %10 : vector<16x32xf32>
    %12 = arith.mulf %11, %11 : vector<16x32xf32>
    %cst_7 = arith.constant dense<0.000000e+00> : vector<16xf32>
    %13 = vector.multi_reduction <add>, %12, %cst_7 [1] : vector<16x32xf32> to vector<16xf32>
    %14 = vector.shape_cast %13 : vector<16xf32> to vector<16x1xf32>
    %cst_8 = arith.constant 3.200000e+01 : f32
    %15 = vector.broadcast %cst_8 : f32 to vector<16x1xf32>
    %16 = arith.divf %14, %15 : vector<16x1xf32>
    %17 = vector.broadcast %9 : vector<16x1xf32> to vector<16x32xf32>
    %18 = arith.subf %1, %17 : vector<16x32xf32>
    %cst_9 = arith.constant 9.99999974E-6 : f32
    %19 = vector.broadcast %cst_9 : f32 to vector<16x1xf32>
    %20 = arith.addf %16, %19 : vector<16x1xf32>
    %21 = math.rsqrt %20 : vector<16x1xf32>
    %22 = vector.broadcast %21 : vector<16x1xf32> to vector<16x32xf32>
    %23 = arith.mulf %18, %22 : vector<16x32xf32>
    %24 = vector.shape_cast %3 : vector<32xf32> to vector<1x32xf32>
    %25 = vector.broadcast %24 : vector<1x32xf32> to vector<16x32xf32>
    %26 = arith.mulf %23, %25 : vector<16x32xf32>
    %27 = vector.shape_cast %5 : vector<32xf32> to vector<1x32xf32>
    %28 = vector.broadcast %27 : vector<1x32xf32> to vector<16x32xf32>
    %29 = arith.addf %26, %28 : vector<16x32xf32>
    %30 = arith.truncf %29 : vector<16x32xf32> to vector<16x32xbf16>
    %c0_10 = arith.constant 0 : index
    %c0_11 = arith.constant 0 : index
    %31 = vector.load %arg4[%c0_10, %c0_11] : memref<32x96xbf16, #tpu.memory_space<vmem>>, vector<32x96xbf16>
    %cst_12 = arith.constant dense<0.000000e+00> : vector<16x96xf32>
    %32 = tpu.matmul %30, %31, %cst_12 {dimension_numbers = #tpu.dot_dimension_numbers<[1], [0], [0], [1], [0, 0, 1, 1], [], []>} : vector<16x32xbf16>, vector<32x96xbf16>, vector<16x96xf32> -> vector<16x96xf32>
    %c0_13 = arith.constant 0 : index
    %c0_14 = arith.constant 0 : index
    %33 = vector.load %arg5[%c0_13, %c0_14] : memref<1x96xf32, #tpu.memory_space<vmem>>, vector<1x96xf32>
    %34 = vector.shape_cast %33 : vector<1x96xf32> to vector<96xf32>
    %35 = vector.shape_cast %34 : vector<96xf32> to vector<1x96xf32>
    %36 = vector.broadcast %35 : vector<1x96xf32> to vector<16x96xf32>
    %37 = arith.addf %32, %36 : vector<16x96xf32>
    %38 = arith.truncf %37 : vector<16x96xf32> to vector<16x96xbf16>
    %39 = vector.extract_strided_slice %38 {offsets = [0, 0], sizes = [16, 8], strides = [1, 1]} : vector<16x96xbf16> to vector<16x8xbf16>
    %40 = vector.shape_cast %39 : vector<16x8xbf16> to vector<2x8x8xbf16>
    %41 = vector.extract_strided_slice %38 {offsets = [0, 32], sizes = [16, 8], strides = [1, 1]} : vector<16x96xbf16> to vector<16x8xbf16>
    %42 = vector.shape_cast %41 : vector<16x8xbf16> to vector<2x8x8xbf16>
    %43 = vector.extract_strided_slice %38 {offsets = [0, 64], sizes = [16, 8], strides = [1, 1]} : vector<16x96xbf16> to vector<16x8xbf16>
    %44 = vector.shape_cast %43 : vector<16x8xbf16> to vector<2x8x8xbf16>
    "tpu.trace_start"() <{level = 10 : i32, message = "bqd,bkd->bqk"}> : () -> ()
    %cst_15 = arith.constant dense<0.000000e+00> : vector<2x8x8xf32>
    %45 = tpu.matmul %40, %42, %cst_15 {dimension_numbers = #tpu.dot_dimension_numbers<[2], [2], [1], [1], [0, 0, 0, 1, 1, 1], [0], [0]>} : vector<2x8x8xbf16>, vector<2x8x8xbf16>, vector<2x8x8xf32> -> vector<2x8x8xf32>
    "tpu.trace_stop"() : () -> ()
    %cst_16 = arith.constant dense<0xFF800000> : vector<2x8xf32>
    %46 = vector.multi_reduction <maximumf>, %45, %cst_16 [2] : vector<2x8x8xf32> to vector<2x8xf32>
    %47 = vector.shape_cast %46 : vector<2x8xf32> to vector<2x8x1xf32>
    %48 = vector.broadcast %47 : vector<2x8x1xf32> to vector<2x8x8xf32>
    %49 = arith.subf %45, %48 : vector<2x8x8xf32>
    %50 = math.exp %49 : vector<2x8x8xf32>
    %cst_17 = arith.constant dense<0.000000e+00> : vector<2x8xf32>
    %51 = vector.multi_reduction <add>, %50, %cst_17 [2] : vector<2x8x8xf32> to vector<2x8xf32>
    %52 = vector.shape_cast %51 : vector<2x8xf32> to vector<2x8x1xf32>
    %53 = arith.truncf %50 : vector<2x8x8xf32> to vector<2x8x8xbf16>
    "tpu.trace_start"() <{level = 10 : i32, message = "bqk,bkd->bqd"}> : () -> ()
    %cst_18 = arith.constant dense<0.000000e+00> : vector<2x8x8xf32>
    %54 = tpu.matmul %53, %44, %cst_18 {dimension_numbers = #tpu.dot_dimension_numbers<[2], [1], [1], [2], [0, 0, 0, 1, 1, 2], [0], [0]>} : vector<2x8x8xbf16>, vector<2x8x8xbf16>, vector<2x8x8xf32> -> vector<2x8x8xf32>
    "tpu.trace_stop"() : () -> ()
    %55 = tpu.reciprocal %52 {approx = true} : vector<2x8x1xf32> -> vector<2x8x1xf32>
    %56 = vector.broadcast %55 : vector<2x8x1xf32> to vector<2x8x8xf32>
    %57 = arith.mulf %54, %56 : vector<2x8x8xf32>
    %58 = vector.shape_cast %57 : vector<2x8x8xf32> to vector<16x8xf32>
    %c0_19 = arith.constant 0 : index
    %c0_20 = arith.constant 0 : index
    %59 = vector.load %arg15[%c0_19, %c0_20] : memref<16x32xf32, #tpu.memory_space<vmem>>, vector<16x8xf32>
    tpu.vector_store %arg15[%c0_19, %c0_20], %58 {strides = array<i32>} : memref<16x32xf32, #tpu.memory_space<vmem>>, vector<16x8xf32>,
    %60 = vector.extract_strided_slice %38 {offsets = [0, 8], sizes = [16, 8], strides = [1, 1]} : vector<16x96xbf16> to vector<16x8xbf16>
    %61 = vector.shape_cast %60 : vector<16x8xbf16> to vector<2x8x8xbf16>
    %62 = vector.extract_strided_slice %38 {offsets = [0, 40], sizes = [16, 8], strides = [1, 1]} : vector<16x96xbf16> to vector<16x8xbf16>
    %63 = vector.shape_cast %62 : vector<16x8xbf16> to vector<2x8x8xbf16>
    %64 = vector.extract_strided_slice %38 {offsets = [0, 72], sizes = [16, 8], strides = [1, 1]} : vector<16x96xbf16> to vector<16x8xbf16>
    %65 = vector.shape_cast %64 : vector<16x8xbf16> to vector<2x8x8xbf16>
    "tpu.trace_start"() <{level = 10 : i32, message = "bqd,bkd->bqk"}> : () -> ()
    %cst_21 = arith.constant dense<0.000000e+00> : vector<2x8x8xf32>
    %66 = tpu.matmul %61, %63, %cst_21 {dimension_numbers = #tpu.dot_dimension_numbers<[2], [2], [1], [1], [0, 0, 0, 1, 1, 1], [0], [0]>} : vector<2x8x8xbf16>, vector<2x8x8xbf16>, vector<2x8x8xf32> -> vector<2x8x8xf32>
    "tpu.trace_stop"() : () -> ()
    %cst_22 = arith.constant dense<0xFF800000> : vector<2x8xf32>
    %67 = vector.multi_reduction <maximumf>, %66, %cst_22 [2] : vector<2x8x8xf32> to vector<2x8xf32>
    %68 = vector.shape_cast %67 : vector<2x8xf32> to vector<2x8x1xf32>
    %69 = vector.broadcast %68 : vector<2x8x1xf32> to vector<2x8x8xf32>
    %70 = arith.subf %66, %69 : vector<2x8x8xf32>
    %71 = math.exp %70 : vector<2x8x8xf32>
    %cst_23 = arith.constant dense<0.000000e+00> : vector<2x8xf32>
    %72 = vector.multi_reduction <add>, %71, %cst_23 [2] : vector<2x8x8xf32> to vector<2x8xf32>
    %73 = vector.shape_cast %72 : vector<2x8xf32> to vector<2x8x1xf32>
    %74 = arith.truncf %71 : vector<2x8x8xf32> to vector<2x8x8xbf16>
    "tpu.trace_start"() <{level = 10 : i32, message = "bqk,bkd->bqd"}> : () -> ()
    %cst_24 = arith.constant dense<0.000000e+00> : vector<2x8x8xf32>
    %75 = tpu.matmul %74, %65, %cst_24 {dimension_numbers = #tpu.dot_dimension_numbers<[2], [1], [1], [2], [0, 0, 0, 1, 1, 2], [0], [0]>} : vector<2x8x8xbf16>, vector<2x8x8xbf16>, vector<2x8x8xf32> -> vector<2x8x8xf32>
    "tpu.trace_stop"() : () -> ()
    %76 = tpu.reciprocal %73 {approx = true} : vector<2x8x1xf32> -> vector<2x8x1xf32>
    %77 = vector.broadcast %76 : vector<2x8x1xf32> to vector<2x8x8xf32>
    %78 = arith.mulf %75, %77 : vector<2x8x8xf32>
    %79 = vector.shape_cast %78 : vector<2x8x8xf32> to vector<16x8xf32>
    %c0_25 = arith.constant 0 : index
    %c8 = arith.constant 8 : index
    %80 = vector.load %arg15[%c0_25, %c8] : memref<16x32xf32, #tpu.memory_space<vmem>>, vector<16x8xf32>
    tpu.vector_store %arg15[%c0_25, %c8], %79 {strides = array<i32>} : memref<16x32xf32, #tpu.memory_space<vmem>>, vector<16x8xf32>,
    %81 = vector.extract_strided_slice %38 {offsets = [0, 16], sizes = [16, 8], strides = [1, 1]} : vector<16x96xbf16> to vector<16x8xbf16>
    %82 = vector.shape_cast %81 : vector<16x8xbf16> to vector<2x8x8xbf16>
    %83 = vector.extract_strided_slice %38 {offsets = [0, 48], sizes = [16, 8], strides = [1, 1]} : vector<16x96xbf16> to vector<16x8xbf16>
    %84 = vector.shape_cast %83 : vector<16x8xbf16> to vector<2x8x8xbf16>
    %85 = vector.extract_strided_slice %38 {offsets = [0, 80], sizes = [16, 8], strides = [1, 1]} : vector<16x96xbf16> to vector<16x8xbf16>
    %86 = vector.shape_cast %85 : vector<16x8xbf16> to vector<2x8x8xbf16>
    "tpu.trace_start"() <{level = 10 : i32, message = "bqd,bkd->bqk"}> : () -> ()
    %cst_26 = arith.constant dense<0.000000e+00> : vector<2x8x8xf32>
    %87 = tpu.matmul %82, %84, %cst_26 {dimension_numbers = #tpu.dot_dimension_numbers<[2], [2], [1], [1], [0, 0, 0, 1, 1, 1], [0], [0]>} : vector<2x8x8xbf16>, vector<2x8x8xbf16>, vector<2x8x8xf32> -> vector<2x8x8xf32>
    "tpu.trace_stop"() : () -> ()
    %cst_27 = arith.constant dense<0xFF800000> : vector<2x8xf32>
    %88 = vector.multi_reduction <maximumf>, %87, %cst_27 [2] : vector<2x8x8xf32> to vector<2x8xf32>
    %89 = vector.shape_cast %88 : vector<2x8xf32> to vector<2x8x1xf32>
    %90 = vector.broadcast %89 : vector<2x8x1xf32> to vector<2x8x8xf32>
    %91 = arith.subf %87, %90 : vector<2x8x8xf32>
    %92 = math.exp %91 : vector<2x8x8xf32>
    %cst_28 = arith.constant dense<0.000000e+00> : vector<2x8xf32>
    %93 = vector.multi_reduction <add>, %92, %cst_28 [2] : vector<2x8x8xf32> to vector<2x8xf32>
    %94 = vector.shape_cast %93 : vector<2x8xf32> to vector<2x8x1xf32>
    %95 = arith.truncf %92 : vector<2x8x8xf32> to vector<2x8x8xbf16>
    "tpu.trace_start"() <{level = 10 : i32, message = "bqk,bkd->bqd"}> : () -> ()
    %cst_29 = arith.constant dense<0.000000e+00> : vector<2x8x8xf32>
    %96 = tpu.matmul %95, %86, %cst_29 {dimension_numbers = #tpu.dot_dimension_numbers<[2], [1], [1], [2], [0, 0, 0, 1, 1, 2], [0], [0]>} : vector<2x8x8xbf16>, vector<2x8x8xbf16>, vector<2x8x8xf32> -> vector<2x8x8xf32>
    "tpu.trace_stop"() : () -> ()
    %97 = tpu.reciprocal %94 {approx = true} : vector<2x8x1xf32> -> vector<2x8x1xf32>
    %98 = vector.broadcast %97 : vector<2x8x1xf32> to vector<2x8x8xf32>
    %99 = arith.mulf %96, %98 : vector<2x8x8xf32>
    %100 = vector.shape_cast %99 : vector<2x8x8xf32> to vector<16x8xf32>
    %c0_30 = arith.constant 0 : index
    %c16 = arith.constant 16 : index
    %101 = vector.load %arg15[%c0_30, %c16] : memref<16x32xf32, #tpu.memory_space<vmem>>, vector<16x8xf32>
    tpu.vector_store %arg15[%c0_30, %c16], %100 {strides = array<i32>} : memref<16x32xf32, #tpu.memory_space<vmem>>, vector<16x8xf32>,
    %102 = vector.extract_strided_slice %38 {offsets = [0, 24], sizes = [16, 8], strides = [1, 1]} : vector<16x96xbf16> to vector<16x8xbf16>
    %103 = vector.shape_cast %102 : vector<16x8xbf16> to vector<2x8x8xbf16>
    %104 = vector.extract_strided_slice %38 {offsets = [0, 56], sizes = [16, 8], strides = [1, 1]} : vector<16x96xbf16> to vector<16x8xbf16>
    %105 = vector.shape_cast %104 : vector<16x8xbf16> to vector<2x8x8xbf16>
    %106 = vector.extract_strided_slice %38 {offsets = [0, 88], sizes = [16, 8], strides = [1, 1]} : vector<16x96xbf16> to vector<16x8xbf16>
    %107 = vector.shape_cast %106 : vector<16x8xbf16> to vector<2x8x8xbf16>
    "tpu.trace_start"() <{level = 10 : i32, message = "bqd,bkd->bqk"}> : () -> ()
    %cst_31 = arith.constant dense<0.000000e+00> : vector<2x8x8xf32>
    %108 = tpu.matmul %103, %105, %cst_31 {dimension_numbers = #tpu.dot_dimension_numbers<[2], [2], [1], [1], [0, 0, 0, 1, 1, 1], [0], [0]>} : vector<2x8x8xbf16>, vector<2x8x8xbf16>, vector<2x8x8xf32> -> vector<2x8x8xf32>
    "tpu.trace_stop"() : () -> ()
    %cst_32 = arith.constant dense<0xFF800000> : vector<2x8xf32>
    %109 = vector.multi_reduction <maximumf>, %108, %cst_32 [2] : vector<2x8x8xf32> to vector<2x8xf32>
    %110 = vector.shape_cast %109 : vector<2x8xf32> to vector<2x8x1xf32>
    %111 = vector.broadcast %110 : vector<2x8x1xf32> to vector<2x8x8xf32>
    %112 = arith.subf %108, %111 : vector<2x8x8xf32>
    %113 = math.exp %112 : vector<2x8x8xf32>
    %cst_33 = arith.constant dense<0.000000e+00> : vector<2x8xf32>
    %114 = vector.multi_reduction <add>, %113, %cst_33 [2] : vector<2x8x8xf32> to vector<2x8xf32>
    %115 = vector.shape_cast %114 : vector<2x8xf32> to vector<2x8x1xf32>
    %116 = arith.truncf %113 : vector<2x8x8xf32> to vector<2x8x8xbf16>
    "tpu.trace_start"() <{level = 10 : i32, message = "bqk,bkd->bqd"}> : () -> ()
    %cst_34 = arith.constant dense<0.000000e+00> : vector<2x8x8xf32>
    %117 = tpu.matmul %116, %107, %cst_34 {dimension_numbers = #tpu.dot_dimension_numbers<[2], [1], [1], [2], [0, 0, 0, 1, 1, 2], [0], [0]>} : vector<2x8x8xbf16>, vector<2x8x8xbf16>, vector<2x8x8xf32> -> vector<2x8x8xf32>
    "tpu.trace_stop"() : () -> ()
    %118 = tpu.reciprocal %115 {approx = true} : vector<2x8x1xf32> -> vector<2x8x1xf32>
    %119 = vector.broadcast %118 : vector<2x8x1xf32> to vector<2x8x8xf32>
    %120 = arith.mulf %117, %119 : vector<2x8x8xf32>
    %121 = vector.shape_cast %120 : vector<2x8x8xf32> to vector<16x8xf32>
    %c0_35 = arith.constant 0 : index
    %c24 = arith.constant 24 : index
    %122 = vector.load %arg15[%c0_35, %c24] : memref<16x32xf32, #tpu.memory_space<vmem>>, vector<16x8xf32>
    tpu.vector_store %arg15[%c0_35, %c24], %121 {strides = array<i32>} : memref<16x32xf32, #tpu.memory_space<vmem>>, vector<16x8xf32>,
    %c0_36 = arith.constant 0 : index
    %c0_37 = arith.constant 0 : index
    %123 = vector.load %arg15[%c0_36, %c0_37] : memref<16x32xf32, #tpu.memory_space<vmem>>, vector<16x32xf32>
    %124 = arith.truncf %123 : vector<16x32xf32> to vector<16x32xbf16>
    %c0_38 = arith.constant 0 : index
    %c0_39 = arith.constant 0 : index
    %125 = vector.load %arg6[%c0_38, %c0_39] : memref<32x32xbf16, #tpu.memory_space<vmem>>, vector<32x32xbf16>
    %cst_40 = arith.constant dense<0.000000e+00> : vector<16x32xf32>
    %126 = tpu.matmul %124, %125, %cst_40 {dimension_numbers = #tpu.dot_dimension_numbers<[1], [0], [0], [1], [0, 0, 1, 1], [], []>} : vector<16x32xbf16>, vector<32x32xbf16>, vector<16x32xf32> -> vector<16x32xf32>
    %c0_41 = arith.constant 0 : index
    %c0_42 = arith.constant 0 : index
    %127 = vector.load %arg7[%c0_41, %c0_42] : memref<1x32xf32, #tpu.memory_space<vmem>>, vector<1x32xf32>
    %128 = vector.shape_cast %127 : vector<1x32xf32> to vector<32xf32>
    %129 = vector.shape_cast %128 : vector<32xf32> to vector<1x32xf32>
    %130 = vector.broadcast %129 : vector<1x32xf32> to vector<16x32xf32>
    %131 = arith.addf %126, %130 : vector<16x32xf32>
    %132 = arith.addf %1, %131 : vector<16x32xf32>
    %c0_43 = arith.constant 0 : index
    %c0_44 = arith.constant 0 : index
    %133 = vector.load %arg8[%c0_43, %c0_44] : memref<1x32xf32, #tpu.memory_space<vmem>>, vector<1x32xf32>
    %134 = vector.shape_cast %133 : vector<1x32xf32> to vector<32xf32>
    %c0_45 = arith.constant 0 : index
    %c0_46 = arith.constant 0 : index
    %135 = vector.load %arg9[%c0_45, %c0_46] : memref<1x32xf32, #tpu.memory_space<vmem>>, vector<1x32xf32>
    %136 = vector.shape_cast %135 : vector<1x32xf32> to vector<32xf32>
    %cst_47 = arith.constant dense<0.000000e+00> : vector<16xf32>
    %137 = vector.multi_reduction <add>, %132, %cst_47 [1] : vector<16x32xf32> to vector<16xf32>
    %138 = vector.shape_cast %137 : vector<16xf32> to vector<16x1xf32>
    %cst_48 = arith.constant 3.200000e+01 : f32
    %139 = vector.broadcast %cst_48 : f32 to vector<16x1xf32>
    %140 = arith.divf %138, %139 : vector<16x1xf32>
    %141 = vector.broadcast %140 : vector<16x1xf32> to vector<16x32xf32>
    %142 = arith.subf %132, %141 : vector<16x32xf32>
    %143 = arith.mulf %142, %142 : vector<16x32xf32>
    %cst_49 = arith.constant dense<0.000000e+00> : vector<16xf32>
    %144 = vector.multi_reduction <add>, %143, %cst_49 [1] : vector<16x32xf32> to vector<16xf32>
    %145 = vector.shape_cast %144 : vector<16xf32> to vector<16x1xf32>
    %cst_50 = arith.constant 3.200000e+01 : f32
    %146 = vector.broadcast %cst_50 : f32 to vector<16x1xf32>
    %147 = arith.divf %145, %146 : vector<16x1xf32>
    %148 = vector.broadcast %140 : vector<16x1xf32> to vector<16x32xf32>
    %149 = arith.subf %132, %148 : vector<16x32xf32>
    %cst_51 = arith.constant 9.99999974E-6 : f32
    %150 = vector.broadcast %cst_51 : f32 to vector<16x1xf32>
    %151 = arith.addf %147, %150 : vector<16x1xf32>
    %152 = math.rsqrt %151 : vector<16x1xf32>
    %153 = vector.broadcast %152 : vector<16x1xf32> to vector<16x32xf32>
    %154 = arith.mulf %149, %153 : vector<16x32xf32>
    %155 = vector.shape_cast %134 : vector<32xf32> to vector<1x32xf32>
    %156 = vector.broadcast %155 : vector<1x32xf32> to vector<16x32xf32>
    %157 = arith.mulf %154, %156 : vector<16x32xf32>
    %158 = vector.shape_cast %136 : vector<32xf32> to vector<1x32xf32>
    %159 = vector.broadcast %158 : vector<1x32xf32> to vector<16x32xf32>
    %160 = arith.addf %157, %159 : vector<16x32xf32>
    %161 = arith.truncf %160 : vector<16x32xf32> to vector<16x32xbf16>
    %c0_52 = arith.constant 0 : index
    %c0_53 = arith.constant 0 : index
    %162 = vector.load %arg10[%c0_52, %c0_53] : memref<32x128xbf16, #tpu.memory_space<vmem>>, vector<32x128xbf16>
    %cst_54 = arith.constant dense<0.000000e+00> : vector<16x128xf32>
    %163 = tpu.matmul %161, %162, %cst_54 {dimension_numbers = #tpu.dot_dimension_numbers<[1], [0], [0], [1], [0, 0, 1, 1], [], []>} : vector<16x32xbf16>, vector<32x128xbf16>, vector<16x128xf32> -> vector<16x128xf32>
    %c0_55 = arith.constant 0 : index
    %c0_56 = arith.constant 0 : index
    %164 = vector.load %arg11[%c0_55, %c0_56] : memref<1x128xf32, #tpu.memory_space<vmem>>, vector<1x128xf32>
    %165 = vector.shape_cast %164 : vector<1x128xf32> to vector<128xf32>
    %166 = vector.shape_cast %165 : vector<128xf32> to vector<1x128xf32>
    %167 = vector.broadcast %166 : vector<1x128xf32> to vector<16x128xf32>
    %168 = arith.addf %163, %167 : vector<16x128xf32>
    %169 = arith.truncf %168 : vector<16x128xf32> to vector<16x128xbf16>
    %cst_57 = arith.constant 1.703130e+00 : bf16
    %170 = vector.broadcast %cst_57 : bf16 to vector<16x128xbf16>
    %171 = arith.mulf %170, %169 : vector<16x128xbf16>
    %172 = arith.negf %171 : vector<16x128xbf16>
    %173 = math.exp %172 : vector<16x128xbf16>
    %cst_58 = arith.constant 1.000000e+00 : bf16
    %174 = vector.broadcast %cst_58 : bf16 to vector<16x128xbf16>
    %175 = arith.addf %174, %173 : vector<16x128xbf16>
    %176 = arith.divf %174, %175 : vector<16x128xbf16>
    %177 = arith.mulf %169, %176 : vector<16x128xbf16>
    %c0_59 = arith.constant 0 : index
    %c0_60 = arith.constant 0 : index
    %178 = vector.load %arg12[%c0_59, %c0_60] : memref<128x32xbf16, #tpu.memory_space<vmem>>, vector<128x32xbf16>
    %cst_61 = arith.constant dense<0.000000e+00> : vector<16x32xf32>
    %179 = tpu.matmul %177, %178, %cst_61 {dimension_numbers = #tpu.dot_dimension_numbers<[1], [0], [0], [1], [0, 0, 1, 1], [], []>} : vector<16x128xbf16>, vector<128x32xbf16>, vector<16x32xf32> -> vector<16x32xf32>
    %c0_62 = arith.constant 0 : index
    %c0_63 = arith.constant 0 : index
    %180 = vector.load %arg13[%c0_62, %c0_63] : memref<1x32xf32, #tpu.memory_space<vmem>>, vector<1x32xf32>
    %181 = vector.shape_cast %180 : vector<1x32xf32> to vector<32xf32>
    %182 = vector.shape_cast %181 : vector<32xf32> to vector<1x32xf32>
    %183 = vector.broadcast %182 : vector<1x32xf32> to vector<16x32xf32>
    %184 = arith.addf %179, %183 : vector<16x32xf32>
    %185 = arith.addf %132, %184 : vector<16x32xf32>
    %186 = vector.shape_cast %185 : vector<16x32xf32> to vector<2x8x32xf32>
    %c0_64 = arith.constant 0 : index
    %c0_65 = arith.constant 0 : index
    %c0_66 = arith.constant 0 : index
    %187 = vector.load %arg14[%c0_64, %c0_65, %c0_66] : memref<2x8x32xf32, #tpu.memory_space<vmem>>, vector<2x8x32xf32>
    tpu.vector_store %arg14[%c0_64, %c0_65, %c0_66], %186 {strides = array<i32>} : memref<2x8x32xf32, #tpu.memory_space<vmem>>, vector<2x8x32xf32>,
    return
  }
  func.func @transform_0(%arg0: i32) -> (i32, i32, i32) {
    %c0_i32 = arith.constant 0 : i32
    %c0_i32_0 = arith.constant 0 : i32
    %c0_i32_1 = arith.constant 0 : i32
    return %arg0, %c0_i32, %c0_i32_0 : i32, i32, i32
  }
  func.func @transform_1(%arg0: i32) -> (i32, i32) {
    %c0_i32 = arith.constant 0 : i32
    %c0_i32_0 = arith.constant 0 : i32
    %c0_i32_1 = arith.constant 0 : i32
    return %c0_i32, %c0_i32_0 : i32, i32
  }
  func.func @transform_2(%arg0: i32) -> (i32, i32) {
    %c0_i32 = arith.constant 0 : i32
    %c0_i32_0 = arith.constant 0 : i32
    %c0_i32_1 = arith.constant 0 : i32
    return %c0_i32, %c0_i32_0 : i32, i32
  }
  func.func @transform_3(%arg0: i32) -> (i32, i32) {
    %c0_i32 = arith.constant 0 : i32
    %c0_i32_0 = arith.constant 0 : i32
    %c0_i32_1 = arith.constant 0 : i32
    return %c0_i32, %c0_i32_0 : i32, i32
  }
  func.func @transform_4(%arg0: i32) -> (i32, i32) {
    %c0_i32 = arith.constant 0 : i32
    %c0_i32_0 = arith.constant 0 : i32
    %c0_i32_1 = arith.constant 0 : i32
    return %c0_i32, %c0_i32_0 : i32, i32
  }
  func.func @transform_5(%arg0: i32) -> (i32, i32) {
    %c0_i32 = arith.constant 0 : i32
    %c0_i32_0 = arith.constant 0 : i32
    %c0_i32_1 = arith.constant 0 : i32
    return %c0_i32, %c0_i32_0 : i32, i32
  }
  func.func @transform_6(%arg0: i32) -> (i32, i32) {
    %c0_i32 = arith.constant 0 : i32
    %c0_i32_0 = arith.constant 0 : i32
    %c0_i32_1 = arith.constant 0 : i32
    return %c0_i32, %c0_i32_0 : i32, i32
  }
  func.func @transform_7(%arg0: i32) -> (i32, i32) {
    %c0_i32 = arith.constant 0 : i32
    %c0_i32_0 = arith.constant 0 : i32
    %c0_i32_1 = arith.constant 0 : i32
    return %c0_i32, %c0_i32_0 : i32, i32
  }
  func.func @transform_8(%arg0: i32) -> (i32, i32) {
    %c0_i32 = arith.constant 0 : i32
    %c0_i32_0 = arith.constant 0 : i32
    %c0_i32_1 = arith.constant 0 : i32
    return %c0_i32, %c0_i32_0 : i32, i32
  }
  func.func @transform_9(%arg0: i32) -> (i32, i32) {
    %c0_i32 = arith.constant 0 : i32
    %c0_i32_0 = arith.constant 0 : i32
    %c0_i32_1 = arith.constant 0 : i32
    return %c0_i32, %c0_i32_0 : i32, i32
  }
  func.func @transform_10(%arg0: i32) -> (i32, i32) {
    %c0_i32 = arith.constant 0 : i32
    %c0_i32_0 = arith.constant 0 : i32
    %c0_i32_1 = arith.constant 0 : i32
    return %c0_i32, %c0_i32_0 : i32, i32
  }
  func.func @transform_11(%arg0: i32) -> (i32, i32) {
    %c0_i32 = arith.constant 0 : i32
    %c0_i32_0 = arith.constant 0 : i32
    %c0_i32_1 = arith.constant 0 : i32
    return %c0_i32, %c0_i32_0 : i32, i32
  }
  func.func @transform_12(%arg0: i32) -> (i32, i32) {
    %c0_i32 = arith.constant 0 : i32
    %c0_i32_0 = arith.constant 0 : i32
    %c0_i32_1 = arith.constant 0 : i32
    return %c0_i32, %c0_i32_0 : i32, i32
  }
  func.func @transform_13(%arg0: i32) -> (i32, i32, i32) {
    %c0_i32 = arith.constant 0 : i32
    %c0_i32_0 = arith.constant 0 : i32
    %c0_i32_1 = arith.constant 0 : i32
    return %arg0, %c0_i32, %c0_i32_0 : i32, i32, i32
  }
}

module attributes {stable_mosaic.version = 11 : i64} {
  func.func @_residual_block_kernel(%arg0: i32, %arg1: memref<2x8x32xf32, #tpu.memory_space<vmem>>, %arg2: memref<1x32xf32, #tpu.memory_space<vmem>>, %arg3: memref<1x32xf32, #tpu.memory_space<vmem>>, %arg4: memref<32x96xbf16, #tpu.memory_space<vmem>>, %arg5: memref<1x96xf32, #tpu.memory_space<vmem>>, %arg6: memref<32x32xbf16, #tpu.memory_space<vmem>>, %arg7: memref<1x32xf32, #tpu.memory_space<vmem>>, %arg8: memref<1x32xf32, #tpu.memory_space<vmem>>, %arg9: memref<1x32xf32, #tpu.memory_space<vmem>>, %arg10: memref<32x128xbf16, #tpu.memory_space<vmem>>, %arg11: memref<1x128xf32, #tpu.memory_space<vmem>>, %arg12: memref<128x32xbf16, #tpu.memory_space<vmem>>, %arg13: memref<1x32xf32, #tpu.memory_space<vmem>>, %arg14: memref<2x8x32xf32, #tpu.memory_space<vmem>>, %arg15: memref<16x32xf32, #tpu.memory_space<vmem>>) attributes {dimension_semantics = [#tpu.dimension_semantics<parallel>], iteration_bounds = array<i64: 2>, scalar_prefetch = 0 : i64, scratch_operands = 1 : i64, tpu.core_type = #tpu.core_type<tc>, window_params = [{transform_indices = @transform_0, window_bounds = array<i64: 2, 8, 32>}, {pipeline_mode = #tpu.pipeline_mode<synchronous>, transform_indices = @transform_1, window_bounds = array<i64: 1, 32>}, {pipeline_mode = #tpu.pipeline_mode<synchronous>, transform_indices = @transform_2, window_bounds = array<i64: 1, 32>}, {pipeline_mode = #tpu.pipeline_mode<synchronous>, transform_indices = @transform_3, window_bounds = array<i64: 32, 96>}, {pipeline_mode = #tpu.pipeline_mode<synchronous>, transform_indices = @transform_4, window_bounds = array<i64: 1, 96>}, {pipeline_mode = #tpu.pipeline_mode<synchronous>, transform_indices = @transform_5, window_bounds = array<i64: 32, 32>}, {pipeline_mode = #tpu.pipeline_mode<synchronous>, transform_indices = @transform_6, window_bounds = array<i64: 1, 32>}, {pipeline_mode = #tpu.pipeline_mode<synchronous>, transform_indices = @transform_7, window_bounds = array<i64: 1, 32>}, {pipeline_mode = #tpu.pipeline_mode<synchronous>, transform_indices = @transform_8, window_bounds = array<i64: 1, 32>}, {pipeline_mode = #tpu.pipeline_mode<synchronous>, transform_indices = @transform_9, window_bounds = array<i64: 32, 128>}, {pipeline_mode = #tpu.pipeline_mode<synchronous>, transform_indices = @transform_10, window_bounds = array<i64: 1, 128>}, {pipeline_mode = #tpu.pipeline_mode<synchronous>, transform_indices = @transform_11, window_bounds = array<i64: 128, 32>}, {pipeline_mode = #tpu.pipeline_mode<synchronous>, transform_indices = @transform_12, window_bounds = array<i64: 1, 32>}, {transform_indices = @transform_13, window_bounds = array<i64: 2, 8, 32>}]} {
    %c0 = arith.constant 0 : index
    %c0_0 = arith.constant 0 : index
    %c0_1 = arith.constant 0 : index
    %0 = vector.load %arg1[%c0, %c0_0, %c0_1] : memref<2x8x32xf32, #tpu.memory_space<vmem>>, vector<2x8x32xf32>
    %1 = vector.shape_cast %0 : vector<2x8x32xf32> to vector<16x32xf32>
    %c0_2 = arith.constant 0 : index
    %c0_3 = arith.constant 0 : index
    %2 = vector.load %arg2[%c0_2, %c0_3] : memref<1x32xf32, #tpu.memory_space<vmem>>, vector<1x32xf32>
    %3 = vector.shape_cast %2 : vector<1x32xf32> to vector<32xf32>
    %c0_4 = arith.constant 0 : index
    %c0_5 = arith.constant 0 : index
    %4 = vector.load %arg3[%c0_4, %c0_5] : memref<1x32xf32, #tpu.memory_space<vmem>>, vector<1x32xf32>
    %5 = vector.shape_cast %4 : vector<1x32xf32> to vector<32xf32>
    %cst = arith.constant dense<0.000000e+00> : vector<16xf32>
    %6 = vector.multi_reduction <add>, %1, %cst [1] : vector<16x32xf32> to vector<16xf32>
    %7 = vector.shape_cast %6 : vector<16xf32> to vector<16x1xf32>
    %cst_6 = arith.constant 3.200000e+01 : f32
    %8 = vector.broadcast %cst_6 : f32 to vector<16x1xf32>
    %9 = arith.divf %7, %8 : vector<16x1xf32>
    %10 = vector.broadcast %9 : vector<16x1xf32> to vector<16x32xf32>
    %11 = arith.subf %1, %10 : vector<16x32xf32>
    %12 = arith.mulf %11, %11 : vector<16x32xf32>
    %cst_7 = arith.constant dense<0.000000e+00> : vector<16xf32>
    %13 = vector.multi_reduction <add>, %12, %cst_7 [1] : vector<16x32xf32> to vector<16xf32>
    %14 = vector.shape_cast %13 : vector<16xf32> to vector<16x1xf32>
    %cst_8 = arith.constant 3.200000e+01 : f32
    %15 = vector.broadcast %cst_8 : f32 to vector<16x1xf32>
    %16 = arith.divf %14, %15 : vector<16x1xf32>
    %17 = vector.broadcast %9 : vector<16x1xf32> to vector<16x32xf32>
    %18 = arith.subf %1, %17 : vector<16x32xf32>
    %cst_9 = arith.constant 9.99999974E-6 : f32
    %19 = vector.broadcast %cst_9 : f32 to vector<16x1xf32>
    %20 = arith.addf %16, %19 : vector<16x1xf32>
    %21 = math.rsqrt %20 : vector<16x1xf32>
    %22 = vector.broadcast %21 : vector<16x1xf32> to vector<16x32xf32>
    %23 = arith.mulf %18, %22 : vector<16x32xf32>
    %24 = vector.shape_cast %3 : vector<32xf32> to vector<1x32xf32>
    %25 = vector.broadcast %24 : vector<1x32xf32> to vector<16x32xf32>
    %26 = arith.mulf %23, %25 : vector<16x32xf32>
    %27 = vector.shape_cast %5 : vector<32xf32> to vector<1x32xf32>
    %28 = vector.broadcast %27 : vector<1x32xf32> to vector<16x32xf32>
    %29 = arith.addf %26, %28 : vector<16x32xf32>
    %30 = arith.truncf %29 : vector<16x32xf32> to vector<16x32xbf16>
    %c0_10 = arith.constant 0 : index
    %c0_11 = arith.constant 0 : index
    %31 = vector.load %arg4[%c0_10, %c0_11] : memref<32x96xbf16, #tpu.memory_space<vmem>>, vector<32x96xbf16>
    %cst_12 = arith.constant dense<0.000000e+00> : vector<16x96xf32>
    %32 = tpu.matmul %30, %31, %cst_12 {dimension_numbers = #tpu.dot_dimension_numbers<[1], [0], [0], [1], [0, 0, 1, 1], [], []>} : vector<16x32xbf16>, vector<32x96xbf16>, vector<16x96xf32> -> vector<16x96xf32>
    %c0_13 = arith.constant 0 : index
    %c0_14 = arith.constant 0 : index
    %33 = vector.load %arg5[%c0_13, %c0_14] : memref<1x96xf32, #tpu.memory_space<vmem>>, vector<1x96xf32>
    %34 = vector.shape_cast %33 : vector<1x96xf32> to vector<96xf32>
    %35 = vector.shape_cast %34 : vector<96xf32> to vector<1x96xf32>
    %36 = vector.broadcast %35 : vector<1x96xf32> to vector<16x96xf32>
    %37 = arith.addf %32, %36 : vector<16x96xf32>
    %38 = arith.truncf %37 : vector<16x96xf32> to vector<16x96xbf16>
    %39 = vector.extract_strided_slice %38 {offsets = [0, 0], sizes = [16, 8], strides = [1, 1]} : vector<16x96xbf16> to vector<16x8xbf16>
    %40 = vector.shape_cast %39 : vector<16x8xbf16> to vector<2x8x8xbf16>
    %41 = vector.extract_strided_slice %38 {offsets = [0, 32], sizes = [16, 8], strides = [1, 1]} : vector<16x96xbf16> to vector<16x8xbf16>
    %42 = vector.shape_cast %41 : vector<16x8xbf16> to vector<2x8x8xbf16>
    %43 = vector.extract_strided_slice %38 {offsets = [0, 64], sizes = [16, 8], strides = [1, 1]} : vector<16x96xbf16> to vector<16x8xbf16>
    %44 = vector.shape_cast %43 : vector<16x8xbf16> to vector<2x8x8xbf16>
    "tpu.trace_start"() <{level = 10 : i32, message = "bqd,bkd->bqk"}> : () -> ()
    %cst_15 = arith.constant dense<0.000000e+00> : vector<2x8x8xf32>
    %45 = tpu.matmul %40, %42, %cst_15 {dimension_numbers = #tpu.dot_dimension_numbers<[2], [2], [1], [1], [0, 0, 0, 1, 1, 1], [0], [0]>} : vector<2x8x8xbf16>, vector<2x8x8xbf16>, vector<2x8x8xf32> -> vector<2x8x8xf32>
    "tpu.trace_stop"() : () -> ()
    %cst_16 = arith.constant dense<0xFF800000> : vector<2x8xf32>
    %46 = vector.multi_reduction <maximumf>, %45, %cst_16 [2] : vector<2x8x8xf32> to vector<2x8xf32>
    %47 = vector.shape_cast %46 : vector<2x8xf32> to vector<2x8x1xf32>
    %48 = vector.broadcast %47 : vector<2x8x1xf32> to vector<2x8x8xf32>
    %49 = arith.subf %45, %48 : vector<2x8x8xf32>
    %50 = math.exp %49 : vector<2x8x8xf32>
    %cst_17 = arith.constant dense<0.000000e+00> : vector<2x8xf32>
    %51 = vector.multi_reduction <add>, %50, %cst_17 [2] : vector<2x8x8xf32> to vector<2x8xf32>
    %52 = vector.shape_cast %51 : vector<2x8xf32> to vector<2x8x1xf32>
    %53 = arith.truncf %50 : vector<2x8x8xf32> to vector<2x8x8xbf16>
    "tpu.trace_start"() <{level = 10 : i32, message = "bqk,bkd->bqd"}> : () -> ()
    %cst_18 = arith.constant dense<0.000000e+00> : vector<2x8x8xf32>
    %54 = tpu.matmul %53, %44, %cst_18 {dimension_numbers = #tpu.dot_dimension_numbers<[2], [1], [1], [2], [0, 0, 0, 1, 1, 2], [0], [0]>} : vector<2x8x8xbf16>, vector<2x8x8xbf16>, vector<2x8x8xf32> -> vector<2x8x8xf32>
    "tpu.trace_stop"() : () -> ()
    %55 = tpu.reciprocal %52 {approx = true} : vector<2x8x1xf32> -> vector<2x8x1xf32>
    %56 = vector.broadcast %55 : vector<2x8x1xf32> to vector<2x8x8xf32>
    %57 = arith.mulf %54, %56 : vector<2x8x8xf32>
    %58 = vector.shape_cast %57 : vector<2x8x8xf32> to vector<16x8xf32>
    %c0_19 = arith.constant 0 : index
    %c0_20 = arith.constant 0 : index
    %59 = vector.load %arg15[%c0_19, %c0_20] : memref<16x32xf32, #tpu.memory_space<vmem>>, vector<16x8xf32>
    tpu.vector_store %arg15[%c0_19, %c0_20], %58 {strides = array<i32>} : memref<16x32xf32, #tpu.memory_space<vmem>>, vector<16x8xf32>,
    %60 = vector.extract_strided_slice %38 {offsets = [0, 8], sizes = [16, 8], strides = [1, 1]} : vector<16x96xbf16> to vector<16x8xbf16>
    %61 = vector.shape_cast %60 : vector<16x8xbf16> to vector<2x8x8xbf16>
    %62 = vector.extract_strided_slice %38 {offsets = [0, 40], sizes = [16, 8], strides = [1, 1]} : vector<16x96xbf16> to vector<16x8xbf16>
    %63 = vector.shape_cast %62 : vector<16x8xbf16> to vector<2x8x8xbf16>
    %64 = vector.extract_strided_slice %38 {offsets = [0, 72], sizes = [16, 8], strides = [1, 1]} : vector<16x96xbf16> to vector<16x8xbf16>
    %65 = vector.shape_cast %64 : vector<16x8xbf16> to vector<2x8x8xbf16>
    "tpu.trace_start"() <{level = 10 : i32, message = "bqd,bkd->bqk"}> : () -> ()
    %cst_21 = arith.constant dense<0.000000e+00> : vector<2x8x8xf32>
    %66 = tpu.matmul %61, %63, %cst_21 {dimension_numbers = #tpu.dot_dimension_numbers<[2], [2], [1], [1], [0, 0, 0, 1, 1, 1], [0], [0]>} : vector<2x8x8xbf16>, vector<2x8x8xbf16>, vector<2x8x8xf32> -> vector<2x8x8xf32>
    "tpu.trace_stop"() : () -> ()
    %cst_22 = arith.constant dense<0xFF800000> : vector<2x8xf32>
    %67 = vector.multi_reduction <maximumf>, %66, %cst_22 [2] : vector<2x8x8xf32> to vector<2x8xf32>
    %68 = vector.shape_cast %67 : vector<2x8xf32> to vector<2x8x1xf32>
    %69 = vector.broadcast %68 : vector<2x8x1xf32> to vector<2x8x8xf32>
    %70 = arith.subf %66, %69 : vector<2x8x8xf32>
    %71 = math.exp %70 : vector<2x8x8xf32>
    %cst_23 = arith.constant dense<0.000000e+00> : vector<2x8xf32>
    %72 = vector.multi_reduction <add>, %71, %cst_23 [2] : vector<2x8x8xf32> to vector<2x8xf32>
    %73 = vector.shape_cast %72 : vector<2x8xf32> to vector<2x8x1xf32>
    %74 = arith.truncf %71 : vector<2x8x8xf32> to vector<2x8x8xbf16>
    "tpu.trace_start"() <{level = 10 : i32, message = "bqk,bkd->bqd"}> : () -> ()
    %cst_24 = arith.constant dense<0.000000e+00> : vector<2x8x8xf32>
    %75 = tpu.matmul %74, %65, %cst_24 {dimension_numbers = #tpu.dot_dimension_numbers<[2], [1], [1], [2], [0, 0, 0, 1, 1, 2], [0], [0]>} : vector<2x8x8xbf16>, vector<2x8x8xbf16>, vector<2x8x8xf32> -> vector<2x8x8xf32>
    "tpu.trace_stop"() : () -> ()
    %76 = tpu.reciprocal %73 {approx = true} : vector<2x8x1xf32> -> vector<2x8x1xf32>
    %77 = vector.broadcast %76 : vector<2x8x1xf32> to vector<2x8x8xf32>
    %78 = arith.mulf %75, %77 : vector<2x8x8xf32>
    %79 = vector.shape_cast %78 : vector<2x8x8xf32> to vector<16x8xf32>
    %c0_25 = arith.constant 0 : index
    %c8 = arith.constant 8 : index
    %80 = vector.load %arg15[%c0_25, %c8] : memref<16x32xf32, #tpu.memory_space<vmem>>, vector<16x8xf32>
    tpu.vector_store %arg15[%c0_25, %c8], %79 {strides = array<i32>} : memref<16x32xf32, #tpu.memory_space<vmem>>, vector<16x8xf32>,
    %81 = vector.extract_strided_slice %38 {offsets = [0, 16], sizes = [16, 8], strides = [1, 1]} : vector<16x96xbf16> to vector<16x8xbf16>
    %82 = vector.shape_cast %81 : vector<16x8xbf16> to vector<2x8x8xbf16>
    %83 = vector.extract_strided_slice %38 {offsets = [0, 48], sizes = [16, 8], strides = [1, 1]} : vector<16x96xbf16> to vector<16x8xbf16>
    %84 = vector.shape_cast %83 : vector<16x8xbf16> to vector<2x8x8xbf16>
    %85 = vector.extract_strided_slice %38 {offsets = [0, 80], sizes = [16, 8], strides = [1, 1]} : vector<16x96xbf16> to vector<16x8xbf16>
    %86 = vector.shape_cast %85 : vector<16x8xbf16> to vector<2x8x8xbf16>
    "tpu.trace_start"() <{level = 10 : i32, message = "bqd,bkd->bqk"}> : () -> ()
    %cst_26 = arith.constant dense<0.000000e+00> : vector<2x8x8xf32>
    %87 = tpu.matmul %82, %84, %cst_26 {dimension_numbers = #tpu.dot_dimension_numbers<[2], [2], [1], [1], [0, 0, 0, 1, 1, 1], [0], [0]>} : vector<2x8x8xbf16>, vector<2x8x8xbf16>, vector<2x8x8xf32> -> vector<2x8x8xf32>
    "tpu.trace_stop"() : () -> ()
    %cst_27 = arith.constant dense<0xFF800000> : vector<2x8xf32>
    %88 = vector.multi_reduction <maximumf>, %87, %cst_27 [2] : vector<2x8x8xf32> to vector<2x8xf32>
    %89 = vector.shape_cast %88 : vector<2x8xf32> to vector<2x8x1xf32>
    %90 = vector.broadcast %89 : vector<2x8x1xf32> to vector<2x8x8xf32>
    %91 = arith.subf %87, %90 : vector<2x8x8xf32>
    %92 = math.exp %91 : vector<2x8x8xf32>
    %cst_28 = arith.constant dense<0.000000e+00> : vector<2x8xf32>
    %93 = vector.multi_reduction <add>, %92, %cst_28 [2] : vector<2x8x8xf32> to vector<2x8xf32>
    %94 = vector.shape_cast %93 : vector<2x8xf32> to vector<2x8x1xf32>
    %95 = arith.truncf %92 : vector<2x8x8xf32> to vector<2x8x8xbf16>
    "tpu.trace_start"() <{level = 10 : i32, message = "bqk,bkd->bqd"}> : () -> ()
    %cst_29 = arith.constant dense<0.000000e+00> : vector<2x8x8xf32>
    %96 = tpu.matmul %95, %86, %cst_29 {dimension_numbers = #tpu.dot_dimension_numbers<[2], [1], [1], [2], [0, 0, 0, 1, 1, 2], [0], [0]>} : vector<2x8x8xbf16>, vector<2x8x8xbf16>, vector<2x8x8xf32> -> vector<2x8x8xf32>
    "tpu.trace_stop"() : () -> ()
    %97 = tpu.reciprocal %94 {approx = true} : vector<2x8x1xf32> -> vector<2x8x1xf32>
    %98 = vector.broadcast %97 : vector<2x8x1xf32> to vector<2x8x8xf32>
    %99 = arith.mulf %96, %98 : vector<2x8x8xf32>
    %100 = vector.shape_cast %99 : vector<2x8x8xf32> to vector<16x8xf32>
    %c0_30 = arith.constant 0 : index
    %c16 = arith.constant 16 : index
    %101 = vector.load %arg15[%c0_30, %c16] : memref<16x32xf32, #tpu.memory_space<vmem>>, vector<16x8xf32>
    tpu.vector_store %arg15[%c0_30, %c16], %100 {strides = array<i32>} : memref<16x32xf32, #tpu.memory_space<vmem>>, vector<16x8xf32>,
    %102 = vector.extract_strided_slice %38 {offsets = [0, 24], sizes = [16, 8], strides = [1, 1]} : vector<16x96xbf16> to vector<16x8xbf16>
    %103 = vector.shape_cast %102 : vector<16x8xbf16> to vector<2x8x8xbf16>
    %104 = vector.extract_strided_slice %38 {offsets = [0, 56], sizes = [16, 8], strides = [1, 1]} : vector<16x96xbf16> to vector<16x8xbf16>
    %105 = vector.shape_cast %104 : vector<16x8xbf16> to vector<2x8x8xbf16>
    %106 = vector.extract_strided_slice %38 {offsets = [0, 88], sizes = [16, 8], strides = [1, 1]} : vector<16x96xbf16> to vector<16x8xbf16>
    %107 = vector.shape_cast %106 : vector<16x8xbf16> to vector<2x8x8xbf16>
    "tpu.trace_start"() <{level = 10 : i32, message = "bqd,bkd->bqk"}> : () -> ()
    %cst_31 = arith.constant dense<0.000000e+00> : vector<2x8x8xf32>
    %108 = tpu.matmul %103, %105, %cst_31 {dimension_numbers = #tpu.dot_dimension_numbers<[2], [2], [1], [1], [0, 0, 0, 1, 1, 1], [0], [0]>} : vector<2x8x8xbf16>, vector<2x8x8xbf16>, vector<2x8x8xf32> -> vector<2x8x8xf32>
    "tpu.trace_stop"() : () -> ()
    %cst_32 = arith.constant dense<0xFF800000> : vector<2x8xf32>
    %109 = vector.multi_reduction <maximumf>, %108, %cst_32 [2] : vector<2x8x8xf32> to vector<2x8xf32>
    %110 = vector.shape_cast %109 : vector<2x8xf32> to vector<2x8x1xf32>
    %111 = vector.broadcast %110 : vector<2x8x1xf32> to vector<2x8x8xf32>
    %112 = arith.subf %108, %111 : vector<2x8x8xf32>
    %113 = math.exp %112 : vector<2x8x8xf32>
    %cst_33 = arith.constant dense<0.000000e+00> : vector<2x8xf32>
    %114 = vector.multi_reduction <add>, %113, %cst_33 [2] : vector<2x8x8xf32> to vector<2x8xf32>
    %115 = vector.shape_cast %114 : vector<2x8xf32> to vector<2x8x1xf32>
    %116 = arith.truncf %113 : vector<2x8x8xf32> to vector<2x8x8xbf16>
    "tpu.trace_start"() <{level = 10 : i32, message = "bqk,bkd->bqd"}> : () -> ()
    %cst_34 = arith.constant dense<0.000000e+00> : vector<2x8x8xf32>
    %117 = tpu.matmul %116, %107, %cst_34 {dimension_numbers = #tpu.dot_dimension_numbers<[2], [1], [1], [2], [0, 0, 0, 1, 1, 2], [0], [0]>} : vector<2x8x8xbf16>, vector<2x8x8xbf16>, vector<2x8x8xf32> -> vector<2x8x8xf32>
    "tpu.trace_stop"() : () -> ()
    %118 = tpu.reciprocal %115 {approx = true} : vector<2x8x1xf32> -> vector<2x8x1xf32>
    %119 = vector.broadcast %118 : vector<2x8x1xf32> to vector<2x8x8xf32>
    %120 = arith.mulf %117, %119 : vector<2x8x8xf32>
    %121 = vector.shape_cast %120 : vector<2x8x8xf32> to vector<16x8xf32>
    %c0_35 = arith.constant 0 : index
    %c24 = arith.constant 24 : index
    %122 = vector.load %arg15[%c0_35, %c24] : memref<16x32xf32, #tpu.memory_space<vmem>>, vector<16x8xf32>
    tpu.vector_store %arg15[%c0_35, %c24], %121 {strides = array<i32>} : memref<16x32xf32, #tpu.memory_space<vmem>>, vector<16x8xf32>,
    %c0_36 = arith.constant 0 : index
    %c0_37 = arith.constant 0 : index
    %123 = vector.load %arg15[%c0_36, %c0_37] : memref<16x32xf32, #tpu.memory_space<vmem>>, vector<16x32xf32>
    %124 = arith.truncf %123 : vector<16x32xf32> to vector<16x32xbf16>
    %c0_38 = arith.constant 0 : index
    %c0_39 = arith.constant 0 : index
    %125 = vector.load %arg6[%c0_38, %c0_39] : memref<32x32xbf16, #tpu.memory_space<vmem>>, vector<32x32xbf16>
    %cst_40 = arith.constant dense<0.000000e+00> : vector<16x32xf32>
    %126 = tpu.matmul %124, %125, %cst_40 {dimension_numbers = #tpu.dot_dimension_numbers<[1], [0], [0], [1], [0, 0, 1, 1], [], []>} : vector<16x32xbf16>, vector<32x32xbf16>, vector<16x32xf32> -> vector<16x32xf32>
    %c0_41 = arith.constant 0 : index
    %c0_42 = arith.constant 0 : index
    %127 = vector.load %arg7[%c0_41, %c0_42] : memref<1x32xf32, #tpu.memory_space<vmem>>, vector<1x32xf32>
    %128 = vector.shape_cast %127 : vector<1x32xf32> to vector<32xf32>
    %129 = vector.shape_cast %128 : vector<32xf32> to vector<1x32xf32>
    %130 = vector.broadcast %129 : vector<1x32xf32> to vector<16x32xf32>
    %131 = arith.addf %126, %130 : vector<16x32xf32>
    %132 = arith.addf %1, %131 : vector<16x32xf32>
    %c0_43 = arith.constant 0 : index
    %c0_44 = arith.constant 0 : index
    %133 = vector.load %arg8[%c0_43, %c0_44] : memref<1x32xf32, #tpu.memory_space<vmem>>, vector<1x32xf32>
    %134 = vector.shape_cast %133 : vector<1x32xf32> to vector<32xf32>
    %c0_45 = arith.constant 0 : index
    %c0_46 = arith.constant 0 : index
    %135 = vector.load %arg9[%c0_45, %c0_46] : memref<1x32xf32, #tpu.memory_space<vmem>>, vector<1x32xf32>
    %136 = vector.shape_cast %135 : vector<1x32xf32> to vector<32xf32>
    %cst_47 = arith.constant dense<0.000000e+00> : vector<16xf32>
    %137 = vector.multi_reduction <add>, %132, %cst_47 [1] : vector<16x32xf32> to vector<16xf32>
    %138 = vector.shape_cast %137 : vector<16xf32> to vector<16x1xf32>
    %cst_48 = arith.constant 3.200000e+01 : f32
    %139 = vector.broadcast %cst_48 : f32 to vector<16x1xf32>
    %140 = arith.divf %138, %139 : vector<16x1xf32>
    %141 = vector.broadcast %140 : vector<16x1xf32> to vector<16x32xf32>
    %142 = arith.subf %132, %141 : vector<16x32xf32>
    %143 = arith.mulf %142, %142 : vector<16x32xf32>
    %cst_49 = arith.constant dense<0.000000e+00> : vector<16xf32>
    %144 = vector.multi_reduction <add>, %143, %cst_49 [1] : vector<16x32xf32> to vector<16xf32>
    %145 = vector.shape_cast %144 : vector<16xf32> to vector<16x1xf32>
    %cst_50 = arith.constant 3.200000e+01 : f32
    %146 = vector.broadcast %cst_50 : f32 to vector<16x1xf32>
    %147 = arith.divf %145, %146 : vector<16x1xf32>
    %148 = vector.broadcast %140 : vector<16x1xf32> to vector<16x32xf32>
    %149 = arith.subf %132, %148 : vector<16x32xf32>
    %cst_51 = arith.constant 9.99999974E-6 : f32
    %150 = vector.broadcast %cst_51 : f32 to vector<16x1xf32>
    %151 = arith.addf %147, %150 : vector<16x1xf32>
    %152 = math.rsqrt %151 : vector<16x1xf32>
    %153 = vector.broadcast %152 : vector<16x1xf32> to vector<16x32xf32>
    %154 = arith.mulf %149, %153 : vector<16x32xf32>
    %155 = vector.shape_cast %134 : vector<32xf32> to vector<1x32xf32>
    %156 = vector.broadcast %155 : vector<1x32xf32> to vector<16x32xf32>
    %157 = arith.mulf %154, %156 : vector<16x32xf32>
    %158 = vector.shape_cast %136 : vector<32xf32> to vector<1x32xf32>
    %159 = vector.broadcast %158 : vector<1x32xf32> to vector<16x32xf32>
    %160 = arith.addf %157, %159 : vector<16x32xf32>
    %161 = arith.truncf %160 : vector<16x32xf32> to vector<16x32xbf16>
    %c0_52 = arith.constant 0 : index
    %c0_53 = arith.constant 0 : index
    %162 = vector.load %arg10[%c0_52, %c0_53] : memref<32x128xbf16, #tpu.memory_space<vmem>>, vector<32x128xbf16>
    %cst_54 = arith.constant dense<0.000000e+00> : vector<16x128xf32>
    %163 = tpu.matmul %161, %162, %cst_54 {dimension_numbers = #tpu.dot_dimension_numbers<[1], [0], [0], [1], [0, 0, 1, 1], [], []>} : vector<16x32xbf16>, vector<32x128xbf16>, vector<16x128xf32> -> vector<16x128xf32>
    %c0_55 = arith.constant 0 : index
    %c0_56 = arith.constant 0 : index
    %164 = vector.load %arg11[%c0_55, %c0_56] : memref<1x128xf32, #tpu.memory_space<vmem>>, vector<1x128xf32>
    %165 = vector.shape_cast %164 : vector<1x128xf32> to vector<128xf32>
    %166 = vector.shape_cast %165 : vector<128xf32> to vector<1x128xf32>
    %167 = vector.broadcast %166 : vector<1x128xf32> to vector<16x128xf32>
    %168 = arith.addf %163, %167 : vector<16x128xf32>
    %169 = arith.truncf %168 : vector<16x128xf32> to vector<16x128xbf16>
    %cst_57 = arith.constant 1.703130e+00 : bf16
    %170 = vector.broadcast %cst_57 : bf16 to vector<16x128xbf16>
    %171 = arith.mulf %170, %169 : vector<16x128xbf16>
    %172 = arith.negf %171 : vector<16x128xbf16>
    %173 = math.exp %172 : vector<16x128xbf16>
    %cst_58 = arith.constant 1.000000e+00 : bf16
    %174 = vector.broadcast %cst_58 : bf16 to vector<16x128xbf16>
    %175 = arith.addf %174, %173 : vector<16x128xbf16>
    %176 = arith.divf %174, %175 : vector<16x128xbf16>
    %177 = arith.mulf %169, %176 : vector<16x128xbf16>
    %c0_59 = arith.constant 0 : index
    %c0_60 = arith.constant 0 : index
    %178 = vector.load %arg12[%c0_59, %c0_60] : memref<128x32xbf16, #tpu.memory_space<vmem>>, vector<128x32xbf16>
    %cst_61 = arith.constant dense<0.000000e+00> : vector<16x32xf32>
    %179 = tpu.matmul %177, %178, %cst_61 {dimension_numbers = #tpu.dot_dimension_numbers<[1], [0], [0], [1], [0, 0, 1, 1], [], []>} : vector<16x128xbf16>, vector<128x32xbf16>, vector<16x32xf32> -> vector<16x32xf32>
    %c0_62 = arith.constant 0 : index
    %c0_63 = arith.constant 0 : index
    %180 = vector.load %arg13[%c0_62, %c0_63] : memref<1x32xf32, #tpu.memory_space<vmem>>, vector<1x32xf32>
    %181 = vector.shape_cast %180 : vector<1x32xf32> to vector<32xf32>
    %182 = vector.shape_cast %181 : vector<32xf32> to vector<1x32xf32>
    %183 = vector.broadcast %182 : vector<1x32xf32> to vector<16x32xf32>
    %184 = arith.addf %179, %183 : vector<16x32xf32>
    %185 = arith.addf %132, %184 : vector<16x32xf32>
    %186 = vector.shape_cast %185 : vector<16x32xf32> to vector<2x8x32xf32>
    %c0_64 = arith.constant 0 : index
    %c0_65 = arith.constant 0 : index
    %c0_66 = arith.constant 0 : index
    %187 = vector.load %arg14[%c0_64, %c0_65, %c0_66] : memref<2x8x32xf32, #tpu.memory_space<vmem>>, vector<2x8x32xf32>
    tpu.vector_store %arg14[%c0_64, %c0_65, %c0_66], %186 {strides = array<i32>} : memref<2x8x32xf32, #tpu.memory_space<vmem>>, vector<2x8x32xf32>,
    return
  }
  func.func @transform_0(%arg0: i32) -> (i32, i32, i32) {
    %c0_i32 = arith.constant 0 : i32
    %c0_i32_0 = arith.constant 0 : i32
    %c0_i32_1 = arith.constant 0 : i32
    return %arg0, %c0_i32, %c0_i32_0 : i32, i32, i32
  }
  func.func @transform_1(%arg0: i32) -> (i32, i32) {
    %c0_i32 = arith.constant 0 : i32
    %c0_i32_0 = arith.constant 0 : i32
    %c0_i32_1 = arith.constant 0 : i32
    return %c0_i32, %c0_i32_0 : i32, i32
  }
  func.func @transform_2(%arg0: i32) -> (i32, i32) {
    %c0_i32 = arith.constant 0 : i32
    %c0_i32_0 = arith.constant 0 : i32
    %c0_i32_1 = arith.constant 0 : i32
    return %c0_i32, %c0_i32_0 : i32, i32
  }
  func.func @transform_3(%arg0: i32) -> (i32, i32) {
    %c0_i32 = arith.constant 0 : i32
    %c0_i32_0 = arith.constant 0 : i32
    %c0_i32_1 = arith.constant 0 : i32
    return %c0_i32, %c0_i32_0 : i32, i32
  }
  func.func @transform_4(%arg0: i32) -> (i32, i32) {
    %c0_i32 = arith.constant 0 : i32
    %c0_i32_0 = arith.constant 0 : i32
    %c0_i32_1 = arith.constant 0 : i32
    return %c0_i32, %c0_i32_0 : i32, i32
  }
  func.func @transform_5(%arg0: i32) -> (i32, i32) {
    %c0_i32 = arith.constant 0 : i32
    %c0_i32_0 = arith.constant 0 : i32
    %c0_i32_1 = arith.constant 0 : i32
    return %c0_i32, %c0_i32_0 : i32, i32
  }
  func.func @transform_6(%arg0: i32) -> (i32, i32) {
    %c0_i32 = arith.constant 0 : i32
    %c0_i32_0 = arith.constant 0 : i32
    %c0_i32_1 = arith.constant 0 : i32
    return %c0_i32, %c0_i32_0 : i32, i32
  }
  func.func @transform_7(%arg0: i32) -> (i32, i32) {
    %c0_i32 = arith.constant 0 : i32
    %c0_i32_0 = arith.constant 0 : i32
    %c0_i32_1 = arith.constant 0 : i32
    return %c0_i32, %c0_i32_0 : i32, i32
  }
  func.func @transform_8(%arg0: i32) -> (i32, i32) {
    %c0_i32 = arith.constant 0 : i32
    %c0_i32_0 = arith.constant 0 : i32
    %c0_i32_1 = arith.constant 0 : i32
    return %c0_i32, %c0_i32_0 : i32, i32
  }
  func.func @transform_9(%arg0: i32) -> (i32, i32) {
    %c0_i32 = arith.constant 0 : i32
    %c0_i32_0 = arith.constant 0 : i32
    %c0_i32_1 = arith.constant 0 : i32
    return %c0_i32, %c0_i32_0 : i32, i32
  }
  func.func @transform_10(%arg0: i32) -> (i32, i32) {
    %c0_i32 = arith.constant 0 : i32
    %c0_i32_0 = arith.constant 0 : i32
    %c0_i32_1 = arith.constant 0 : i32
    return %c0_i32, %c0_i32_0 : i32, i32
  }
  func.func @transform_11(%arg0: i32) -> (i32, i32) {
    %c0_i32 = arith.constant 0 : i32
    %c0_i32_0 = arith.constant 0 : i32
    %c0_i32_1 = arith.constant 0 : i32
    return %c0_i32, %c0_i32_0 : i32, i32
  }
  func.func @transform_12(%arg0: i32) -> (i32, i32) {
    %c0_i32 = arith.constant 0 : i32
    %c0_i32_0 = arith.constant 0 : i32
    %c0_i32_1 = arith.constant 0 : i32
    return %c0_i32, %c0_i32_0 : i32, i32
  }
  func.func @transform_13(%arg0: i32) -> (i32, i32, i32) {
    %c0_i32 = arith.constant 0 : i32
    %c0_i32_0 = arith.constant 0 : i32
    %c0_i32_1 = arith.constant 0 : i32
    return %arg0, %c0_i32, %c0_i32_0 : i32, i32, i32
  }
}

</mosaic_0001>

<llo_original>
// kernel: tpu_custom_call.1
$region0: #{tpu_custom_call.1}
  #allocation0 [shape = 'u32[]', space=smem, size = 0x4, offset = 0x4, fixed_abs, tag = 'smem constant byte address 0x4 - core index']
  #allocation1 [shape = 'u32[144,128]{1,0:T(1,128)}', space=vmem, size = 0x12000, scoped, tag = 'internal scratch']
  #allocation2 [shape = 'f32[16,32]{1,0:T(8,128)}', space=vmem, size = 0x2000, scoped, tag = 'scratch operand']
  %s0 = inlined_call_operand.vmem [shape: f32[4,8,32], index: 0, kind: input, shape index: {}]
  %s1 = inlined_call_operand.vmem [shape: f32[1,32], index: 1, kind: input, shape index: {}]
  %s2 = inlined_call_operand.vmem [shape: f32[1,32], index: 2, kind: input, shape index: {}]
  %s3 = inlined_call_operand.vmem [shape: bf16[32,96], index: 3, kind: input, shape index: {}]
  %s4 = inlined_call_operand.vmem [shape: f32[1,96], index: 4, kind: input, shape index: {}]
  %s5 = inlined_call_operand.vmem [shape: bf16[32,32], index: 5, kind: input, shape index: {}]
  %s6 = inlined_call_operand.vmem [shape: f32[1,32], index: 6, kind: input, shape index: {}]
  %s7 = inlined_call_operand.vmem [shape: f32[1,32], index: 7, kind: input, shape index: {}]
  %s8 = inlined_call_operand.vmem [shape: f32[1,32], index: 8, kind: input, shape index: {}]
  %s9 = inlined_call_operand.vmem [shape: bf16[32,128], index: 9, kind: input, shape index: {}]
  %s10 = inlined_call_operand.vmem [shape: f32[1,128], index: 10, kind: input, shape index: {}]
  %s11 = inlined_call_operand.vmem [shape: bf16[128,32], index: 11, kind: input, shape index: {}]
  %s12 = inlined_call_operand.vmem [shape: f32[1,32], index: 12, kind: input, shape index: {}]
  %s13 = inlined_call_operand.hbm [shape: f32[4,8,32], index: 13, kind: output, shape index: {}]
  %s14 = sld [smem:[#allocation0]]
  $region85: #{tpu_custom_call.1} parent=0
    _
  %s16 = ssub.s32 1, %s14
  %s17 = scalar_select 0, %s16, %s14
  $region1: #{tpu_custom_call.1} parent=0
    #allocation3 [shape = 'u8[16384]{0}', space=vmem, size = 0x4000, scoped, tag = 'output window, operand 0']
    #allocation4 [shape = 's32[2]{0}', space=sflag, size = 0x8, scoped, tag = 'scoped memory for tpu_custom_call.1']
    %18 = vsyncpa [#allocation4], 0
    %s19 = scalar_lea.sflag [#allocation4], 1
    %20 = vsyncpa %s19, 0
    loop: start=0, step=1, limit=4
    $region2: #{tpu_custom_call.1} parent=1 // loop_pre_header
      _
    $region3: #{tpu_custom_call.1} parent=1 // loop_header
      %s22 = sphi 0, %s26
      %p23 = scmp.ge.s32.totalorder %s22, 4
      %s32 = sphi 0, %s34
      %s35 = sphi 0, %s32
      %s36 = sphi 0, %s35
      %s52 = sphi 0, %s36
      %s56 = sphi 0, %s56
      %s58 = sphi 0, %s56
      %s59 = sphi 0, %s58
      %s73 = sphi 0, %s59
      %s77 = sphi 0, %s77
      %s79 = sphi 0, %s77
      %s80 = sphi 0, %s79
      %s94 = sphi 0, %s80
      %s98 = sphi 0, %s98
      %s100 = sphi 0, %s98
      %s101 = sphi 0, %s100
      %s115 = sphi 0, %s101
      %s119 = sphi 0, %s119
      %s121 = sphi 0, %s119
      %s122 = sphi 0, %s121
      %s136 = sphi 0, %s122
      %s140 = sphi 0, %s140
      %s142 = sphi 0, %s140
      %s143 = sphi 0, %s142
      %s157 = sphi 0, %s143
      %s161 = sphi 0, %s161
      %s163 = sphi 0, %s161
      %s164 = sphi 0, %s163
      %s178 = sphi 0, %s164
      %s182 = sphi 0, %s182
      %s184 = sphi 0, %s182
      %s185 = sphi 0, %s184
      %s199 = sphi 0, %s185
      %s203 = sphi 0, %s203
      %s205 = sphi 0, %s203
      %s206 = sphi 0, %s205
      %s220 = sphi 0, %s206
      %s224 = sphi 0, %s224
      %s226 = sphi 0, %s224
      %s227 = sphi 0, %s226
      %s241 = sphi 0, %s227
      %s245 = sphi 0, %s245
      %s247 = sphi 0, %s245
      %s248 = sphi 0, %s247
      %s262 = sphi 0, %s248
      %s266 = sphi 0, %s266
      %s268 = sphi 0, %s266
      %s269 = sphi 0, %s268
      %s283 = sphi 0, %s269
      %s287 = sphi 0, %s287
      %s289 = sphi 0, %s287
      %s290 = sphi 0, %s289
      %s304 = sphi 0, %s290
      %s310 = sphi 0, %s312
      %s313 = sphi 0, %s310
      %s314 = sphi 0, %s313
      %s330 = sphi 0, %s314
    $region4: #{tpu_custom_call.1} parent=1 // loop_header_branch
      %25 = sbr.rel (%p23) target = $region8
    $region5: #{tpu_custom_call.1} parent=1 // loop_body
      %s27 = ssub.s32 %s22, 1
      %s28 = ssub.s32 %s22, 2
      %s29 = sadd.s32 %s22, 1
      %s30 = ssub.s32 %s22, %s29
      %p31 = scmp.eq.s32.totalorder %s30, 0
      %s33 = sadd.s32 %s32, 1
      %s34 = scalar_select %p31, %s32, %s33
      %p37 = pneg %p31
      %p38 = scmp.eq.s32.totalorder %s22, 1
      %p39 = por %p37, %p38
      %p40 = scmp.ne.s32.totalorder %s32, %s35
      %p41 = scmp.eq.s32.totalorder %s22, 0
      %p42 = por %p40, %p41
      %p43 = scmp.ne.s32.totalorder %s32, %s35
      %p44 = scmp.eq.s32.totalorder %s27, 1
      %p45 = por %p43, %p44
      %p46 = scmp.ne.s32.totalorder %s35, %s36
      %p47 = scmp.eq.s32.totalorder %s27, 0
      %p48 = por %p46, %p47
      %p49 = scmp.ne.s32.totalorder %s35, %s36
      %p50 = scmp.eq.s32.totalorder %s28, 1
      %p51 = por %p49, %p50
      %p53 = scmp.ne.s32.totalorder %s36, %s52
      %p54 = scmp.eq.s32.totalorder %s28, 0
      %p55 = por %p53, %p54
      %s57 = sadd.s32 %s56, 1
      %p60 = scmp.eq.s32.totalorder %s22, 1
      %p61 = scmp.ne.s32.totalorder %s56, %s58
      %p62 = scmp.eq.s32.totalorder %s22, 0
      %p63 = por %p61, %p62
      %p64 = scmp.ne.s32.totalorder %s56, %s58
      %p65 = scmp.eq.s32.totalorder %s27, 1
      %p66 = por %p64, %p65
      %p67 = scmp.ne.s32.totalorder %s58, %s59
      %p68 = scmp.eq.s32.totalorder %s27, 0
      %p69 = por %p67, %p68
      %p70 = scmp.ne.s32.totalorder %s58, %s59
      %p71 = scmp.eq.s32.totalorder %s28, 1
      %p72 = por %p70, %p71
      %p74 = scmp.ne.s32.totalorder %s59, %s73
      %p75 = scmp.eq.s32.totalorder %s28, 0
      %p76 = por %p74, %p75
      %s78 = sadd.s32 %s77, 1
      %p81 = scmp.eq.s32.totalorder %s22, 1
      %p82 = scmp.ne.s32.totalorder %s77, %s79
      %p83 = scmp.eq.s32.totalorder %s22, 0
      %p84 = por %p82, %p83
      %p85 = scmp.ne.s32.totalorder %s77, %s79
      %p86 = scmp.eq.s32.totalorder %s27, 1
      %p87 = por %p85, %p86
      %p88 = scmp.ne.s32.totalorder %s79, %s80
      %p89 = scmp.eq.s32.totalorder %s27, 0
      %p90 = por %p88, %p89
      %p91 = scmp.ne.s32.totalorder %s79, %s80
      %p92 = scmp.eq.s32.totalorder %s28, 1
      %p93 = por %p91, %p92
      %p95 = scmp.ne.s32.totalorder %s80, %s94
      %p96 = scmp.eq.s32.totalorder %s28, 0
      %p97 = por %p95, %p96
      %s99 = sadd.s32 %s98, 1
      %p102 = scmp.eq.s32.totalorder %s22, 1
      %p103 = scmp.ne.s32.totalorder %s98, %s100
      %p104 = scmp.eq.s32.totalorder %s22, 0
      %p105 = por %p103, %p104
      %p106 = scmp.ne.s32.totalorder %s98, %s100
      %p107 = scmp.eq.s32.totalorder %s27, 1
      %p108 = por %p106, %p107
      %p109 = scmp.ne.s32.totalorder %s100, %s101
      %p110 = scmp.eq.s32.totalorder %s27, 0
      %p111 = por %p109, %p110
      %p112 = scmp.ne.s32.totalorder %s100, %s101
      %p113 = scmp.eq.s32.totalorder %s28, 1
      %p114 = por %p112, %p113
      %p116 = scmp.ne.s32.totalorder %s101, %s115
      %p117 = scmp.eq.s32.totalorder %s28, 0
      %p118 = por %p116, %p117
      %s120 = sadd.s32 %s119, 1
      %p123 = scmp.eq.s32.totalorder %s22, 1
      %p124 = scmp.ne.s32.totalorder %s119, %s121
      %p125 = scmp.eq.s32.totalorder %s22, 0
      %p126 = por %p124, %p125
      %p127 = scmp.ne.s32.totalorder %s119, %s121
      %p128 = scmp.eq.s32.totalorder %s27, 1
      %p129 = por %p127, %p128
      %p130 = scmp.ne.s32.totalorder %s121, %s122
      %p131 = scmp.eq.s32.totalorder %s27, 0
      %p132 = por %p130, %p131
      %p133 = scmp.ne.s32.totalorder %s121, %s122
      %p134 = scmp.eq.s32.totalorder %s28, 1
      %p135 = por %p133, %p134
      %p137 = scmp.ne.s32.totalorder %s122, %s136
      %p138 = scmp.eq.s32.totalorder %s28, 0
      %p139 = por %p137, %p138
      %s141 = sadd.s32 %s140, 1
      %p144 = scmp.eq.s32.totalorder %s22, 1
      %p145 = scmp.ne.s32.totalorder %s140, %s142
      %p146 = scmp.eq.s32.totalorder %s22, 0
      %p147 = por %p145, %p146
      %p148 = scmp.ne.s32.totalorder %s140, %s142
      %p149 = scmp.eq.s32.totalorder %s27, 1
      %p150 = por %p148, %p149
      %p151 = scmp.ne.s32.totalorder %s142, %s143
      %p152 = scmp.eq.s32.totalorder %s27, 0
      %p153 = por %p151, %p152
      %p154 = scmp.ne.s32.totalorder %s142, %s143
      %p155 = scmp.eq.s32.totalorder %s28, 1
      %p156 = por %p154, %p155
      %p158 = scmp.ne.s32.totalorder %s143, %s157
      %p159 = scmp.eq.s32.totalorder %s28, 0
      %p160 = por %p158, %p159
      %s162 = sadd.s32 %s161, 1
      %p165 = scmp.eq.s32.totalorder %s22, 1
      %p166 = scmp.ne.s32.totalorder %s161, %s163
      %p167 = scmp.eq.s32.totalorder %s22, 0
      %p168 = por %p166, %p167
      %p169 = scmp.ne.s32.totalorder %s161, %s163
      %p170 = scmp.eq.s32.totalorder %s27, 1
      %p171 = por %p169, %p170
      %p172 = scmp.ne.s32.totalorder %s163, %s164
      %p173 = scmp.eq.s32.totalorder %s27, 0
      %p174 = por %p172, %p173
      %p175 = scmp.ne.s32.totalorder %s163, %s164
      %p176 = scmp.eq.s32.totalorder %s28, 1
      %p177 = por %p175, %p176
      %p179 = scmp.ne.s32.totalorder %s164, %s178
      %p180 = scmp.eq.s32.totalorder %s28, 0
      %p181 = por %p179, %p180
      %s183 = sadd.s32 %s182, 1
      %p186 = scmp.eq.s32.totalorder %s22, 1
      %p187 = scmp.ne.s32.totalorder %s182, %s184
      %p188 = scmp.eq.s32.totalorder %s22, 0
      %p189 = por %p187, %p188
      %p190 = scmp.ne.s32.totalorder %s182, %s184
      %p191 = scmp.eq.s32.totalorder %s27, 1
      %p192 = por %p190, %p191
      %p193 = scmp.ne.s32.totalorder %s184, %s185
      %p194 = scmp.eq.s32.totalorder %s27, 0
      %p195 = por %p193, %p194
      %p196 = scmp.ne.s32.totalorder %s184, %s185
      %p197 = scmp.eq.s32.totalorder %s28, 1
      %p198 = por %p196, %p197
      %p200 = scmp.ne.s32.totalorder %s185, %s199
      %p201 = scmp.eq.s32.totalorder %s28, 0
      %p202 = por %p200, %p201
      %s204 = sadd.s32 %s203, 1
      %p207 = scmp.eq.s32.totalorder %s22, 1
      %p208 = scmp.ne.s32.totalorder %s203, %s205
      %p209 = scmp.eq.s32.totalorder %s22, 0
      %p210 = por %p208, %p209
      %p211 = scmp.ne.s32.totalorder %s203, %s205
      %p212 = scmp.eq.s32.totalorder %s27, 1
      %p213 = por %p211, %p212
      %p214 = scmp.ne.s32.totalorder %s205, %s206
      %p215 = scmp.eq.s32.totalorder %s27, 0
      %p216 = por %p214, %p215
      %p217 = scmp.ne.s32.totalorder %s205, %s206
      %p218 = scmp.eq.s32.totalorder %s28, 1
      %p219 = por %p217, %p218
      %p221 = scmp.ne.s32.totalorder %s206, %s220
      %p222 = scmp.eq.s32.totalorder %s28, 0
      %p223 = por %p221, %p222
      %s225 = sadd.s32 %s224, 1
      %p228 = scmp.eq.s32.totalorder %s22, 1
      %p229 = scmp.ne.s32.totalorder %s224, %s226
      %p230 = scmp.eq.s32.totalorder %s22, 0
      %p231 = por %p229, %p230
      %p232 = scmp.ne.s32.totalorder %s224, %s226
      %p233 = scmp.eq.s32.totalorder %s27, 1
      %p234 = por %p232, %p233
      %p235 = scmp.ne.s32.totalorder %s226, %s227
      %p236 = scmp.eq.s32.totalorder %s27, 0
      %p237 = por %p235, %p236
      %p238 = scmp.ne.s32.totalorder %s226, %s227
      %p239 = scmp.eq.s32.totalorder %s28, 1
      %p240 = por %p238, %p239
      %p242 = scmp.ne.s32.totalorder %s227, %s241
      %p243 = scmp.eq.s32.totalorder %s28, 0
      %p244 = por %p242, %p243
      %s246 = sadd.s32 %s245, 1
      %p249 = scmp.eq.s32.totalorder %s22, 1
      %p250 = scmp.ne.s32.totalorder %s245, %s247
      %p251 = scmp.eq.s32.totalorder %s22, 0
      %p252 = por %p250, %p251
      %p253 = scmp.ne.s32.totalorder %s245, %s247
      %p254 = scmp.eq.s32.totalorder %s27, 1
      %p255 = por %p253, %p254
      %p256 = scmp.ne.s32.totalorder %s247, %s248
      %p257 = scmp.eq.s32.totalorder %s27, 0
      %p258 = por %p256, %p257
      %p259 = scmp.ne.s32.totalorder %s247, %s248
      %p260 = scmp.eq.s32.totalorder %s28, 1
      %p261 = por %p259, %p260
      %p263 = scmp.ne.s32.totalorder %s248, %s262
      %p264 = scmp.eq.s32.totalorder %s28, 0
      %p265 = por %p263, %p264
      %s267 = sadd.s32 %s266, 1
      %p270 = scmp.eq.s32.totalorder %s22, 1
      %p271 = scmp.ne.s32.totalorder %s266, %s268
      %p272 = scmp.eq.s32.totalorder %s22, 0
      %p273 = por %p271, %p272
      %p274 = scmp.ne.s32.totalorder %s266, %s268
      %p275 = scmp.eq.s32.totalorder %s27, 1
      %p276 = por %p274, %p275
      %p277 = scmp.ne.s32.totalorder %s268, %s269
      %p278 = scmp.eq.s32.totalorder %s27, 0
      %p279 = por %p277, %p278
      %p280 = scmp.ne.s32.totalorder %s268, %s269
      %p281 = scmp.eq.s32.totalorder %s28, 1
      %p282 = por %p280, %p281
      %p284 = scmp.ne.s32.totalorder %s269, %s283
      %p285 = scmp.eq.s32.totalorder %s28, 0
      %p286 = por %p284, %p285
      %s288 = sadd.s32 %s287, 1
      %p291 = scmp.eq.s32.totalorder %s22, 1
      %p292 = scmp.ne.s32.totalorder %s287, %s289
      %p293 = scmp.eq.s32.totalorder %s22, 0
      %p294 = por %p292, %p293
      %p295 = scmp.ne.s32.totalorder %s287, %s289
      %p296 = scmp.eq.s32.totalorder %s27, 1
      %p297 = por %p295, %p296
      %p298 = scmp.ne.s32.totalorder %s289, %s290
      %p299 = scmp.eq.s32.totalorder %s27, 0
      %p300 = por %p298, %p299
      %p301 = scmp.ne.s32.totalorder %s289, %s290
      %p302 = scmp.eq.s32.totalorder %s28, 1
      %p303 = por %p301, %p302
      %p305 = scmp.ne.s32.totalorder %s290, %s304
      %p306 = scmp.eq.s32.totalorder %s28, 0
      %p307 = por %p305, %p306
      %s308 = ssub.s32 %s22, %s29
      %p309 = scmp.eq.s32.totalorder %s308, 0
      %s311 = sadd.s32 %s310, 1
      %s312 = scalar_select %p309, %s310, %s311
      %p315 = pneg %p309
      %p316 = scmp.eq.s32.totalorder %s22, 1
      %p317 = por %p315, %p316
      %p318 = scmp.ne.s32.totalorder %s310, %s313
      %p319 = scmp.eq.s32.totalorder %s22, 0
      %p320 = por %p318, %p319
      %p321 = scmp.ne.s32.totalorder %s310, %s313
      %p322 = scmp.eq.s32.totalorder %s27, 1
      %p323 = por %p321, %p322
      %p324 = scmp.ne.s32.totalorder %s313, %s314
      %p325 = scmp.eq.s32.totalorder %s27, 0
      %p326 = por %p324, %p325
      %p327 = scmp.ne.s32.totalorder %s313, %s314
      %p328 = scmp.eq.s32.totalorder %s28, 1
      %p329 = por %p327, %p328
      %p331 = scmp.ne.s32.totalorder %s314, %s330
      %p332 = scmp.eq.s32.totalorder %s28, 0
      %p333 = por %p331, %p332
      %p334 = scmp.le.s32.totalorder 1, %s22
      %p335 = scmp.lt.s32.totalorder %s22, 3
      %p336 = pnand %p334, %p335
      %p337 = pneg %p336
      // Predicated region
      $region9: #{tpu_custom_call.1} parent=5 // pred_check
        _
      $region10: #{tpu_custom_call.1} parent=5 // pred_check_branch
        %339 = sbr.rel (%p336) target = $region12
      $region11: #{tpu_custom_call.1} parent=5 // pred_region
        %s340 = ssub.s32 %s22, 1
        // Predicated region
        $region13: #{tpu_custom_call.1} parent=11 // pred_check
          %p341 = pneg %p69
        $region14: #{tpu_custom_call.1} parent=11 // pred_check_branch
          %343 = sbr.rel (%p341) target = $region16
        $region15: #{tpu_custom_call.1} parent=11 // pred_region
          _
        $region16: #{tpu_custom_call.1} parent=11 // pred_fallthru
          _
        // Predicated region
        $region17: #{tpu_custom_call.1} parent=11 // pred_check
          %p344 = pneg %p90
        $region18: #{tpu_custom_call.1} parent=11 // pred_check_branch
          %346 = sbr.rel (%p344) target = $region20
        $region19: #{tpu_custom_call.1} parent=11 // pred_region
          _
        $region20: #{tpu_custom_call.1} parent=11 // pred_fallthru
          _
        // Predicated region
        $region21: #{tpu_custom_call.1} parent=11 // pred_check
          %p347 = pneg %p111
        $region22: #{tpu_custom_call.1} parent=11 // pred_check_branch
          %349 = sbr.rel (%p347) target = $region24
        $region23: #{tpu_custom_call.1} parent=11 // pred_region
          _
        $region24: #{tpu_custom_call.1} parent=11 // pred_fallthru
          _
        // Predicated region
        $region25: #{tpu_custom_call.1} parent=11 // pred_check
          %p350 = pneg %p132
        $region26: #{tpu_custom_call.1} parent=11 // pred_check_branch
          %352 = sbr.rel (%p350) target = $region28
        $region27: #{tpu_custom_call.1} parent=11 // pred_region
          _
        $region28: #{tpu_custom_call.1} parent=11 // pred_fallthru
          _
        // Predicated region
        $region29: #{tpu_custom_call.1} parent=11 // pred_check
          %p353 = pneg %p153
        $region30: #{tpu_custom_call.1} parent=11 // pred_check_branch
          %355 = sbr.rel (%p353) target = $region32
        $region31: #{tpu_custom_call.1} parent=11 // pred_region
          _
        $region32: #{tpu_custom_call.1} parent=11 // pred_fallthru
          _
        // Predicated region
        $region33: #{tpu_custom_call.1} parent=11 // pred_check
          %p356 = pneg %p174
        $region34: #{tpu_custom_call.1} parent=11 // pred_check_branch
          %358 = sbr.rel (%p356) target = $region36
        $region35: #{tpu_custom_call.1} parent=11 // pred_region
          _
        $region36: #{tpu_custom_call.1} parent=11 // pred_fallthru
          _
        // Predicated region
        $region37: #{tpu_custom_call.1} parent=11 // pred_check
          %p359 = pneg %p195
        $region38: #{tpu_custom_call.1} parent=11 // pred_check_branch
          %361 = sbr.rel (%p359) target = $region40
        $region39: #{tpu_custom_call.1} parent=11 // pred_region
          _
        $region40: #{tpu_custom_call.1} parent=11 // pred_fallthru
          _
        // Predicated region
        $region41: #{tpu_custom_call.1} parent=11 // pred_check
          %p362 = pneg %p216
        $region42: #{tpu_custom_call.1} parent=11 // pred_check_branch
          %364 = sbr.rel (%p362) target = $region44
        $region43: #{tpu_custom_call.1} parent=11 // pred_region
          _
        $region44: #{tpu_custom_call.1} parent=11 // pred_fallthru
          _
        // Predicated region
        $region45: #{tpu_custom_call.1} parent=11 // pred_check
          %p365 = pneg %p237
        $region46: #{tpu_custom_call.1} parent=11 // pred_check_branch
          %367 = sbr.rel (%p365) target = $region48
        $region47: #{tpu_custom_call.1} parent=11 // pred_region
          _
        $region48: #{tpu_custom_call.1} parent=11 // pred_fallthru
          _
        // Predicated region
        $region49: #{tpu_custom_call.1} parent=11 // pred_check
          %p368 = pneg %p258
        $region50: #{tpu_custom_call.1} parent=11 // pred_check_branch
          %370 = sbr.rel (%p368) target = $region52
        $region51: #{tpu_custom_call.1} parent=11 // pred_region
          _
        $region52: #{tpu_custom_call.1} parent=11 // pred_fallthru
          _
        // Predicated region
        $region53: #{tpu_custom_call.1} parent=11 // pred_check
          %p371 = pneg %p279
        $region54: #{tpu_custom_call.1} parent=11 // pred_check_branch
          %373 = sbr.rel (%p371) target = $region56
        $region55: #{tpu_custom_call.1} parent=11 // pred_region
          _
        $region56: #{tpu_custom_call.1} parent=11 // pred_fallthru
          _
        // Predicated region
        $region57: #{tpu_custom_call.1} parent=11 // pred_check
          %p374 = pneg %p300
        $region58: #{tpu_custom_call.1} parent=11 // pred_check_branch
          %376 = sbr.rel (%p374) target = $region60
        $region59: #{tpu_custom_call.1} parent=11 // pred_region
          _
        $region60: #{tpu_custom_call.1} parent=11 // pred_fallthru
          _
      $region12: #{tpu_custom_call.1} parent=5 // pred_fallthru
        _
      %p377 = scmp.lt.s32.totalorder %s22, 2
      // Predicated region
      $region61: #{tpu_custom_call.1} parent=5 // pred_check
        %p378 = pneg %p377
      $region62: #{tpu_custom_call.1} parent=5 // pred_check_branch
        %380 = sbr.rel (%p378) target = $region64
      $region63: #{tpu_custom_call.1} parent=5 // pred_region
        // Predicated region
        $region65: #{tpu_custom_call.1} parent=63 // pred_check
          %p381 = pneg %p42
        $region66: #{tpu_custom_call.1} parent=63 // pred_check_branch
          %383 = sbr.rel (%p381) target = $region68
        $region67: #{tpu_custom_call.1} parent=63 // pred_region
          %s384 = smul.u32 2, %s22
          %p385 = scmp.lt.s32.totalorder %s384, 3
          %s386 = scalar_select %p385, %s384, 3
          %s387 = smul.addr %s386, 8
          %s388 = scalar_lea.vmem %s0, %s387
          %s389 = smul.u32 2, %s22
        $region68: #{tpu_custom_call.1} parent=63 // pred_fallthru
          _
      $region64: #{tpu_custom_call.1} parent=5 // pred_fallthru
        _
      %p390 = scmp.le.s32.totalorder 1, %s22
      %p391 = scmp.lt.s32.totalorder %s22, 3
      %p392 = pnand %p390, %p391
      %p393 = pneg %p392
      // Predicated region
      $region69: #{tpu_custom_call.1} parent=5 // pred_check
        _
      $region70: #{tpu_custom_call.1} parent=5 // pred_check_branch
        %395 = sbr.rel (%p392) target = $region72
      $region71: #{tpu_custom_call.1} parent=5 // pred_region
        %s396 = ssub.s32 %s22, 1
        %s397 = smul.u32 2, %s27
        %p398 = scmp.lt.s32.totalorder %s397, 3
        %s399 = scalar_select %p398, %s397, 3
        %s400 = smul.addr %s399, 8
        %s401 = scalar_lea.vmem %s0, %s400
        %p402 = pneg %p48
        %p403 = pneg %p45
        %p404 = pneg %p69
        %p405 = pneg %p66
        %p406 = pneg %p90
        %p407 = pneg %p87
        %p408 = pneg %p111
        %p409 = pneg %p108
        %p410 = pneg %p132
        %p411 = pneg %p129
        %p412 = pneg %p153
        %p413 = pneg %p150
        %p414 = pneg %p174
        %p415 = pneg %p171
        %p416 = pneg %p195
        %p417 = pneg %p192
        %p418 = pneg %p216
        %p419 = pneg %p213
        %p420 = pneg %p237
        %p421 = pneg %p234
        %p422 = pneg %p258
        %p423 = pneg %p255
        %p424 = pneg %p279
        %p425 = pneg %p276
        %p426 = pneg %p300
        %p427 = pneg %p297
        %p428 = pneg %p326
        %p429 = pneg %p323
        %s430 = sand.u32 %s313, 1
        %s431 = scalar_lea.sflag [#allocation4], %s430
        %s432 = sand.u32 %s313, 1
        %s433 = smul.addr %s432, 16
        %s434 = scalar_lea.vmem [#allocation3], %s433
        %s435 = smul.u32 2, %s27
        %p436 = scmp.lt.s32.totalorder %s435, 3
        %s437 = scalar_select %p436, %s435, 3
        %s438 = smul.addr %s437, 8
        %s439 = scalar_lea.vmem %s0, %s438
        %s440 = smul.u32 2, %s27
        %s441 = smul.u32 2, %s27
        %v445 = vld [vmem:[%s439] sm:$0xff]
        %v446 = vld [vmem:[%s439 + $0x8] sm:$0xff]
        %v447 = vld [vmem:[%s1] sm:$0x1]
        %v448 = vld [vmem:[%s2] sm:$0x1]
        %vm449 = vcmask 261120
        %v450 = vsel %vm449, %v445, 0.0
        %451 = vadd.xlane.f32.xlu0 %v450
        %v452 = vpop.xlane.xlu0 %451
        %v453 = vsel %vm449, %v446, 0.0
        %454 = vadd.xlane.f32.xlu0 %v453
        %v455 = vpop.xlane.xlu0 %454
        %v456 = vrcp.pop 32.0
        %v457 = vmul.f32 %v452, %v456
        %v458 = vmul.f32 %v455, %v456
        %v459 = vsub.f32 %v445, %v457
        %v460 = vsub.f32 %v446, %v458
        %v461 = vmul.f32 %v459, %v459
        %v462 = vmul.f32 %v460, %v460
        %v463 = vsel %vm449, %v461, 0.0
        %464 = vadd.xlane.f32.xlu0 %v463
        %v465 = vpop.xlane.xlu0 %464
        %v466 = vsel %vm449, %v462, 0.0
        %467 = vadd.xlane.f32.xlu0 %v466
        %v468 = vpop.xlane.xlu0 %467
        %v469 = vmul.f32 %v465, %v456
        %v470 = vmul.f32 %v468, %v456
        %v471 = vadd.f32 %v469, 1e-05
        %v472 = vadd.f32 %v470, 1e-05
        %v473 = vrsqrt.pop %v471
        %v474 = vrsqrt.pop %v472
        %v475 = vmul.f32 %v459, %v473
        %v476 = vmul.f32 %v460, %v474
        %v478 = vlaneseq
        %v479 = vshrl.u32 %v478, 7
        %v480 = vsub.s32 0, %v479
        %v481 = vrot.slane %v447, %v480
        %v483 = vmul.f32 %v475, %v481
        %v484 = vmul.f32 %v476, %v481
        %v486 = vlaneseq
        %v487 = vshrl.u32 %v486, 7
        %v488 = vsub.s32 0, %v487
        %v489 = vrot.slane %v448, %v488
        %v491 = vadd.f32 %v483, %v489
        %v492 = vadd.f32 %v484, %v489
        %v493 = vpack.c.bf16 %v492, %v491
        %v494 = vld [vmem:[%s3] sm:$0xf]
        %v495 = vld [vmem:[%s3 + $0x4] sm:$0xf]
        %v496 = vld [vmem:[%s3 + $0x8] sm:$0xf]
        %v497 = vld [vmem:[%s3 + $0xc] sm:$0xf]
        %v498 = vld [vmem:[%s4] sm:$0x1]
        %v500 = vlaneseq
        %v501 = vshrl.u32 %v500, 7
        %v502 = vsub.s32 0, %v501
        %v503 = vrot.slane %v498, %v502
        %v509 = vunpack.c.l.b16 %v494
        %v510 = vunpack.c.l.b16 %v495
        %v511 = vunpack.c.l.b16 %v496
        %v512 = vunpack.c.l.b16 %v497
        %v513 = vpack.c.b16 %v510, %v509
        %v514 = vpack.c.b16 %v512, %v511
        %v518 = vsel %vm449, %v493, 0
        %520 = vmatprep.subr.bf16.mxu0 0
        %521 = vmatpush1.bf16.msra.mxu0 %v513
        %522 = vmatprep.subr.bf16.mxu0 0
        %523 = vmatpush1.bf16.msra.mxu0 %v514
        %524 = vmatprep.subr.bf16.mxu0 0
        %525 = vmatpush1.bf16.msra.mxu0 0
        %526 = vmatprep.subr.bf16.mxu0 0
        %527 = vmatpush1.bf16.msra.mxu0 0
        %528 = vmatprep.subr.bf16.mxu0 0
        %529 = vmatpush1.bf16.msra.mxu0 0
        %530 = vmatprep.subr.bf16.mxu0 0
        %531 = vmatpush1.bf16.msra.mxu0 0
        %532 = vmatprep.subr.bf16.mxu0 0
        %533 = vmatpush1.bf16.msra.mxu0 0
        %534 = vmatprep.subr.bf16.mxu0 0
        %535 = vmatpush1.bf16.msra.mxu0 0
        %536 = vmatprep.subr.bf16.mxu0 0
        %537 = vmatpush1.bf16.msra.mxu0 0
        %538 = vmatprep.subr.bf16.mxu0 0
        %539 = vmatpush1.bf16.msra.mxu0 0
        %540 = vmatprep.subr.bf16.mxu0 0
        %541 = vmatpush1.bf16.msra.mxu0 0
        %542 = vmatprep.subr.bf16.mxu0 0
        %543 = vmatpush1.bf16.msra.mxu0 0
        %544 = vmatprep.subr.bf16.mxu0 0
        %545 = vmatpush1.bf16.msra.mxu0 0
        %546 = vmatprep.subr.bf16.mxu0 0
        %547 = vmatpush1.bf16.msra.mxu0 0
        %548 = vmatprep.subr.bf16.mxu0 0
        %549 = vmatpush1.bf16.msra.mxu0 0
        %550 = vmatprep.subr.bf16.mxu0 0
        %551 = vmatpush1.bf16.msra.mxu0 0
        %552 = vmatprep.mubr.bf16.mxu0 0
        %553 = vmatmul.mubr.bf16.gmra.mrb[0].mxu0 %v518
        %v554 = vpop.f32.mrb[0].mxu0
        %v555 = vadd.f32 %v503, %v554
        %v556 = vpop.f32.mrb[0].mxu0
        %v557 = vpop.f32.mrb[0].mxu0
        %v558 = vadd.f32 %v503, %v557
        %v559 = vpop.f32.mrb[0].mxu0
        %560 = vdwg.mxu0
        %v561 = vpack.c.bf16 %v558, %v555
        %v563 = vunpack.c.l.b16 %v561
        %v564 = vunpack.c.h.b16 %v561
        %v565 = vpack.c.b16 %v563, %v563
        %v566 = vpack.c.b16 %v564, %v564
        %567 = vrot.lane.b32.xlu0 %v565, 96
        %v568 = vpop.permute.xlu0 %567
        %vm569 = vcmask 64512
        %v571 = vsel %vm569, %v565, 0
        %v574 = vsel %vm569, %v568, 0
        %576 = vmatprep.subr.bf16.mxu0 0
        %577 = vmatpush1.bf16.xpose.msra.mxu0 %v574
        %578 = vmatprep.subr.bf16.mxu0 0
        %579 = vmatpush1.bf16.xpose.msra.mxu0 0
        %580 = vmatprep.subr.bf16.mxu0 0
        %581 = vmatpush1.bf16.xpose.msra.mxu0 0
        %582 = vmatprep.subr.bf16.mxu0 0
        %583 = vmatpush1.bf16.xpose.msra.mxu0 0
        %584 = vmatprep.subr.bf16.mxu0 0
        %585 = vmatpush1.bf16.xpose.msra.mxu0 0
        %586 = vmatprep.subr.bf16.mxu0 0
        %587 = vmatpush1.bf16.xpose.msra.mxu0 0
        %588 = vmatprep.subr.bf16.mxu0 0
        %589 = vmatpush1.bf16.xpose.msra.mxu0 0
        %590 = vmatprep.subr.bf16.mxu0 0
        %591 = vmatpush1.bf16.xpose.msra.mxu0 0
        %592 = vmatprep.subr.bf16.mxu0 0
        %593 = vmatpush1.bf16.xpose.msra.mxu0 0
        %594 = vmatprep.subr.bf16.mxu0 0
        %595 = vmatpush1.bf16.xpose.msra.mxu0 0
        %596 = vmatprep.subr.bf16.mxu0 0
        %597 = vmatpush1.bf16.xpose.msra.mxu0 0
        %598 = vmatprep.subr.bf16.mxu0 0
        %599 = vmatpush1.bf16.xpose.msra.mxu0 0
        %600 = vmatprep.subr.bf16.mxu0 0
        %601 = vmatpush1.bf16.xpose.msra.mxu0 0
        %602 = vmatprep.subr.bf16.mxu0 0
        %603 = vmatpush1.bf16.xpose.msra.mxu0 0
        %604 = vmatprep.subr.bf16.mxu0 0
        %605 = vmatpush1.bf16.xpose.msra.mxu0 0
        %606 = vmatprep.subr.bf16.mxu0 0
        %607 = vmatpush1.bf16.xpose.msra.mxu0 0
        %608 = vmatprep.mubr.bf16.mxu0 0
        %609 = vmatmul.mubr.bf16.gmra.mrb[0].mxu0 %v571
        %v610 = vpop.f32.mrb[0].mxu0
        %v611 = vadd.f32 0.0, %v610
        %v612 = vpop.f32.mrb[0].mxu0
        %v613 = vpop.f32.mrb[0].mxu0
        %v614 = vpop.f32.mrb[0].mxu0
        %615 = vdwg.mxu0
        %616 = vrot.lane.b32.xlu0 %v566, 96
        %v617 = vpop.permute.xlu0 %616
        %v619 = vsel %vm569, %v566, 0
        %v622 = vsel %vm569, %v617, 0
        %624 = vmatprep.subr.bf16.mxu0 0
        %625 = vmatpush1.bf16.xpose.msra.mxu0 %v622
        %626 = vmatprep.subr.bf16.mxu0 0
        %627 = vmatpush1.bf16.xpose.msra.mxu0 0
        %628 = vmatprep.subr.bf16.mxu0 0
        %629 = vmatpush1.bf16.xpose.msra.mxu0 0
        %630 = vmatprep.subr.bf16.mxu0 0
        %631 = vmatpush1.bf16.xpose.msra.mxu0 0
        %632 = vmatprep.subr.bf16.mxu0 0
        %633 = vmatpush1.bf16.xpose.msra.mxu0 0
        %634 = vmatprep.subr.bf16.mxu0 0
        %635 = vmatpush1.bf16.xpose.msra.mxu0 0
        %636 = vmatprep.subr.bf16.mxu0 0
        %637 = vmatpush1.bf16.xpose.msra.mxu0 0
        %638 = vmatprep.subr.bf16.mxu0 0
        %639 = vmatpush1.bf16.xpose.msra.mxu0 0
        %640 = vmatprep.subr.bf16.mxu0 0
        %641 = vmatpush1.bf16.xpose.msra.mxu0 0
        %642 = vmatprep.subr.bf16.mxu0 0
        %643 = vmatpush1.bf16.xpose.msra.mxu0 0
        %644 = vmatprep.subr.bf16.mxu0 0
        %645 = vmatpush1.bf16.xpose.msra.mxu0 0
        %646 = vmatprep.subr.bf16.mxu0 0
        %647 = vmatpush1.bf16.xpose.msra.mxu0 0
        %648 = vmatprep.subr.bf16.mxu0 0
        %649 = vmatpush1.bf16.xpose.msra.mxu0 0
        %650 = vmatprep.subr.bf16.mxu0 0
        %651 = vmatpush1.bf16.xpose.msra.mxu0 0
        %652 = vmatprep.subr.bf16.mxu0 0
        %653 = vmatpush1.bf16.xpose.msra.mxu0 0
        %654 = vmatprep.subr.bf16.mxu0 0
        %655 = vmatpush1.bf16.xpose.msra.mxu0 0
        %656 = vmatprep.mubr.bf16.mxu0 0
        %657 = vmatmul.mubr.bf16.gmra.mrb[0].mxu0 %v619
        %v658 = vpop.f32.mrb[0].mxu0
        %v659 = vadd.f32 0.0, %v658
        %v660 = vpop.f32.mrb[0].mxu0
        %v661 = vpop.f32.mrb[0].mxu0
        %v662 = vpop.f32.mrb[0].mxu0
        %663 = vdwg.mxu0
        %v664 = vsel %vm569, %v611, -inf
        %665 = vmax.xlane.f32.xlu0 %v664
        %v666 = vpop.xlane.xlu0 %665
        %v667 = vsel %vm569, %v659, -inf
        %668 = vmax.xlane.f32.xlu0 %v667
        %v669 = vpop.xlane.xlu0 %668
        %v670 = vsub.f32 %v611, %v666
        %v671 = vsub.f32 %v659, %v669
        %v672 = vmul.f32 %v670, 1.442695
        %v673 = vpow.pop %v672
        %v674 = vmul.f32 %v671, 1.442695
        %v675 = vpow.pop %v674
        %v676 = vsel %vm569, %v673, 0.0
        %677 = vadd.xlane.f32.xlu0 %v676
        %v678 = vpop.xlane.xlu0 %677
        %v679 = vsel %vm569, %v675, 0.0
        %680 = vadd.xlane.f32.xlu0 %v679
        %v681 = vpop.xlane.xlu0 %680
        %v682 = vpack.c.bf16 %v673, %v673
        %v683 = vpack.c.bf16 %v675, %v675
        %684 = vrot.lane.b32.xlu0 %v565, 64
        %v685 = vpop.permute.xlu0 %684
        %v687 = vsel %vm569, %v682, 0
        %vm689 = vcmask 1043456
        %v691 = vsel %vm689, %v685, 0
        %693 = vmatprep.subr.bf16.mxu0 0
        %694 = vmatpush1.bf16.msra.mxu0 %v691
        %695 = vmatprep.subr.bf16.mxu0 0
        %696 = vmatpush1.bf16.msra.mxu0 0
        %697 = vmatprep.subr.bf16.mxu0 0
        %698 = vmatpush1.bf16.msra.mxu0 0
        %699 = vmatprep.subr.bf16.mxu0 0
        %700 = vmatpush1.bf16.msra.mxu0 0
        %701 = vmatprep.subr.bf16.mxu0 0
        %702 = vmatpush1.bf16.msra.mxu0 0
        %703 = vmatprep.subr.bf16.mxu0 0
        %704 = vmatpush1.bf16.msra.mxu0 0
        %705 = vmatprep.subr.bf16.mxu0 0
        %706 = vmatpush1.bf16.msra.mxu0 0
        %707 = vmatprep.subr.bf16.mxu0 0
        %708 = vmatpush1.bf16.msra.mxu0 0
        %709 = vmatprep.subr.bf16.mxu0 0
        %710 = vmatpush1.bf16.msra.mxu0 0
        %711 = vmatprep.subr.bf16.mxu0 0
        %712 = vmatpush1.bf16.msra.mxu0 0
        %713 = vmatprep.subr.bf16.mxu0 0
        %714 = vmatpush1.bf16.msra.mxu0 0
        %715 = vmatprep.subr.bf16.mxu0 0
        %716 = vmatpush1.bf16.msra.mxu0 0
        %717 = vmatprep.subr.bf16.mxu0 0
        %718 = vmatpush1.bf16.msra.mxu0 0
        %719 = vmatprep.subr.bf16.mxu0 0
        %720 = vmatpush1.bf16.msra.mxu0 0
        %721 = vmatprep.subr.bf16.mxu0 0
        %722 = vmatpush1.bf16.msra.mxu0 0
        %723 = vmatprep.subr.bf16.mxu0 0
        %724 = vmatpush1.bf16.msra.mxu0 0
        %725 = vmatprep.mubr.bf16.mxu0 0
        %726 = vmatmul.mubr.bf16.gmra.mrb[0].mxu0 %v687
        %v727 = vpop.f32.mrb[0].mxu0
        %v728 = vadd.f32 0.0, %v727
        %v729 = vpop.f32.mrb[0].mxu0
        %v730 = vpop.f32.mrb[0].mxu0
        %v731 = vpop.f32.mrb[0].mxu0
        %732 = vdwg.mxu0
        %733 = vrot.lane.b32.xlu0 %v566, 64
        %v734 = vpop.permute.xlu0 %733
        %v736 = vsel %vm569, %v683, 0
        %v739 = vsel %vm689, %v734, 0
        %741 = vmatprep.subr.bf16.mxu0 0
        %742 = vmatpush1.bf16.msra.mxu0 %v739
        %743 = vmatprep.subr.bf16.mxu0 0
        %744 = vmatpush1.bf16.msra.mxu0 0
        %745 = vmatprep.subr.bf16.mxu0 0
        %746 = vmatpush1.bf16.msra.mxu0 0
        %747 = vmatprep.subr.bf16.mxu0 0
        %748 = vmatpush1.bf16.msra.mxu0 0
        %749 = vmatprep.subr.bf16.mxu0 0
        %750 = vmatpush1.bf16.msra.mxu0 0
        %751 = vmatprep.subr.bf16.mxu0 0
        %752 = vmatpush1.bf16.msra.mxu0 0
        %753 = vmatprep.subr.bf16.mxu0 0
        %754 = vmatpush1.bf16.msra.mxu0 0
        %755 = vmatprep.subr.bf16.mxu0 0
        %756 = vmatpush1.bf16.msra.mxu0 0
        %757 = vmatprep.subr.bf16.mxu0 0
        %758 = vmatpush1.bf16.msra.mxu0 0
        %759 = vmatprep.subr.bf16.mxu0 0
        %760 = vmatpush1.bf16.msra.mxu0 0
        %761 = vmatprep.subr.bf16.mxu0 0
        %762 = vmatpush1.bf16.msra.mxu0 0
        %763 = vmatprep.subr.bf16.mxu0 0
        %764 = vmatpush1.bf16.msra.mxu0 0
        %765 = vmatprep.subr.bf16.mxu0 0
        %766 = vmatpush1.bf16.msra.mxu0 0
        %767 = vmatprep.subr.bf16.mxu0 0
        %768 = vmatpush1.bf16.msra.mxu0 0
        %769 = vmatprep.subr.bf16.mxu0 0
        %770 = vmatpush1.bf16.msra.mxu0 0
        %771 = vmatprep.subr.bf16.mxu0 0
        %772 = vmatpush1.bf16.msra.mxu0 0
        %773 = vmatprep.mubr.bf16.mxu0 0
        %774 = vmatmul.mubr.bf16.gmra.mrb[0].mxu0 %v736
        %v775 = vpop.f32.mrb[0].mxu0
        %v776 = vadd.f32 0.0, %v775
        %v777 = vpop.f32.mrb[0].mxu0
        %v778 = vpop.f32.mrb[0].mxu0
        %v779 = vpop.f32.mrb[0].mxu0
        %780 = vdwg.mxu0
        %v781 = vrcp.pop %v678
        %v782 = vrcp.pop %v681
        %v783 = vmul.f32 %v728, %v781
        %v784 = vmul.f32 %v776, %v782
        %785 = vst.msk [vmem:[#allocation2] sm:$0xff] %vm569, %v783
        %786 = vst.msk [vmem:[#allocation2 + $0x8] sm:$0xff] %vm569, %v784
        %787 = vrot.lane.b32.xlu0 %v565, 120
        %v788 = vpop.permute.xlu0 %787
        %789 = vrot.lane.b32.xlu0 %v565, 88
        %v790 = vpop.permute.xlu0 %789
        %v792 = vsel %vm569, %v788, 0
        %v795 = vsel %vm569, %v790, 0
        %797 = vmatprep.subr.bf16.mxu0 0
        %798 = vmatpush1.bf16.xpose.msra.mxu0 %v795
        %799 = vmatprep.subr.bf16.mxu0 0
        %800 = vmatpush1.bf16.xpose.msra.mxu0 0
        %801 = vmatprep.subr.bf16.mxu0 0
        %802 = vmatpush1.bf16.xpose.msra.mxu0 0
        %803 = vmatprep.subr.bf16.mxu0 0
        %804 = vmatpush1.bf16.xpose.msra.mxu0 0
        %805 = vmatprep.subr.bf16.mxu0 0
        %806 = vmatpush1.bf16.xpose.msra.mxu0 0
        %807 = vmatprep.subr.bf16.mxu0 0
        %808 = vmatpush1.bf16.xpose.msra.mxu0 0
        %809 = vmatprep.subr.bf16.mxu0 0
        %810 = vmatpush1.bf16.xpose.msra.mxu0 0
        %811 = vmatprep.subr.bf16.mxu0 0
        %812 = vmatpush1.bf16.xpose.msra.mxu0 0
        %813 = vmatprep.subr.bf16.mxu0 0
        %814 = vmatpush1.bf16.xpose.msra.mxu0 0
        %815 = vmatprep.subr.bf16.mxu0 0
        %816 = vmatpush1.bf16.xpose.msra.mxu0 0
        %817 = vmatprep.subr.bf16.mxu0 0
        %818 = vmatpush1.bf16.xpose.msra.mxu0 0
        %819 = vmatprep.subr.bf16.mxu0 0
        %820 = vmatpush1.bf16.xpose.msra.mxu0 0
        %821 = vmatprep.subr.bf16.mxu0 0
        %822 = vmatpush1.bf16.xpose.msra.mxu0 0
        %823 = vmatprep.subr.bf16.mxu0 0
        %824 = vmatpush1.bf16.xpose.msra.mxu0 0
        %825 = vmatprep.subr.bf16.mxu0 0
        %826 = vmatpush1.bf16.xpose.msra.mxu0 0
        %827 = vmatprep.subr.bf16.mxu0 0
        %828 = vmatpush1.bf16.xpose.msra.mxu0 0
        %829 = vmatprep.mubr.bf16.mxu0 0
        %830 = vmatmul.mubr.bf16.gmra.mrb[0].mxu0 %v792
        %v831 = vpop.f32.mrb[0].mxu0
        %v832 = vadd.f32 0.0, %v831
        %v833 = vpop.f32.mrb[0].mxu0
        %v834 = vpop.f32.mrb[0].mxu0
        %v835 = vpop.f32.mrb[0].mxu0
        %836 = vdwg.mxu0
        %837 = vrot.lane.b32.xlu0 %v566, 120
        %v838 = vpop.permute.xlu0 %837
        %839 = vrot.lane.b32.xlu0 %v566, 88
        %v840 = vpop.permute.xlu0 %839
        %v842 = vsel %vm569, %v838, 0
        %v845 = vsel %vm569, %v840, 0
        %847 = vmatprep.subr.bf16.mxu0 0
        %848 = vmatpush1.bf16.xpose.msra.mxu0 %v845
        %849 = vmatprep.subr.bf16.mxu0 0
        %850 = vmatpush1.bf16.xpose.msra.mxu0 0
        %851 = vmatprep.subr.bf16.mxu0 0
        %852 = vmatpush1.bf16.xpose.msra.mxu0 0
        %853 = vmatprep.subr.bf16.mxu0 0
        %854 = vmatpush1.bf16.xpose.msra.mxu0 0
        %855 = vmatprep.subr.bf16.mxu0 0
        %856 = vmatpush1.bf16.xpose.msra.mxu0 0
        %857 = vmatprep.subr.bf16.mxu0 0
        %858 = vmatpush1.bf16.xpose.msra.mxu0 0
        %859 = vmatprep.subr.bf16.mxu0 0
        %860 = vmatpush1.bf16.xpose.msra.mxu0 0
        %861 = vmatprep.subr.bf16.mxu0 0
        %862 = vmatpush1.bf16.xpose.msra.mxu0 0
        %863 = vmatprep.subr.bf16.mxu0 0
        %864 = vmatpush1.bf16.xpose.msra.mxu0 0
        %865 = vmatprep.subr.bf16.mxu0 0
        %866 = vmatpush1.bf16.xpose.msra.mxu0 0
        %867 = vmatprep.subr.bf16.mxu0 0
        %868 = vmatpush1.bf16.xpose.msra.mxu0 0
        %869 = vmatprep.subr.bf16.mxu0 0
        %870 = vmatpush1.bf16.xpose.msra.mxu0 0
        %871 = vmatprep.subr.bf16.mxu0 0
        %872 = vmatpush1.bf16.xpose.msra.mxu0 0
        %873 = vmatprep.subr.bf16.mxu0 0
        %874 = vmatpush1.bf16.xpose.msra.mxu0 0
        %875 = vmatprep.subr.bf16.mxu0 0
        %876 = vmatpush1.bf16.xpose.msra.mxu0 0
        %877 = vmatprep.subr.bf16.mxu0 0
        %878 = vmatpush1.bf16.xpose.msra.mxu0 0
        %879 = vmatprep.mubr.bf16.mxu0 0
        %880 = vmatmul.mubr.bf16.gmra.mrb[0].mxu0 %v842
        %v881 = vpop.f32.mrb[0].mxu0
        %v882 = vadd.f32 0.0, %v881
        %v883 = vpop.f32.mrb[0].mxu0
        %v884 = vpop.f32.mrb[0].mxu0
        %v885 = vpop.f32.mrb[0].mxu0
        %886 = vdwg.mxu0
        %v887 = vsel %vm569, %v832, -inf
        %888 = vmax.xlane.f32.xlu0 %v887
        %v889 = vpop.xlane.xlu0 %888
        %v890 = vsel %vm569, %v882, -inf
        %891 = vmax.xlane.f32.xlu0 %v890
        %v892 = vpop.xlane.xlu0 %891
        %v893 = vsub.f32 %v832, %v889
        %v894 = vsub.f32 %v882, %v892
        %v895 = vmul.f32 %v893, 1.442695
        %v896 = vpow.pop %v895
        %v897 = vmul.f32 %v894, 1.442695
        %v898 = vpow.pop %v897
        %v899 = vsel %vm569, %v896, 0.0
        %900 = vadd.xlane.f32.xlu0 %v899
        %v901 = vpop.xlane.xlu0 %900
        %v902 = vsel %vm569, %v898, 0.0
        %903 = vadd.xlane.f32.xlu0 %v902
        %v904 = vpop.xlane.xlu0 %903
        %v905 = vpack.c.bf16 %v896, %v896
        %v906 = vpack.c.bf16 %v898, %v898
        %907 = vrot.lane.b32.xlu0 %v565, 56
        %v908 = vpop.permute.xlu0 %907
        %v910 = vsel %vm569, %v905, 0
        %v913 = vsel %vm689, %v908, 0
        %915 = vmatprep.subr.bf16.mxu0 0
        %916 = vmatpush1.bf16.msra.mxu0 %v913
        %917 = vmatprep.subr.bf16.mxu0 0
        %918 = vmatpush1.bf16.msra.mxu0 0
        %919 = vmatprep.subr.bf16.mxu0 0
        %920 = vmatpush1.bf16.msra.mxu0 0
        %921 = vmatprep.subr.bf16.mxu0 0
        %922 = vmatpush1.bf16.msra.mxu0 0
        %923 = vmatprep.subr.bf16.mxu0 0
        %924 = vmatpush1.bf16.msra.mxu0 0
        %925 = vmatprep.subr.bf16.mxu0 0
        %926 = vmatpush1.bf16.msra.mxu0 0
        %927 = vmatprep.subr.bf16.mxu0 0
        %928 = vmatpush1.bf16.msra.mxu0 0
        %929 = vmatprep.subr.bf16.mxu0 0
        %930 = vmatpush1.bf16.msra.mxu0 0
        %931 = vmatprep.subr.bf16.mxu0 0
        %932 = vmatpush1.bf16.msra.mxu0 0
        %933 = vmatprep.subr.bf16.mxu0 0
        %934 = vmatpush1.bf16.msra.mxu0 0
        %935 = vmatprep.subr.bf16.mxu0 0
        %936 = vmatpush1.bf16.msra.mxu0 0
        %937 = vmatprep.subr.bf16.mxu0 0
        %938 = vmatpush1.bf16.msra.mxu0 0
        %939 = vmatprep.subr.bf16.mxu0 0
        %940 = vmatpush1.bf16.msra.mxu0 0
        %941 = vmatprep.subr.bf16.mxu0 0
        %942 = vmatpush1.bf16.msra.mxu0 0
        %943 = vmatprep.subr.bf16.mxu0 0
        %944 = vmatpush1.bf16.msra.mxu0 0
        %945 = vmatprep.subr.bf16.mxu0 0
        %946 = vmatpush1.bf16.msra.mxu0 0
        %947 = vmatprep.mubr.bf16.mxu0 0
        %948 = vmatmul.mubr.bf16.gmra.mrb[0].mxu0 %v910
        %v949 = vpop.f32.mrb[0].mxu0
        %v950 = vadd.f32 0.0, %v949
        %v951 = vpop.f32.mrb[0].mxu0
        %v952 = vpop.f32.mrb[0].mxu0
        %v953 = vpop.f32.mrb[0].mxu0
        %954 = vdwg.mxu0
        %955 = vrot.lane.b32.xlu0 %v566, 56
        %v956 = vpop.permute.xlu0 %955
        %v958 = vsel %vm569, %v906, 0
        %v961 = vsel %vm689, %v956, 0
        %963 = vmatprep.subr.bf16.mxu0 0
        %964 = vmatpush1.bf16.msra.mxu0 %v961
        %965 = vmatprep.subr.bf16.mxu0 0
        %966 = vmatpush1.bf16.msra.mxu0 0
        %967 = vmatprep.subr.bf16.mxu0 0
        %968 = vmatpush1.bf16.msra.mxu0 0
        %969 = vmatprep.subr.bf16.mxu0 0
        %970 = vmatpush1.bf16.msra.mxu0 0
        %971 = vmatprep.subr.bf16.mxu0 0
        %972 = vmatpush1.bf16.msra.mxu0 0
        %973 = vmatprep.subr.bf16.mxu0 0
        %974 = vmatpush1.bf16.msra.mxu0 0
        %975 = vmatprep.subr.bf16.mxu0 0
        %976 = vmatpush1.bf16.msra.mxu0 0
        %977 = vmatprep.subr.bf16.mxu0 0
        %978 = vmatpush1.bf16.msra.mxu0 0
        %979 = vmatprep.subr.bf16.mxu0 0
        %980 = vmatpush1.bf16.msra.mxu0 0
        %981 = vmatprep.subr.bf16.mxu0 0
        %982 = vmatpush1.bf16.msra.mxu0 0
        %983 = vmatprep.subr.bf16.mxu0 0
        %984 = vmatpush1.bf16.msra.mxu0 0
        %985 = vmatprep.subr.bf16.mxu0 0
        %986 = vmatpush1.bf16.msra.mxu0 0
        %987 = vmatprep.subr.bf16.mxu0 0
        %988 = vmatpush1.bf16.msra.mxu0 0
        %989 = vmatprep.subr.bf16.mxu0 0
        %990 = vmatpush1.bf16.msra.mxu0 0
        %991 = vmatprep.subr.bf16.mxu0 0
        %992 = vmatpush1.bf16.msra.mxu0 0
        %993 = vmatprep.subr.bf16.mxu0 0
        %994 = vmatpush1.bf16.msra.mxu0 0
        %995 = vmatprep.mubr.bf16.mxu0 0
        %996 = vmatmul.mubr.bf16.gmra.mrb[0].mxu0 %v958
        %v997 = vpop.f32.mrb[0].mxu0
        %v998 = vadd.f32 0.0, %v997
        %v999 = vpop.f32.mrb[0].mxu0
        %v1000 = vpop.f32.mrb[0].mxu0
        %v1001 = vpop.f32.mrb[0].mxu0
        %1002 = vdwg.mxu0
        %v1003 = vrcp.pop %v901
        %v1004 = vrcp.pop %v904
        %v1005 = vmul.f32 %v950, %v1003
        %v1006 = vmul.f32 %v998, %v1004
        %1009 = vrot.lane.b32.xlu0 %v1005, 8
        %v1010 = vpop.permute.xlu0 %1009
        %1011 = vrot.lane.b32.xlu0 %v1006, 8
        %v1012 = vpop.permute.xlu0 %1011
        %vm1015 = vcmask 130112
        %1016 = vst.msk [vmem:[#allocation2] sm:$0xff] %vm1015, %v1010
        %1017 = vst.msk [vmem:[#allocation2 + $0x8] sm:$0xff] %vm1015, %v1012
        %1018 = vrot.lane.b32.xlu0 %v565, 112
        %v1019 = vpop.permute.xlu0 %1018
        %1020 = vrot.lane.b32.xlu0 %v565, 80
        %v1021 = vpop.permute.xlu0 %1020
        %v1023 = vsel %vm569, %v1019, 0
        %v1026 = vsel %vm569, %v1021, 0
        %1028 = vmatprep.subr.bf16.mxu0 0
        %1029 = vmatpush1.bf16.xpose.msra.mxu0 %v1026
        %1030 = vmatprep.subr.bf16.mxu0 0
        %1031 = vmatpush1.bf16.xpose.msra.mxu0 0
        %1032 = vmatprep.subr.bf16.mxu0 0
        %1033 = vmatpush1.bf16.xpose.msra.mxu0 0
        %1034 = vmatprep.subr.bf16.mxu0 0
        %1035 = vmatpush1.bf16.xpose.msra.mxu0 0
        %1036 = vmatprep.subr.bf16.mxu0 0
        %1037 = vmatpush1.bf16.xpose.msra.mxu0 0
        %1038 = vmatprep.subr.bf16.mxu0 0
        %1039 = vmatpush1.bf16.xpose.msra.mxu0 0
        %1040 = vmatprep.subr.bf16.mxu0 0
        %1041 = vmatpush1.bf16.xpose.msra.mxu0 0
        %1042 = vmatprep.subr.bf16.mxu0 0
        %1043 = vmatpush1.bf16.xpose.msra.mxu0 0
        %1044 = vmatprep.subr.bf16.mxu0 0
        %1045 = vmatpush1.bf16.xpose.msra.mxu0 0
        %1046 = vmatprep.subr.bf16.mxu0 0
        %1047 = vmatpush1.bf16.xpose.msra.mxu0 0
        %1048 = vmatprep.subr.bf16.mxu0 0
        %1049 = vmatpush1.bf16.xpose.msra.mxu0 0
        %1050 = vmatprep.subr.bf16.mxu0 0
        %1051 = vmatpush1.bf16.xpose.msra.mxu0 0
        %1052 = vmatprep.subr.bf16.mxu0 0
        %1053 = vmatpush1.bf16.xpose.msra.mxu0 0
        %1054 = vmatprep.subr.bf16.mxu0 0
        %1055 = vmatpush1.bf16.xpose.msra.mxu0 0
        %1056 = vmatprep.subr.bf16.mxu0 0
        %1057 = vmatpush1.bf16.xpose.msra.mxu0 0
        %1058 = vmatprep.subr.bf16.mxu0 0
        %1059 = vmatpush1.bf16.xpose.msra.mxu0 0
        %1060 = vmatprep.mubr.bf16.mxu0 0
        %1061 = vmatmul.mubr.bf16.gmra.mrb[0].mxu0 %v1023
        %v1062 = vpop.f32.mrb[0].mxu0
        %v1063 = vadd.f32 0.0, %v1062
        %v1064 = vpop.f32.mrb[0].mxu0
        %v1065 = vpop.f32.mrb[0].mxu0
        %v1066 = vpop.f32.mrb[0].mxu0
        %1067 = vdwg.mxu0
        %1068 = vrot.lane.b32.xlu0 %v566, 112
        %v1069 = vpop.permute.xlu0 %1068
        %1070 = vrot.lane.b32.xlu0 %v566, 80
        %v1071 = vpop.permute.xlu0 %1070
        %v1073 = vsel %vm569, %v1069, 0
        %v1076 = vsel %vm569, %v1071, 0
        %1078 = vmatprep.subr.bf16.mxu0 0
        %1079 = vmatpush1.bf16.xpose.msra.mxu0 %v1076
        %1080 = vmatprep.subr.bf16.mxu0 0
        %1081 = vmatpush1.bf16.xpose.msra.mxu0 0
        %1082 = vmatprep.subr.bf16.mxu0 0
        %1083 = vmatpush1.bf16.xpose.msra.mxu0 0
        %1084 = vmatprep.subr.bf16.mxu0 0
        %1085 = vmatpush1.bf16.xpose.msra.mxu0 0
        %1086 = vmatprep.subr.bf16.mxu0 0
        %1087 = vmatpush1.bf16.xpose.msra.mxu0 0
        %1088 = vmatprep.subr.bf16.mxu0 0
        %1089 = vmatpush1.bf16.xpose.msra.mxu0 0
        %1090 = vmatprep.subr.bf16.mxu0 0
        %1091 = vmatpush1.bf16.xpose.msra.mxu0 0
        %1092 = vmatprep.subr.bf16.mxu0 0
        %1093 = vmatpush1.bf16.xpose.msra.mxu0 0
        %1094 = vmatprep.subr.bf16.mxu0 0
        %1095 = vmatpush1.bf16.xpose.msra.mxu0 0
        %1096 = vmatprep.subr.bf16.mxu0 0
        %1097 = vmatpush1.bf16.xpose.msra.mxu0 0
        %1098 = vmatprep.subr.bf16.mxu0 0
        %1099 = vmatpush1.bf16.xpose.msra.mxu0 0
        %1100 = vmatprep.subr.bf16.mxu0 0
        %1101 = vmatpush1.bf16.xpose.msra.mxu0 0
        %1102 = vmatprep.subr.bf16.mxu0 0
        %1103 = vmatpush1.bf16.xpose.msra.mxu0 0
        %1104 = vmatprep.subr.bf16.mxu0 0
        %1105 = vmatpush1.bf16.xpose.msra.mxu0 0
        %1106 = vmatprep.subr.bf16.mxu0 0
        %1107 = vmatpush1.bf16.xpose.msra.mxu0 0
        %1108 = vmatprep.subr.bf16.mxu0 0
        %1109 = vmatpush1.bf16.xpose.msra.mxu0 0
        %1110 = vmatprep.mubr.bf16.mxu0 0
        %1111 = vmatmul.mubr.bf16.gmra.mrb[0].mxu0 %v1073
        %v1112 = vpop.f32.mrb[0].mxu0
        %v1113 = vadd.f32 0.0, %v1112
        %v1114 = vpop.f32.mrb[0].mxu0
        %v1115 = vpop.f32.mrb[0].mxu0
        %v1116 = vpop.f32.mrb[0].mxu0
        %1117 = vdwg.mxu0
        %v1118 = vsel %vm569, %v1063, -inf
        %1119 = vmax.xlane.f32.xlu0 %v1118
        %v1120 = vpop.xlane.xlu0 %1119
        %v1121 = vsel %vm569, %v1113, -inf
        %1122 = vmax.xlane.f32.xlu0 %v1121
        %v1123 = vpop.xlane.xlu0 %1122
        %v1124 = vsub.f32 %v1063, %v1120
        %v1125 = vsub.f32 %v1113, %v1123
        %v1126 = vmul.f32 %v1124, 1.442695
        %v1127 = vpow.pop %v1126
        %v1128 = vmul.f32 %v1125, 1.442695
        %v1129 = vpow.pop %v1128
        %v1130 = vsel %vm569, %v1127, 0.0
        %1131 = vadd.xlane.f32.xlu0 %v1130
        %v1132 = vpop.xlane.xlu0 %1131
        %v1133 = vsel %vm569, %v1129, 0.0
        %1134 = vadd.xlane.f32.xlu0 %v1133
        %v1135 = vpop.xlane.xlu0 %1134
        %v1136 = vpack.c.bf16 %v1127, %v1127
        %v1137 = vpack.c.bf16 %v1129, %v1129
        %1138 = vrot.lane.b32.xlu0 %v565, 48
        %v1139 = vpop.permute.xlu0 %1138
        %v1141 = vsel %vm569, %v1136, 0
        %v1144 = vsel %vm689, %v1139, 0
        %1146 = vmatprep.subr.bf16.mxu0 0
        %1147 = vmatpush1.bf16.msra.mxu0 %v1144
        %1148 = vmatprep.subr.bf16.mxu0 0
        %1149 = vmatpush1.bf16.msra.mxu0 0
        %1150 = vmatprep.subr.bf16.mxu0 0
        %1151 = vmatpush1.bf16.msra.mxu0 0
        %1152 = vmatprep.subr.bf16.mxu0 0
        %1153 = vmatpush1.bf16.msra.mxu0 0
        %1154 = vmatprep.subr.bf16.mxu0 0
        %1155 = vmatpush1.bf16.msra.mxu0 0
        %1156 = vmatprep.subr.bf16.mxu0 0
        %1157 = vmatpush1.bf16.msra.mxu0 0
        %1158 = vmatprep.subr.bf16.mxu0 0
        %1159 = vmatpush1.bf16.msra.mxu0 0
        %1160 = vmatprep.subr.bf16.mxu0 0
        %1161 = vmatpush1.bf16.msra.mxu0 0
        %1162 = vmatprep.subr.bf16.mxu0 0
        %1163 = vmatpush1.bf16.msra.mxu0 0
        %1164 = vmatprep.subr.bf16.mxu0 0
        %1165 = vmatpush1.bf16.msra.mxu0 0
        %1166 = vmatprep.subr.bf16.mxu0 0
        %1167 = vmatpush1.bf16.msra.mxu0 0
        %1168 = vmatprep.subr.bf16.mxu0 0
        %1169 = vmatpush1.bf16.msra.mxu0 0
        %1170 = vmatprep.subr.bf16.mxu0 0
        %1171 = vmatpush1.bf16.msra.mxu0 0
        %1172 = vmatprep.subr.bf16.mxu0 0
        %1173 = vmatpush1.bf16.msra.mxu0 0
        %1174 = vmatprep.subr.bf16.mxu0 0
        %1175 = vmatpush1.bf16.msra.mxu0 0
        %1176 = vmatprep.subr.bf16.mxu0 0
        %1177 = vmatpush1.bf16.msra.mxu0 0
        %1178 = vmatprep.mubr.bf16.mxu0 0
        %1179 = vmatmul.mubr.bf16.gmra.mrb[0].mxu0 %v1141
        %v1180 = vpop.f32.mrb[0].mxu0
        %v1181 = vadd.f32 0.0, %v1180
        %v1182 = vpop.f32.mrb[0].mxu0
        %v1183 = vpop.f32.mrb[0].mxu0
        %v1184 = vpop.f32.mrb[0].mxu0
        %1185 = vdwg.mxu0
        %1186 = vrot.lane.b32.xlu0 %v566, 48
        %v1187 = vpop.permute.xlu0 %1186
        %v1189 = vsel %vm569, %v1137, 0
        %v1192 = vsel %vm689, %v1187, 0
        %1194 = vmatprep.subr.bf16.mxu0 0
        %1195 = vmatpush1.bf16.msra.mxu0 %v1192
        %1196 = vmatprep.subr.bf16.mxu0 0
        %1197 = vmatpush1.bf16.msra.mxu0 0
        %1198 = vmatprep.subr.bf16.mxu0 0
        %1199 = vmatpush1.bf16.msra.mxu0 0
        %1200 = vmatprep.subr.bf16.mxu0 0
        %1201 = vmatpush1.bf16.msra.mxu0 0
        %1202 = vmatprep.subr.bf16.mxu0 0
        %1203 = vmatpush1.bf16.msra.mxu0 0
        %1204 = vmatprep.subr.bf16.mxu0 0
        %1205 = vmatpush1.bf16.msra.mxu0 0
        %1206 = vmatprep.subr.bf16.mxu0 0
        %1207 = vmatpush1.bf16.msra.mxu0 0
        %1208 = vmatprep.subr.bf16.mxu0 0
        %1209 = vmatpush1.bf16.msra.mxu0 0
        %1210 = vmatprep.subr.bf16.mxu0 0
        %1211 = vmatpush1.bf16.msra.mxu0 0
        %1212 = vmatprep.subr.bf16.mxu0 0
        %1213 = vmatpush1.bf16.msra.mxu0 0
        %1214 = vmatprep.subr.bf16.mxu0 0
        %1215 = vmatpush1.bf16.msra.mxu0 0
        %1216 = vmatprep.subr.bf16.mxu0 0
        %1217 = vmatpush1.bf16.msra.mxu0 0
        %1218 = vmatprep.subr.bf16.mxu0 0
        %1219 = vmatpush1.bf16.msra.mxu0 0
        %1220 = vmatprep.subr.bf16.mxu0 0
        %1221 = vmatpush1.bf16.msra.mxu0 0
        %1222 = vmatprep.subr.bf16.mxu0 0
        %1223 = vmatpush1.bf16.msra.mxu0 0
        %1224 = vmatprep.subr.bf16.mxu0 0
        %1225 = vmatpush1.bf16.msra.mxu0 0
        %1226 = vmatprep.mubr.bf16.mxu0 0
        %1227 = vmatmul.mubr.bf16.gmra.mrb[0].mxu0 %v1189
        %v1228 = vpop.f32.mrb[0].mxu0
        %v1229 = vadd.f32 0.0, %v1228
        %v1230 = vpop.f32.mrb[0].mxu0
        %v1231 = vpop.f32.mrb[0].mxu0
        %v1232 = vpop.f32.mrb[0].mxu0
        %1233 = vdwg.mxu0
        %v1234 = vrcp.pop %v1132
        %v1235 = vrcp.pop %v1135
        %v1236 = vmul.f32 %v1181, %v1234
        %v1237 = vmul.f32 %v1229, %v1235
        %1240 = vrot.lane.b32.xlu0 %v1236, 16
        %v1241 = vpop.permute.xlu0 %1240
        %1242 = vrot.lane.b32.xlu0 %v1237, 16
        %v1243 = vpop.permute.xlu0 %1242
        %vm1246 = vcmask 195712
        %1247 = vst.msk [vmem:[#allocation2] sm:$0xff] %vm1246, %v1241
        %1248 = vst.msk [vmem:[#allocation2 + $0x8] sm:$0xff] %vm1246, %v1243
        %1249 = vrot.lane.b32.xlu0 %v565, 104
        %v1250 = vpop.permute.xlu0 %1249
        %1251 = vrot.lane.b32.xlu0 %v565, 72
        %v1252 = vpop.permute.xlu0 %1251
        %v1254 = vsel %vm569, %v1250, 0
        %v1257 = vsel %vm569, %v1252, 0
        %1259 = vmatprep.subr.bf16.mxu0 0
        %1260 = vmatpush1.bf16.xpose.msra.mxu0 %v1257
        %1261 = vmatprep.subr.bf16.mxu0 0
        %1262 = vmatpush1.bf16.xpose.msra.mxu0 0
        %1263 = vmatprep.subr.bf16.mxu0 0
        %1264 = vmatpush1.bf16.xpose.msra.mxu0 0
        %1265 = vmatprep.subr.bf16.mxu0 0
        %1266 = vmatpush1.bf16.xpose.msra.mxu0 0
        %1267 = vmatprep.subr.bf16.mxu0 0
        %1268 = vmatpush1.bf16.xpose.msra.mxu0 0
        %1269 = vmatprep.subr.bf16.mxu0 0
        %1270 = vmatpush1.bf16.xpose.msra.mxu0 0
        %1271 = vmatprep.subr.bf16.mxu0 0
        %1272 = vmatpush1.bf16.xpose.msra.mxu0 0
        %1273 = vmatprep.subr.bf16.mxu0 0
        %1274 = vmatpush1.bf16.xpose.msra.mxu0 0
        %1275 = vmatprep.subr.bf16.mxu0 0
        %1276 = vmatpush1.bf16.xpose.msra.mxu0 0
        %1277 = vmatprep.subr.bf16.mxu0 0
        %1278 = vmatpush1.bf16.xpose.msra.mxu0 0
        %1279 = vmatprep.subr.bf16.mxu0 0
        %1280 = vmatpush1.bf16.xpose.msra.mxu0 0
        %1281 = vmatprep.subr.bf16.mxu0 0
        %1282 = vmatpush1.bf16.xpose.msra.mxu0 0
        %1283 = vmatprep.subr.bf16.mxu0 0
        %1284 = vmatpush1.bf16.xpose.msra.mxu0 0
        %1285 = vmatprep.subr.bf16.mxu0 0
        %1286 = vmatpush1.bf16.xpose.msra.mxu0 0
        %1287 = vmatprep.subr.bf16.mxu0 0
        %1288 = vmatpush1.bf16.xpose.msra.mxu0 0
        %1289 = vmatprep.subr.bf16.mxu0 0
        %1290 = vmatpush1.bf16.xpose.msra.mxu0 0
        %1291 = vmatprep.mubr.bf16.mxu0 0
        %1292 = vmatmul.mubr.bf16.gmra.mrb[0].mxu0 %v1254
        %v1293 = vpop.f32.mrb[0].mxu0
        %v1294 = vadd.f32 0.0, %v1293
        %v1295 = vpop.f32.mrb[0].mxu0
        %v1296 = vpop.f32.mrb[0].mxu0
        %v1297 = vpop.f32.mrb[0].mxu0
        %1298 = vdwg.mxu0
        %1299 = vrot.lane.b32.xlu0 %v566, 104
        %v1300 = vpop.permute.xlu0 %1299
        %1301 = vrot.lane.b32.xlu0 %v566, 72
        %v1302 = vpop.permute.xlu0 %1301
        %v1304 = vsel %vm569, %v1300, 0
        %v1307 = vsel %vm569, %v1302, 0
        %1309 = vmatprep.subr.bf16.mxu0 0
        %1310 = vmatpush1.bf16.xpose.msra.mxu0 %v1307
        %1311 = vmatprep.subr.bf16.mxu0 0
        %1312 = vmatpush1.bf16.xpose.msra.mxu0 0
        %1313 = vmatprep.subr.bf16.mxu0 0
        %1314 = vmatpush1.bf16.xpose.msra.mxu0 0
        %1315 = vmatprep.subr.bf16.mxu0 0
        %1316 = vmatpush1.bf16.xpose.msra.mxu0 0
        %1317 = vmatprep.subr.bf16.mxu0 0
        %1318 = vmatpush1.bf16.xpose.msra.mxu0 0
        %1319 = vmatprep.subr.bf16.mxu0 0
        %1320 = vmatpush1.bf16.xpose.msra.mxu0 0
        %1321 = vmatprep.subr.bf16.mxu0 0
        %1322 = vmatpush1.bf16.xpose.msra.mxu0 0
        %1323 = vmatprep.subr.bf16.mxu0 0
        %1324 = vmatpush1.bf16.xpose.msra.mxu0 0
        %1325 = vmatprep.subr.bf16.mxu0 0
        %1326 = vmatpush1.bf16.xpose.msra.mxu0 0
        %1327 = vmatprep.subr.bf16.mxu0 0
        %1328 = vmatpush1.bf16.xpose.msra.mxu0 0
        %1329 = vmatprep.subr.bf16.mxu0 0
        %1330 = vmatpush1.bf16.xpose.msra.mxu0 0
        %1331 = vmatprep.subr.bf16.mxu0 0
        %1332 = vmatpush1.bf16.xpose.msra.mxu0 0
        %1333 = vmatprep.subr.bf16.mxu0 0
        %1334 = vmatpush1.bf16.xpose.msra.mxu0 0
        %1335 = vmatprep.subr.bf16.mxu0 0
        %1336 = vmatpush1.bf16.xpose.msra.mxu0 0
        %1337 = vmatprep.subr.bf16.mxu0 0
        %1338 = vmatpush1.bf16.xpose.msra.mxu0 0
        %1339 = vmatprep.subr.bf16.mxu0 0
        %1340 = vmatpush1.bf16.xpose.msra.mxu0 0
        %1341 = vmatprep.mubr.bf16.mxu0 0
        %1342 = vmatmul.mubr.bf16.gmra.mrb[0].mxu0 %v1304
        %v1343 = vpop.f32.mrb[0].mxu0
        %v1344 = vadd.f32 0.0, %v1343
        %v1345 = vpop.f32.mrb[0].mxu0
        %v1346 = vpop.f32.mrb[0].mxu0
        %v1347 = vpop.f32.mrb[0].mxu0
        %1348 = vdwg.mxu0
        %v1349 = vsel %vm569, %v1294, -inf
        %1350 = vmax.xlane.f32.xlu0 %v1349
        %v1351 = vpop.xlane.xlu0 %1350
        %v1352 = vsel %vm569, %v1344, -inf
        %1353 = vmax.xlane.f32.xlu0 %v1352
        %v1354 = vpop.xlane.xlu0 %1353
        %v1355 = vsub.f32 %v1294, %v1351
        %v1356 = vsub.f32 %v1344, %v1354
        %v1357 = vmul.f32 %v1355, 1.442695
        %v1358 = vpow.pop %v1357
        %v1359 = vmul.f32 %v1356, 1.442695
        %v1360 = vpow.pop %v1359
        %v1361 = vsel %vm569, %v1358, 0.0
        %1362 = vadd.xlane.f32.xlu0 %v1361
        %v1363 = vpop.xlane.xlu0 %1362
        %v1364 = vsel %vm569, %v1360, 0.0
        %1365 = vadd.xlane.f32.xlu0 %v1364
        %v1366 = vpop.xlane.xlu0 %1365
        %v1367 = vpack.c.bf16 %v1358, %v1358
        %v1368 = vpack.c.bf16 %v1360, %v1360
        %1369 = vrot.lane.b32.xlu0 %v565, 40
        %v1370 = vpop.permute.xlu0 %1369
        %v1372 = vsel %vm569, %v1367, 0
        %v1375 = vsel %vm689, %v1370, 0
        %1377 = vmatprep.subr.bf16.mxu0 0
        %1378 = vmatpush1.bf16.msra.mxu0 %v1375
        %1379 = vmatprep.subr.bf16.mxu0 0
        %1380 = vmatpush1.bf16.msra.mxu0 0
        %1381 = vmatprep.subr.bf16.mxu0 0
        %1382 = vmatpush1.bf16.msra.mxu0 0
        %1383 = vmatprep.subr.bf16.mxu0 0
        %1384 = vmatpush1.bf16.msra.mxu0 0
        %1385 = vmatprep.subr.bf16.mxu0 0
        %1386 = vmatpush1.bf16.msra.mxu0 0
        %1387 = vmatprep.subr.bf16.mxu0 0
        %1388 = vmatpush1.bf16.msra.mxu0 0
        %1389 = vmatprep.subr.bf16.mxu0 0
        %1390 = vmatpush1.bf16.msra.mxu0 0
        %1391 = vmatprep.subr.bf16.mxu0 0
        %1392 = vmatpush1.bf16.msra.mxu0 0
        %1393 = vmatprep.subr.bf16.mxu0 0
        %1394 = vmatpush1.bf16.msra.mxu0 0
        %1395 = vmatprep.subr.bf16.mxu0 0
        %1396 = vmatpush1.bf16.msra.mxu0 0
        %1397 = vmatprep.subr.bf16.mxu0 0
        %1398 = vmatpush1.bf16.msra.mxu0 0
        %1399 = vmatprep.subr.bf16.mxu0 0
        %1400 = vmatpush1.bf16.msra.mxu0 0
        %1401 = vmatprep.subr.bf16.mxu0 0
        %1402 = vmatpush1.bf16.msra.mxu0 0
        %1403 = vmatprep.subr.bf16.mxu0 0
        %1404 = vmatpush1.bf16.msra.mxu0 0
        %1405 = vmatprep.subr.bf16.mxu0 0
        %1406 = vmatpush1.bf16.msra.mxu0 0
        %1407 = vmatprep.subr.bf16.mxu0 0
        %1408 = vmatpush1.bf16.msra.mxu0 0
        %1409 = vmatprep.mubr.bf16.mxu0 0
        %1410 = vmatmul.mubr.bf16.gmra.mrb[0].mxu0 %v1372
        %v1411 = vpop.f32.mrb[0].mxu0
        %v1412 = vadd.f32 0.0, %v1411
        %v1413 = vpop.f32.mrb[0].mxu0
        %v1414 = vpop.f32.mrb[0].mxu0
        %v1415 = vpop.f32.mrb[0].mxu0
        %1416 = vdwg.mxu0
        %1417 = vrot.lane.b32.xlu0 %v566, 40
        %v1418 = vpop.permute.xlu0 %1417
        %v1420 = vsel %vm569, %v1368, 0
        %v1423 = vsel %vm689, %v1418, 0
        %1425 = vmatprep.subr.bf16.mxu0 0
        %1426 = vmatpush1.bf16.msra.mxu0 %v1423
        %1427 = vmatprep.subr.bf16.mxu0 0
        %1428 = vmatpush1.bf16.msra.mxu0 0
        %1429 = vmatprep.subr.bf16.mxu0 0
        %1430 = vmatpush1.bf16.msra.mxu0 0
        %1431 = vmatprep.subr.bf16.mxu0 0
        %1432 = vmatpush1.bf16.msra.mxu0 0
        %1433 = vmatprep.subr.bf16.mxu0 0
        %1434 = vmatpush1.bf16.msra.mxu0 0
        %1435 = vmatprep.subr.bf16.mxu0 0
        %1436 = vmatpush1.bf16.msra.mxu0 0
        %1437 = vmatprep.subr.bf16.mxu0 0
        %1438 = vmatpush1.bf16.msra.mxu0 0
        %1439 = vmatprep.subr.bf16.mxu0 0
        %1440 = vmatpush1.bf16.msra.mxu0 0
        %1441 = vmatprep.subr.bf16.mxu0 0
        %1442 = vmatpush1.bf16.msra.mxu0 0
        %1443 = vmatprep.subr.bf16.mxu0 0
        %1444 = vmatpush1.bf16.msra.mxu0 0
        %1445 = vmatprep.subr.bf16.mxu0 0
        %1446 = vmatpush1.bf16.msra.mxu0 0
        %1447 = vmatprep.subr.bf16.mxu0 0
        %1448 = vmatpush1.bf16.msra.mxu0 0
        %1449 = vmatprep.subr.bf16.mxu0 0
        %1450 = vmatpush1.bf16.msra.mxu0 0
        %1451 = vmatprep.subr.bf16.mxu0 0
        %1452 = vmatpush1.bf16.msra.mxu0 0
        %1453 = vmatprep.subr.bf16.mxu0 0
        %1454 = vmatpush1.bf16.msra.mxu0 0
        %1455 = vmatprep.subr.bf16.mxu0 0
        %1456 = vmatpush1.bf16.msra.mxu0 0
        %1457 = vmatprep.mubr.bf16.mxu0 0
        %1458 = vmatmul.mubr.bf16.gmra.mrb[0].mxu0 %v1420
        %v1459 = vpop.f32.mrb[0].mxu0
        %v1460 = vadd.f32 0.0, %v1459
        %v1461 = vpop.f32.mrb[0].mxu0
        %v1462 = vpop.f32.mrb[0].mxu0
        %v1463 = vpop.f32.mrb[0].mxu0
        %1464 = vdwg.mxu0
        %v1465 = vrcp.pop %v1363
        %v1466 = vrcp.pop %v1366
        %v1467 = vmul.f32 %v1412, %v1465
        %v1468 = vmul.f32 %v1460, %v1466
        %1471 = vrot.lane.b32.xlu0 %v1467, 24
        %v1472 = vpop.permute.xlu0 %1471
        %1473 = vrot.lane.b32.xlu0 %v1468, 24
        %v1474 = vpop.permute.xlu0 %1473
        %vm1477 = vcmask 261312
        %1478 = vst.msk [vmem:[#allocation2] sm:$0xff] %vm1477, %v1472
        %1479 = vst.msk [vmem:[#allocation2 + $0x8] sm:$0xff] %vm1477, %v1474
        %v1480 = vld [vmem:[#allocation2] sm:$0xff]
        %v1481 = vld [vmem:[#allocation2 + $0x8] sm:$0xff]
        %v1482 = vpack.c.bf16 %v1481, %v1480
        %v1483 = vld [vmem:[%s5] sm:$0xf]
        %v1484 = vld [vmem:[%s5 + $0x4] sm:$0xf]
        %v1485 = vld [vmem:[%s5 + $0x8] sm:$0xf]
        %v1486 = vld [vmem:[%s5 + $0xc] sm:$0xf]
        %v1487 = vld [vmem:[%s6] sm:$0x1]
        %v1489 = vlaneseq
        %v1490 = vshrl.u32 %v1489, 7
        %v1491 = vsub.s32 0, %v1490
        %v1492 = vrot.slane %v1487, %v1491
        %v1498 = vunpack.c.l.b16 %v1483
        %v1499 = vunpack.c.l.b16 %v1484
        %v1500 = vunpack.c.l.b16 %v1485
        %v1501 = vunpack.c.l.b16 %v1486
        %v1502 = vpack.c.b16 %v1499, %v1498
        %v1503 = vpack.c.b16 %v1501, %v1500
        %v1507 = vsel %vm449, %v1482, 0
        %1509 = vmatprep.subr.bf16.mxu0 0
        %1510 = vmatpush1.bf16.msra.mxu0 %v1502
        %1511 = vmatprep.subr.bf16.mxu0 0
        %1512 = vmatpush1.bf16.msra.mxu0 %v1503
        %1513 = vmatprep.subr.bf16.mxu0 0
        %1514 = vmatpush1.bf16.msra.mxu0 0
        %1515 = vmatprep.subr.bf16.mxu0 0
        %1516 = vmatpush1.bf16.msra.mxu0 0
        %1517 = vmatprep.subr.bf16.mxu0 0
        %1518 = vmatpush1.bf16.msra.mxu0 0
        %1519 = vmatprep.subr.bf16.mxu0 0
        %1520 = vmatpush1.bf16.msra.mxu0 0
        %1521 = vmatprep.subr.bf16.mxu0 0
        %1522 = vmatpush1.bf16.msra.mxu0 0
        %1523 = vmatprep.subr.bf16.mxu0 0
        %1524 = vmatpush1.bf16.msra.mxu0 0
        %1525 = vmatprep.subr.bf16.mxu0 0
        %1526 = vmatpush1.bf16.msra.mxu0 0
        %1527 = vmatprep.subr.bf16.mxu0 0
        %1528 = vmatpush1.bf16.msra.mxu0 0
        %1529 = vmatprep.subr.bf16.mxu0 0
        %1530 = vmatpush1.bf16.msra.mxu0 0
        %1531 = vmatprep.subr.bf16.mxu0 0
        %1532 = vmatpush1.bf16.msra.mxu0 0
        %1533 = vmatprep.subr.bf16.mxu0 0
        %1534 = vmatpush1.bf16.msra.mxu0 0
        %1535 = vmatprep.subr.bf16.mxu0 0
        %1536 = vmatpush1.bf16.msra.mxu0 0
        %1537 = vmatprep.subr.bf16.mxu0 0
        %1538 = vmatpush1.bf16.msra.mxu0 0
        %1539 = vmatprep.subr.bf16.mxu0 0
        %1540 = vmatpush1.bf16.msra.mxu0 0
        %1541 = vmatprep.mubr.bf16.mxu0 0
        %1542 = vmatmul.mubr.bf16.gmra.mrb[0].mxu0 %v1507
        %v1543 = vpop.f32.mrb[0].mxu0
        %v1544 = vadd.f32 %v1492, %v1543
        %v1545 = vpop.f32.mrb[0].mxu0
        %v1546 = vpop.f32.mrb[0].mxu0
        %v1547 = vadd.f32 %v1492, %v1546
        %v1548 = vpop.f32.mrb[0].mxu0
        %1549 = vdwg.mxu0
        %v1550 = vadd.f32 %v445, %v1544
        %v1551 = vadd.f32 %v446, %v1547
        %v1552 = vld [vmem:[%s7] sm:$0x1]
        %v1553 = vld [vmem:[%s8] sm:$0x1]
        %v1554 = vsel %vm449, %v1550, 0.0
        %1555 = vadd.xlane.f32.xlu0 %v1554
        %v1556 = vpop.xlane.xlu0 %1555
        %v1557 = vsel %vm449, %v1551, 0.0
        %1558 = vadd.xlane.f32.xlu0 %v1557
        %v1559 = vpop.xlane.xlu0 %1558
        %v1560 = vmul.f32 %v1556, %v456
        %v1561 = vmul.f32 %v1559, %v456
        %v1562 = vsub.f32 %v1550, %v1560
        %v1563 = vsub.f32 %v1551, %v1561
        %v1564 = vmul.f32 %v1562, %v1562
        %v1565 = vmul.f32 %v1563, %v1563
        %v1566 = vsel %vm449, %v1564, 0.0
        %1567 = vadd.xlane.f32.xlu0 %v1566
        %v1568 = vpop.xlane.xlu0 %1567
        %v1569 = vsel %vm449, %v1565, 0.0
        %1570 = vadd.xlane.f32.xlu0 %v1569
        %v1571 = vpop.xlane.xlu0 %1570
        %v1572 = vmul.f32 %v1568, %v456
        %v1573 = vmul.f32 %v1571, %v456
        %v1574 = vadd.f32 %v1572, 1e-05
        %v1575 = vadd.f32 %v1573, 1e-05
        %v1576 = vrsqrt.pop %v1574
        %v1577 = vrsqrt.pop %v1575
        %v1578 = vmul.f32 %v1562, %v1576
        %v1579 = vmul.f32 %v1563, %v1577
        %v1581 = vlaneseq
        %v1582 = vshrl.u32 %v1581, 7
        %v1583 = vsub.s32 0, %v1582
        %v1584 = vrot.slane %v1552, %v1583
        %v1586 = vmul.f32 %v1578, %v1584
        %v1587 = vmul.f32 %v1579, %v1584
        %v1589 = vlaneseq
        %v1590 = vshrl.u32 %v1589, 7
        %v1591 = vsub.s32 0, %v1590
        %v1592 = vrot.slane %v1553, %v1591
        %v1594 = vadd.f32 %v1586, %v1592
        %v1595 = vadd.f32 %v1587, %v1592
        %v1596 = vpack.c.bf16 %v1595, %v1594
        %v1597 = vld [vmem:[%s9] sm:$0xf]
        %v1598 = vld [vmem:[%s9 + $0x4] sm:$0xf]
        %v1599 = vld [vmem:[%s9 + $0x8] sm:$0xf]
        %v1600 = vld [vmem:[%s9 + $0xc] sm:$0xf]
        %v1601 = vld [vmem:[%s10] sm:$0x1]
        %v1603 = vlaneseq
        %v1604 = vshrl.u32 %v1603, 7
        %v1605 = vsub.s32 0, %v1604
        %v1606 = vrot.slane %v1601, %v1605
        %v1612 = vunpack.c.l.b16 %v1597
        %v1613 = vunpack.c.l.b16 %v1598
        %v1614 = vunpack.c.l.b16 %v1599
        %v1615 = vunpack.c.l.b16 %v1600
        %v1616 = vpack.c.b16 %v1613, %v1612
        %v1617 = vpack.c.b16 %v1615, %v1614
        %v1621 = vsel %vm449, %v1596, 0
        %1623 = vmatprep.subr.bf16.mxu0 0
        %1624 = vmatpush1.bf16.msra.mxu0 %v1616
        %1625 = vmatprep.subr.bf16.mxu0 0
        %1626 = vmatpush1.bf16.msra.mxu0 %v1617
        %1627 = vmatprep.subr.bf16.mxu0 0
        %1628 = vmatpush1.bf16.msra.mxu0 0
        %1629 = vmatprep.subr.bf16.mxu0 0
        %1630 = vmatpush1.bf16.msra.mxu0 0
        %1631 = vmatprep.subr.bf16.mxu0 0
        %1632 = vmatpush1.bf16.msra.mxu0 0
        %1633 = vmatprep.subr.bf16.mxu0 0
        %1634 = vmatpush1.bf16.msra.mxu0 0
        %1635 = vmatprep.subr.bf16.mxu0 0
        %1636 = vmatpush1.bf16.msra.mxu0 0
        %1637 = vmatprep.subr.bf16.mxu0 0
        %1638 = vmatpush1.bf16.msra.mxu0 0
        %1639 = vmatprep.subr.bf16.mxu0 0
        %1640 = vmatpush1.bf16.msra.mxu0 0
        %1641 = vmatprep.subr.bf16.mxu0 0
        %1642 = vmatpush1.bf16.msra.mxu0 0
        %1643 = vmatprep.subr.bf16.mxu0 0
        %1644 = vmatpush1.bf16.msra.mxu0 0
        %1645 = vmatprep.subr.bf16.mxu0 0
        %1646 = vmatpush1.bf16.msra.mxu0 0
        %1647 = vmatprep.subr.bf16.mxu0 0
        %1648 = vmatpush1.bf16.msra.mxu0 0
        %1649 = vmatprep.subr.bf16.mxu0 0
        %1650 = vmatpush1.bf16.msra.mxu0 0
        %1651 = vmatprep.subr.bf16.mxu0 0
        %1652 = vmatpush1.bf16.msra.mxu0 0
        %1653 = vmatprep.subr.bf16.mxu0 0
        %1654 = vmatpush1.bf16.msra.mxu0 0
        %1655 = vmatprep.mubr.bf16.mxu0 0
        %1656 = vmatmul.mubr.bf16.gmra.mrb[0].mxu0 %v1621
        %v1657 = vpop.f32.mrb[0].mxu0
        %v1658 = vadd.f32 %v1606, %v1657
        %v1659 = vpop.f32.mrb[0].mxu0
        %v1660 = vpop.f32.mrb[0].mxu0
        %v1661 = vadd.f32 %v1606, %v1660
        %v1662 = vpop.f32.mrb[0].mxu0
        %1663 = vdwg.mxu0
        %v1664 = vpack.c.bf16 %v1661, %v1658
        %v1665 = vmul.bf16 %v1664, 1071267802
        %v1666 = vxor.u32 %v1665, 2147516416
        %v1668 = vmul.bf16 %v1666, 1069105081
        %v1669 = vpow.bf16.pop %v1668
        %v1670 = vadd.bf16 %v1669, 1065369472
        %v1671 = vrcp.bf16.pop %v1670
        %v1672 = vmul.bf16 1065369472, %v1671
        %v1673 = vmul.bf16 %v1664, %v1672
        %v1674 = vld [vmem:[%s11] sm:$0xf]
        %v1675 = vld [vmem:[%s11 + $0x4] sm:$0xf]
        %v1676 = vld [vmem:[%s11 + $0x8] sm:$0xf]
        %v1677 = vld [vmem:[%s11 + $0xc] sm:$0xf]
        %v1678 = vld [vmem:[%s11 + $0x10] sm:$0xf]
        %v1679 = vld [vmem:[%s11 + $0x14] sm:$0xf]
        %v1680 = vld [vmem:[%s11 + $0x18] sm:$0xf]
        %v1681 = vld [vmem:[%s11 + $0x1c] sm:$0xf]
        %v1682 = vld [vmem:[%s11 + $0x20] sm:$0xf]
        %v1683 = vld [vmem:[%s11 + $0x24] sm:$0xf]
        %v1684 = vld [vmem:[%s11 + $0x28] sm:$0xf]
        %v1685 = vld [vmem:[%s11 + $0x2c] sm:$0xf]
        %v1686 = vld [vmem:[%s11 + $0x30] sm:$0xf]
        %v1687 = vld [vmem:[%s11 + $0x34] sm:$0xf]
        %v1688 = vld [vmem:[%s11 + $0x38] sm:$0xf]
        %v1689 = vld [vmem:[%s11 + $0x3c] sm:$0xf]
        %v1690 = vld [vmem:[%s12] sm:$0x1]
        %v1692 = vlaneseq
        %v1693 = vshrl.u32 %v1692, 7
        %v1694 = vsub.s32 0, %v1693
        %v1695 = vrot.slane %v1690, %v1694
        %v1713 = vunpack.c.l.b16 %v1674
        %v1714 = vunpack.c.l.b16 %v1675
        %v1715 = vunpack.c.l.b16 %v1676
        %v1716 = vunpack.c.l.b16 %v1677
        %v1717 = vunpack.c.l.b16 %v1678
        %v1718 = vunpack.c.l.b16 %v1679
        %v1719 = vunpack.c.l.b16 %v1680
        %v1720 = vunpack.c.l.b16 %v1681
        %v1721 = vunpack.c.l.b16 %v1682
        %v1722 = vunpack.c.l.b16 %v1683
        %v1723 = vunpack.c.l.b16 %v1684
        %v1724 = vunpack.c.l.b16 %v1685
        %v1725 = vunpack.c.l.b16 %v1686
        %v1726 = vunpack.c.l.b16 %v1687
        %v1727 = vunpack.c.l.b16 %v1688
        %v1728 = vunpack.c.l.b16 %v1689
        %v1729 = vpack.c.b16 %v1714, %v1713
        %v1730 = vpack.c.b16 %v1716, %v1715
        %v1731 = vpack.c.b16 %v1718, %v1717
        %v1732 = vpack.c.b16 %v1720, %v1719
        %v1733 = vpack.c.b16 %v1722, %v1721
        %v1734 = vpack.c.b16 %v1724, %v1723
        %v1735 = vpack.c.b16 %v1726, %v1725
        %v1736 = vpack.c.b16 %v1728, %v1727
        %1745 = vmatprep.subr.bf16.mxu0 0
        %1746 = vmatpush1.bf16.msra.mxu0 %v1729
        %1747 = vmatprep.subr.bf16.mxu0 0
        %1748 = vmatpush1.bf16.msra.mxu0 %v1730
        %1749 = vmatprep.subr.bf16.mxu0 0
        %1750 = vmatpush1.bf16.msra.mxu0 %v1731
        %1751 = vmatprep.subr.bf16.mxu0 0
        %1752 = vmatpush1.bf16.msra.mxu0 %v1732
        %1753 = vmatprep.subr.bf16.mxu0 0
        %1754 = vmatpush1.bf16.msra.mxu0 %v1733
        %1755 = vmatprep.subr.bf16.mxu0 0
        %1756 = vmatpush1.bf16.msra.mxu0 %v1734
        %1757 = vmatprep.subr.bf16.mxu0 0
        %1758 = vmatpush1.bf16.msra.mxu0 %v1735
        %1759 = vmatprep.subr.bf16.mxu0 0
        %1760 = vmatpush1.bf16.msra.mxu0 %v1736
        %1761 = vmatprep.subr.bf16.mxu0 0
        %1762 = vmatpush1.bf16.msra.mxu0 0
        %1763 = vmatprep.subr.bf16.mxu0 0
        %1764 = vmatpush1.bf16.msra.mxu0 0
        %1765 = vmatprep.subr.bf16.mxu0 0
        %1766 = vmatpush1.bf16.msra.mxu0 0
        %1767 = vmatprep.subr.bf16.mxu0 0
        %1768 = vmatpush1.bf16.msra.mxu0 0
        %1769 = vmatprep.subr.bf16.mxu0 0
        %1770 = vmatpush1.bf16.msra.mxu0 0
        %1771 = vmatprep.subr.bf16.mxu0 0
        %1772 = vmatpush1.bf16.msra.mxu0 0
        %1773 = vmatprep.subr.bf16.mxu0 0
        %1774 = vmatpush1.bf16.msra.mxu0 0
        %1775 = vmatprep.subr.bf16.mxu0 0
        %1776 = vmatpush1.bf16.msra.mxu0 0
        %1777 = vmatprep.mubr.bf16.mxu0 0
        %1778 = vmatmul.mubr.bf16.gmra.mrb[0].mxu0 %v1673
        %v1779 = vpop.f32.mrb[0].mxu0
        %v1780 = vadd.f32 %v1695, %v1779
        %v1781 = vpop.f32.mrb[0].mxu0
        %v1782 = vpop.f32.mrb[0].mxu0
        %v1783 = vadd.f32 %v1695, %v1782
        %v1784 = vpop.f32.mrb[0].mxu0
        %1785 = vdwg.mxu0
        %v1786 = vadd.f32 %v1550, %v1780
        %v1787 = vadd.f32 %v1551, %v1783
        %1788 = vst.msk [vmem:[%s434] sm:$0xff] %vm449, %v1786
        %1789 = vst.msk [vmem:[%s434 + $0x8] sm:$0xff] %vm449, %v1787
        %s1790 = sand.u32 %s313, 1
        %s1791 = scalar_lea.sflag [#allocation4], %s1790
        %s1792 = sand.u32 %s313, 1
        %s1793 = smul.addr %s1792, 16
        %s1794 = scalar_lea.vmem [#allocation3], %s1793
        // Predicated region
        $region73: #{tpu_custom_call.1} parent=71 // pred_check
          %p1795 = pneg %p323
        $region74: #{tpu_custom_call.1} parent=71 // pred_check_branch
          %1797 = sbr.rel (%p1795) target = $region76
        $region75: #{tpu_custom_call.1} parent=71 // pred_region
          %s1798 = smul.u32 2, %s27
          %s1800 = ssub.s32 256, 256
          %1801 = vsyncadd %s1791, %s1800
          %s1802 = smul.addr %s1798, 128
          %s1803 = scalar_lea.hbm %s13, %s1802
          %s1804 = sshll.u32 %s1794, 4
          %s1805 = int_to_ptr.vmem [resolvable:$true] %s1804
          %1810 = dma.vmem_to_hbm [thread:$0]  %s1805, 256, %s1803, %s1791, 128, 128, 8
        $region76: #{tpu_custom_call.1} parent=71 // pred_fallthru
          _
      $region72: #{tpu_custom_call.1} parent=5 // pred_fallthru
        _
      %p1811 = scmp.le.s32.totalorder 2, %s22
      // Predicated region
      $region77: #{tpu_custom_call.1} parent=5 // pred_check
        %p1812 = pneg %p1811
      $region78: #{tpu_custom_call.1} parent=5 // pred_check_branch
        %1814 = sbr.rel (%p1812) target = $region80
      $region79: #{tpu_custom_call.1} parent=5 // pred_region
        %s1815 = ssub.s32 %s22, 2
        // Predicated region
        $region81: #{tpu_custom_call.1} parent=79 // pred_check
          %p1816 = pneg %p329
        $region82: #{tpu_custom_call.1} parent=79 // pred_check_branch
          %1818 = sbr.rel (%p1816) target = $region84
        $region83: #{tpu_custom_call.1} parent=79 // pred_region
          %s1819 = sand.u32 %s314, 1
          %s1820 = scalar_lea.sflag [#allocation4], %s1819
          %s1821 = sand.u32 %s314, 1
          %s1822 = smul.addr %s1821, 16
          %s1823 = scalar_lea.vmem [#allocation3], %s1822
          %1824 = dma.done %s1820, 256
        $region84: #{tpu_custom_call.1} parent=79 // pred_fallthru
          _
      $region80: #{tpu_custom_call.1} parent=5 // pred_fallthru
        _
    $region6: #{tpu_custom_call.1} parent=1 // loop_footer
      %s26 = sadd.s32 1, %s22
    $region7: #{tpu_custom_call.1} parent=1 // loop_footer_branch
      %21 = sbr.rel target = $region3
    $region8: #{tpu_custom_call.1} parent=1 // loop_exit
      _
    %1825 = vsyncpa [#allocation4], 1
    %s1826 = scalar_lea.sflag [#allocation4], 1
    %1827 = vsyncpa %s1826, 1

// kernel: tpu_custom_call.1
$region0: #{tpu_custom_call.1}
  #allocation0 [shape = 'u32[]', space=smem, size = 0x4, offset = 0x4, fixed_abs, tag = 'smem constant byte address 0x4 - core index']
  #allocation1 [shape = 'u32[144,128]{1,0:T(1,128)}', space=vmem, size = 0x12000, scoped, tag = 'internal scratch']
  #allocation2 [shape = 'f32[16,32]{1,0:T(8,128)}', space=vmem, size = 0x2000, scoped, tag = 'scratch operand']
  %s0 = inlined_call_operand.vmem [shape: f32[4,8,32], index: 0, kind: input, shape index: {}]
  %s1 = inlined_call_operand.vmem [shape: f32[1,32], index: 1, kind: input, shape index: {}]
  %s2 = inlined_call_operand.vmem [shape: f32[1,32], index: 2, kind: input, shape index: {}]
  %s3 = inlined_call_operand.vmem [shape: bf16[32,96], index: 3, kind: input, shape index: {}]
  %s4 = inlined_call_operand.vmem [shape: f32[1,96], index: 4, kind: input, shape index: {}]
  %s5 = inlined_call_operand.vmem [shape: bf16[32,32], index: 5, kind: input, shape index: {}]
  %s6 = inlined_call_operand.vmem [shape: f32[1,32], index: 6, kind: input, shape index: {}]
  %s7 = inlined_call_operand.vmem [shape: f32[1,32], index: 7, kind: input, shape index: {}]
  %s8 = inlined_call_operand.vmem [shape: f32[1,32], index: 8, kind: input, shape index: {}]
  %s9 = inlined_call_operand.vmem [shape: bf16[32,128], index: 9, kind: input, shape index: {}]
  %s10 = inlined_call_operand.vmem [shape: f32[1,128], index: 10, kind: input, shape index: {}]
  %s11 = inlined_call_operand.vmem [shape: bf16[128,32], index: 11, kind: input, shape index: {}]
  %s12 = inlined_call_operand.vmem [shape: f32[1,32], index: 12, kind: input, shape index: {}]
  %s13 = inlined_call_operand.hbm [shape: f32[4,8,32], index: 13, kind: output, shape index: {}]
  %s14 = sld [smem:[#allocation0]]
  $region85: #{tpu_custom_call.1} parent=0
    _
  %s16 = ssub.s32 1, %s14
  %s17 = scalar_select 0, %s16, %s14
  $region1: #{tpu_custom_call.1} parent=0
    #allocation3 [shape = 'u8[16384]{0}', space=vmem, size = 0x4000, scoped, tag = 'output window, operand 0']
    #allocation4 [shape = 's32[2]{0}', space=sflag, size = 0x8, scoped, tag = 'scoped memory for tpu_custom_call.1']
    %18 = vsyncpa [#allocation4], 0
    %s19 = scalar_lea.sflag [#allocation4], 1
    %20 = vsyncpa %s19, 0
    loop: start=0, step=1, limit=4
    $region2: #{tpu_custom_call.1} parent=1 // loop_pre_header
      _
    $region3: #{tpu_custom_call.1} parent=1 // loop_header
      %s22 = sphi 0, %s26
      %p23 = scmp.ge.s32.totalorder %s22, 4
      %s32 = sphi 0, %s34
      %s35 = sphi 0, %s32
      %s36 = sphi 0, %s35
      %s52 = sphi 0, %s36
      %s56 = sphi 0, %s56
      %s58 = sphi 0, %s56
      %s59 = sphi 0, %s58
      %s73 = sphi 0, %s59
      %s77 = sphi 0, %s77
      %s79 = sphi 0, %s77
      %s80 = sphi 0, %s79
      %s94 = sphi 0, %s80
      %s98 = sphi 0, %s98
      %s100 = sphi 0, %s98
      %s101 = sphi 0, %s100
      %s115 = sphi 0, %s101
      %s119 = sphi 0, %s119
      %s121 = sphi 0, %s119
      %s122 = sphi 0, %s121
      %s136 = sphi 0, %s122
      %s140 = sphi 0, %s140
      %s142 = sphi 0, %s140
      %s143 = sphi 0, %s142
      %s157 = sphi 0, %s143
      %s161 = sphi 0, %s161
      %s163 = sphi 0, %s161
      %s164 = sphi 0, %s163
      %s178 = sphi 0, %s164
      %s182 = sphi 0, %s182
      %s184 = sphi 0, %s182
      %s185 = sphi 0, %s184
      %s199 = sphi 0, %s185
      %s203 = sphi 0, %s203
      %s205 = sphi 0, %s203
      %s206 = sphi 0, %s205
      %s220 = sphi 0, %s206
      %s224 = sphi 0, %s224
      %s226 = sphi 0, %s224
      %s227 = sphi 0, %s226
      %s241 = sphi 0, %s227
      %s245 = sphi 0, %s245
      %s247 = sphi 0, %s245
      %s248 = sphi 0, %s247
      %s262 = sphi 0, %s248
      %s266 = sphi 0, %s266
      %s268 = sphi 0, %s266
      %s269 = sphi 0, %s268
      %s283 = sphi 0, %s269
      %s287 = sphi 0, %s287
      %s289 = sphi 0, %s287
      %s290 = sphi 0, %s289
      %s304 = sphi 0, %s290
      %s310 = sphi 0, %s312
      %s313 = sphi 0, %s310
      %s314 = sphi 0, %s313
      %s330 = sphi 0, %s314
    $region4: #{tpu_custom_call.1} parent=1 // loop_header_branch
      %25 = sbr.rel (%p23) target = $region8
    $region5: #{tpu_custom_call.1} parent=1 // loop_body
      %s27 = ssub.s32 %s22, 1
      %s28 = ssub.s32 %s22, 2
      %s29 = sadd.s32 %s22, 1
      %s30 = ssub.s32 %s22, %s29
      %p31 = scmp.eq.s32.totalorder %s30, 0
      %s33 = sadd.s32 %s32, 1
      %s34 = scalar_select %p31, %s32, %s33
      %p37 = pneg %p31
      %p38 = scmp.eq.s32.totalorder %s22, 1
      %p39 = por %p37, %p38
      %p40 = scmp.ne.s32.totalorder %s32, %s35
      %p41 = scmp.eq.s32.totalorder %s22, 0
      %p42 = por %p40, %p41
      %p43 = scmp.ne.s32.totalorder %s32, %s35
      %p44 = scmp.eq.s32.totalorder %s27, 1
      %p45 = por %p43, %p44
      %p46 = scmp.ne.s32.totalorder %s35, %s36
      %p47 = scmp.eq.s32.totalorder %s27, 0
      %p48 = por %p46, %p47
      %p49 = scmp.ne.s32.totalorder %s35, %s36
      %p50 = scmp.eq.s32.totalorder %s28, 1
      %p51 = por %p49, %p50
      %p53 = scmp.ne.s32.totalorder %s36, %s52
      %p54 = scmp.eq.s32.totalorder %s28, 0
      %p55 = por %p53, %p54
      %s57 = sadd.s32 %s56, 1
      %p60 = scmp.eq.s32.totalorder %s22, 1
      %p61 = scmp.ne.s32.totalorder %s56, %s58
      %p62 = scmp.eq.s32.totalorder %s22, 0
      %p63 = por %p61, %p62
      %p64 = scmp.ne.s32.totalorder %s56, %s58
      %p65 = scmp.eq.s32.totalorder %s27, 1
      %p66 = por %p64, %p65
      %p67 = scmp.ne.s32.totalorder %s58, %s59
      %p68 = scmp.eq.s32.totalorder %s27, 0
      %p69 = por %p67, %p68
      %p70 = scmp.ne.s32.totalorder %s58, %s59
      %p71 = scmp.eq.s32.totalorder %s28, 1
      %p72 = por %p70, %p71
      %p74 = scmp.ne.s32.totalorder %s59, %s73
      %p75 = scmp.eq.s32.totalorder %s28, 0
      %p76 = por %p74, %p75
      %s78 = sadd.s32 %s77, 1
      %p81 = scmp.eq.s32.totalorder %s22, 1
      %p82 = scmp.ne.s32.totalorder %s77, %s79
      %p83 = scmp.eq.s32.totalorder %s22, 0
      %p84 = por %p82, %p83
      %p85 = scmp.ne.s32.totalorder %s77, %s79
      %p86 = scmp.eq.s32.totalorder %s27, 1
      %p87 = por %p85, %p86
      %p88 = scmp.ne.s32.totalorder %s79, %s80
      %p89 = scmp.eq.s32.totalorder %s27, 0
      %p90 = por %p88, %p89
      %p91 = scmp.ne.s32.totalorder %s79, %s80
      %p92 = scmp.eq.s32.totalorder %s28, 1
      %p93 = por %p91, %p92
      %p95 = scmp.ne.s32.totalorder %s80, %s94
      %p96 = scmp.eq.s32.totalorder %s28, 0
      %p97 = por %p95, %p96
      %s99 = sadd.s32 %s98, 1
      %p102 = scmp.eq.s32.totalorder %s22, 1
      %p103 = scmp.ne.s32.totalorder %s98, %s100
      %p104 = scmp.eq.s32.totalorder %s22, 0
      %p105 = por %p103, %p104
      %p106 = scmp.ne.s32.totalorder %s98, %s100
      %p107 = scmp.eq.s32.totalorder %s27, 1
      %p108 = por %p106, %p107
      %p109 = scmp.ne.s32.totalorder %s100, %s101
      %p110 = scmp.eq.s32.totalorder %s27, 0
      %p111 = por %p109, %p110
      %p112 = scmp.ne.s32.totalorder %s100, %s101
      %p113 = scmp.eq.s32.totalorder %s28, 1
      %p114 = por %p112, %p113
      %p116 = scmp.ne.s32.totalorder %s101, %s115
      %p117 = scmp.eq.s32.totalorder %s28, 0
      %p118 = por %p116, %p117
      %s120 = sadd.s32 %s119, 1
      %p123 = scmp.eq.s32.totalorder %s22, 1
      %p124 = scmp.ne.s32.totalorder %s119, %s121
      %p125 = scmp.eq.s32.totalorder %s22, 0
      %p126 = por %p124, %p125
      %p127 = scmp.ne.s32.totalorder %s119, %s121
      %p128 = scmp.eq.s32.totalorder %s27, 1
      %p129 = por %p127, %p128
      %p130 = scmp.ne.s32.totalorder %s121, %s122
      %p131 = scmp.eq.s32.totalorder %s27, 0
      %p132 = por %p130, %p131
      %p133 = scmp.ne.s32.totalorder %s121, %s122
      %p134 = scmp.eq.s32.totalorder %s28, 1
      %p135 = por %p133, %p134
      %p137 = scmp.ne.s32.totalorder %s122, %s136
      %p138 = scmp.eq.s32.totalorder %s28, 0
      %p139 = por %p137, %p138
      %s141 = sadd.s32 %s140, 1
      %p144 = scmp.eq.s32.totalorder %s22, 1
      %p145 = scmp.ne.s32.totalorder %s140, %s142
      %p146 = scmp.eq.s32.totalorder %s22, 0
      %p147 = por %p145, %p146
      %p148 = scmp.ne.s32.totalorder %s140, %s142
      %p149 = scmp.eq.s32.totalorder %s27, 1
      %p150 = por %p148, %p149
      %p151 = scmp.ne.s32.totalorder %s142, %s143
      %p152 = scmp.eq.s32.totalorder %s27, 0
      %p153 = por %p151, %p152
      %p154 = scmp.ne.s32.totalorder %s142, %s143
      %p155 = scmp.eq.s32.totalorder %s28, 1
      %p156 = por %p154, %p155
      %p158 = scmp.ne.s32.totalorder %s143, %s157
      %p159 = scmp.eq.s32.totalorder %s28, 0
      %p160 = por %p158, %p159
      %s162 = sadd.s32 %s161, 1
      %p165 = scmp.eq.s32.totalorder %s22, 1
      %p166 = scmp.ne.s32.totalorder %s161, %s163
      %p167 = scmp.eq.s32.totalorder %s22, 0
      %p168 = por %p166, %p167
      %p169 = scmp.ne.s32.totalorder %s161, %s163
      %p170 = scmp.eq.s32.totalorder %s27, 1
      %p171 = por %p169, %p170
      %p172 = scmp.ne.s32.totalorder %s163, %s164
      %p173 = scmp.eq.s32.totalorder %s27, 0
      %p174 = por %p172, %p173
      %p175 = scmp.ne.s32.totalorder %s163, %s164
      %p176 = scmp.eq.s32.totalorder %s28, 1
      %p177 = por %p175, %p176
      %p179 = scmp.ne.s32.totalorder %s164, %s178
      %p180 = scmp.eq.s32.totalorder %s28, 0
      %p181 = por %p179, %p180
      %s183 = sadd.s32 %s182, 1
      %p186 = scmp.eq.s32.totalorder %s22, 1
      %p187 = scmp.ne.s32.totalorder %s182, %s184
      %p188 = scmp.eq.s32.totalorder %s22, 0
      %p189 = por %p187, %p188
      %p190 = scmp.ne.s32.totalorder %s182, %s184
      %p191 = scmp.eq.s32.totalorder %s27, 1
      %p192 = por %p190, %p191
      %p193 = scmp.ne.s32.totalorder %s184, %s185
      %p194 = scmp.eq.s32.totalorder %s27, 0
      %p195 = por %p193, %p194
      %p196 = scmp.ne.s32.totalorder %s184, %s185
      %p197 = scmp.eq.s32.totalorder %s28, 1
      %p198 = por %p196, %p197
      %p200 = scmp.ne.s32.totalorder %s185, %s199
      %p201 = scmp.eq.s32.totalorder %s28, 0
      %p202 = por %p200, %p201
      %s204 = sadd.s32 %s203, 1
      %p207 = scmp.eq.s32.totalorder %s22, 1
      %p208 = scmp.ne.s32.totalorder %s203, %s205
      %p209 = scmp.eq.s32.totalorder %s22, 0
      %p210 = por %p208, %p209
      %p211 = scmp.ne.s32.totalorder %s203, %s205
      %p212 = scmp.eq.s32.totalorder %s27, 1
      %p213 = por %p211, %p212
      %p214 = scmp.ne.s32.totalorder %s205, %s206
      %p215 = scmp.eq.s32.totalorder %s27, 0
      %p216 = por %p214, %p215
      %p217 = scmp.ne.s32.totalorder %s205, %s206
      %p218 = scmp.eq.s32.totalorder %s28, 1
      %p219 = por %p217, %p218
      %p221 = scmp.ne.s32.totalorder %s206, %s220
      %p222 = scmp.eq.s32.totalorder %s28, 0
      %p223 = por %p221, %p222
      %s225 = sadd.s32 %s224, 1
      %p228 = scmp.eq.s32.totalorder %s22, 1
      %p229 = scmp.ne.s32.totalorder %s224, %s226
      %p230 = scmp.eq.s32.totalorder %s22, 0
      %p231 = por %p229, %p230
      %p232 = scmp.ne.s32.totalorder %s224, %s226
      %p233 = scmp.eq.s32.totalorder %s27, 1
      %p234 = por %p232, %p233
      %p235 = scmp.ne.s32.totalorder %s226, %s227
      %p236 = scmp.eq.s32.totalorder %s27, 0
      %p237 = por %p235, %p236
      %p238 = scmp.ne.s32.totalorder %s226, %s227
      %p239 = scmp.eq.s32.totalorder %s28, 1
      %p240 = por %p238, %p239
      %p242 = scmp.ne.s32.totalorder %s227, %s241
      %p243 = scmp.eq.s32.totalorder %s28, 0
      %p244 = por %p242, %p243
      %s246 = sadd.s32 %s245, 1
      %p249 = scmp.eq.s32.totalorder %s22, 1
      %p250 = scmp.ne.s32.totalorder %s245, %s247
      %p251 = scmp.eq.s32.totalorder %s22, 0
      %p252 = por %p250, %p251
      %p253 = scmp.ne.s32.totalorder %s245, %s247
      %p254 = scmp.eq.s32.totalorder %s27, 1
      %p255 = por %p253, %p254
      %p256 = scmp.ne.s32.totalorder %s247, %s248
      %p257 = scmp.eq.s32.totalorder %s27, 0
      %p258 = por %p256, %p257
      %p259 = scmp.ne.s32.totalorder %s247, %s248
      %p260 = scmp.eq.s32.totalorder %s28, 1
      %p261 = por %p259, %p260
      %p263 = scmp.ne.s32.totalorder %s248, %s262
      %p264 = scmp.eq.s32.totalorder %s28, 0
      %p265 = por %p263, %p264
      %s267 = sadd.s32 %s266, 1
      %p270 = scmp.eq.s32.totalorder %s22, 1
      %p271 = scmp.ne.s32.totalorder %s266, %s268
      %p272 = scmp.eq.s32.totalorder %s22, 0
      %p273 = por %p271, %p272
      %p274 = scmp.ne.s32.totalorder %s266, %s268
      %p275 = scmp.eq.s32.totalorder %s27, 1
      %p276 = por %p274, %p275
      %p277 = scmp.ne.s32.totalorder %s268, %s269
      %p278 = scmp.eq.s32.totalorder %s27, 0
      %p279 = por %p277, %p278
      %p280 = scmp.ne.s32.totalorder %s268, %s269
      %p281 = scmp.eq.s32.totalorder %s28, 1
      %p282 = por %p280, %p281
      %p284 = scmp.ne.s32.totalorder %s269, %s283
      %p285 = scmp.eq.s32.totalorder %s28, 0
      %p286 = por %p284, %p285
      %s288 = sadd.s32 %s287, 1
      %p291 = scmp.eq.s32.totalorder %s22, 1
      %p292 = scmp.ne.s32.totalorder %s287, %s289
      %p293 = scmp.eq.s32.totalorder %s22, 0
      %p294 = por %p292, %p293
      %p295 = scmp.ne.s32.totalorder %s287, %s289
      %p296 = scmp.eq.s32.totalorder %s27, 1
      %p297 = por %p295, %p296
      %p298 = scmp.ne.s32.totalorder %s289, %s290
      %p299 = scmp.eq.s32.totalorder %s27, 0
      %p300 = por %p298, %p299
      %p301 = scmp.ne.s32.totalorder %s289, %s290
      %p302 = scmp.eq.s32.totalorder %s28, 1
      %p303 = por %p301, %p302
      %p305 = scmp.ne.s32.totalorder %s290, %s304
      %p306 = scmp.eq.s32.totalorder %s28, 0
      %p307 = por %p305, %p306
      %s308 = ssub.s32 %s22, %s29
      %p309 = scmp.eq.s32.totalorder %s308, 0
      %s311 = sadd.s32 %s310, 1
      %s312 = scalar_select %p309, %s310, %s311
      %p315 = pneg %p309
      %p316 = scmp.eq.s32.totalorder %s22, 1
      %p317 = por %p315, %p316
      %p318 = scmp.ne.s32.totalorder %s310, %s313
      %p319 = scmp.eq.s32.totalorder %s22, 0
      %p320 = por %p318, %p319
      %p321 = scmp.ne.s32.totalorder %s310, %s313
      %p322 = scmp.eq.s32.totalorder %s27, 1
      %p323 = por %p321, %p322
      %p324 = scmp.ne.s32.totalorder %s313, %s314
      %p325 = scmp.eq.s32.totalorder %s27, 0
      %p326 = por %p324, %p325
      %p327 = scmp.ne.s32.totalorder %s313, %s314
      %p328 = scmp.eq.s32.totalorder %s28, 1
      %p329 = por %p327, %p328
      %p331 = scmp.ne.s32.totalorder %s314, %s330
      %p332 = scmp.eq.s32.totalorder %s28, 0
      %p333 = por %p331, %p332
      %p334 = scmp.le.s32.totalorder 1, %s22
      %p335 = scmp.lt.s32.totalorder %s22, 3
      %p336 = pnand %p334, %p335
      %p337 = pneg %p336
      // Predicated region
      $region9: #{tpu_custom_call.1} parent=5 // pred_check
        _
      $region10: #{tpu_custom_call.1} parent=5 // pred_check_branch
        %339 = sbr.rel (%p336) target = $region12
      $region11: #{tpu_custom_call.1} parent=5 // pred_region
        %s340 = ssub.s32 %s22, 1
        // Predicated region
        $region13: #{tpu_custom_call.1} parent=11 // pred_check
          %p341 = pneg %p69
        $region14: #{tpu_custom_call.1} parent=11 // pred_check_branch
          %343 = sbr.rel (%p341) target = $region16
        $region15: #{tpu_custom_call.1} parent=11 // pred_region
          _
        $region16: #{tpu_custom_call.1} parent=11 // pred_fallthru
          _
        // Predicated region
        $region17: #{tpu_custom_call.1} parent=11 // pred_check
          %p344 = pneg %p90
        $region18: #{tpu_custom_call.1} parent=11 // pred_check_branch
          %346 = sbr.rel (%p344) target = $region20
        $region19: #{tpu_custom_call.1} parent=11 // pred_region
          _
        $region20: #{tpu_custom_call.1} parent=11 // pred_fallthru
          _
        // Predicated region
        $region21: #{tpu_custom_call.1} parent=11 // pred_check
          %p347 = pneg %p111
        $region22: #{tpu_custom_call.1} parent=11 // pred_check_branch
          %349 = sbr.rel (%p347) target = $region24
        $region23: #{tpu_custom_call.1} parent=11 // pred_region
          _
        $region24: #{tpu_custom_call.1} parent=11 // pred_fallthru
          _
        // Predicated region
        $region25: #{tpu_custom_call.1} parent=11 // pred_check
          %p350 = pneg %p132
        $region26: #{tpu_custom_call.1} parent=11 // pred_check_branch
          %352 = sbr.rel (%p350) target = $region28
        $region27: #{tpu_custom_call.1} parent=11 // pred_region
          _
        $region28: #{tpu_custom_call.1} parent=11 // pred_fallthru
          _
        // Predicated region
        $region29: #{tpu_custom_call.1} parent=11 // pred_check
          %p353 = pneg %p153
        $region30: #{tpu_custom_call.1} parent=11 // pred_check_branch
          %355 = sbr.rel (%p353) target = $region32
        $region31: #{tpu_custom_call.1} parent=11 // pred_region
          _
        $region32: #{tpu_custom_call.1} parent=11 // pred_fallthru
          _
        // Predicated region
        $region33: #{tpu_custom_call.1} parent=11 // pred_check
          %p356 = pneg %p174
        $region34: #{tpu_custom_call.1} parent=11 // pred_check_branch
          %358 = sbr.rel (%p356) target = $region36
        $region35: #{tpu_custom_call.1} parent=11 // pred_region
          _
        $region36: #{tpu_custom_call.1} parent=11 // pred_fallthru
          _
        // Predicated region
        $region37: #{tpu_custom_call.1} parent=11 // pred_check
          %p359 = pneg %p195
        $region38: #{tpu_custom_call.1} parent=11 // pred_check_branch
          %361 = sbr.rel (%p359) target = $region40
        $region39: #{tpu_custom_call.1} parent=11 // pred_region
          _
        $region40: #{tpu_custom_call.1} parent=11 // pred_fallthru
          _
        // Predicated region
        $region41: #{tpu_custom_call.1} parent=11 // pred_check
          %p362 = pneg %p216
        $region42: #{tpu_custom_call.1} parent=11 // pred_check_branch
          %364 = sbr.rel (%p362) target = $region44
        $region43: #{tpu_custom_call.1} parent=11 // pred_region
          _
        $region44: #{tpu_custom_call.1} parent=11 // pred_fallthru
          _
        // Predicated region
        $region45: #{tpu_custom_call.1} parent=11 // pred_check
          %p365 = pneg %p237
        $region46: #{tpu_custom_call.1} parent=11 // pred_check_branch
          %367 = sbr.rel (%p365) target = $region48
        $region47: #{tpu_custom_call.1} parent=11 // pred_region
          _
        $region48: #{tpu_custom_call.1} parent=11 // pred_fallthru
          _
        // Predicated region
        $region49: #{tpu_custom_call.1} parent=11 // pred_check
          %p368 = pneg %p258
        $region50: #{tpu_custom_call.1} parent=11 // pred_check_branch
          %370 = sbr.rel (%p368) target = $region52
        $region51: #{tpu_custom_call.1} parent=11 // pred_region
          _
        $region52: #{tpu_custom_call.1} parent=11 // pred_fallthru
          _
        // Predicated region
        $region53: #{tpu_custom_call.1} parent=11 // pred_check
          %p371 = pneg %p279
        $region54: #{tpu_custom_call.1} parent=11 // pred_check_branch
          %373 = sbr.rel (%p371) target = $region56
        $region55: #{tpu_custom_call.1} parent=11 // pred_region
          _
        $region56: #{tpu_custom_call.1} parent=11 // pred_fallthru
          _
        // Predicated region
        $region57: #{tpu_custom_call.1} parent=11 // pred_check
          %p374 = pneg %p300
        $region58: #{tpu_custom_call.1} parent=11 // pred_check_branch
          %376 = sbr.rel (%p374) target = $region60
        $region59: #{tpu_custom_call.1} parent=11 // pred_region
          _
        $region60: #{tpu_custom_call.1} parent=11 // pred_fallthru
          _
      $region12: #{tpu_custom_call.1} parent=5 // pred_fallthru
        _
      %p377 = scmp.lt.s32.totalorder %s22, 2
      // Predicated region
      $region61: #{tpu_custom_call.1} parent=5 // pred_check
        %p378 = pneg %p377
      $region62: #{tpu_custom_call.1} parent=5 // pred_check_branch
        %380 = sbr.rel (%p378) target = $region64
      $region63: #{tpu_custom_call.1} parent=5 // pred_region
        // Predicated region
        $region65: #{tpu_custom_call.1} parent=63 // pred_check
          %p381 = pneg %p42
        $region66: #{tpu_custom_call.1} parent=63 // pred_check_branch
          %383 = sbr.rel (%p381) target = $region68
        $region67: #{tpu_custom_call.1} parent=63 // pred_region
          %s384 = smul.u32 2, %s22
          %p385 = scmp.lt.s32.totalorder %s384, 3
          %s386 = scalar_select %p385, %s384, 3
          %s387 = smul.addr %s386, 8
          %s388 = scalar_lea.vmem %s0, %s387
          %s389 = smul.u32 2, %s22
        $region68: #{tpu_custom_call.1} parent=63 // pred_fallthru
          _
      $region64: #{tpu_custom_call.1} parent=5 // pred_fallthru
        _
      %p390 = scmp.le.s32.totalorder 1, %s22
      %p391 = scmp.lt.s32.totalorder %s22, 3
      %p392 = pnand %p390, %p391
      %p393 = pneg %p392
      // Predicated region
      $region69: #{tpu_custom_call.1} parent=5 // pred_check
        _
      $region70: #{tpu_custom_call.1} parent=5 // pred_check_branch
        %395 = sbr.rel (%p392) target = $region72
      $region71: #{tpu_custom_call.1} parent=5 // pred_region
        %s396 = ssub.s32 %s22, 1
        %s397 = smul.u32 2, %s27
        %p398 = scmp.lt.s32.totalorder %s397, 3
        %s399 = scalar_select %p398, %s397, 3
        %s400 = smul.addr %s399, 8
        %s401 = scalar_lea.vmem %s0, %s400
        %p402 = pneg %p48
        %p403 = pneg %p45
        %p404 = pneg %p69
        %p405 = pneg %p66
        %p406 = pneg %p90
        %p407 = pneg %p87
        %p408 = pneg %p111
        %p409 = pneg %p108
        %p410 = pneg %p132
        %p411 = pneg %p129
        %p412 = pneg %p153
        %p413 = pneg %p150
        %p414 = pneg %p174
        %p415 = pneg %p171
        %p416 = pneg %p195
        %p417 = pneg %p192
        %p418 = pneg %p216
        %p419 = pneg %p213
        %p420 = pneg %p237
        %p421 = pneg %p234
        %p422 = pneg %p258
        %p423 = pneg %p255
        %p424 = pneg %p279
        %p425 = pneg %p276
        %p426 = pneg %p300
        %p427 = pneg %p297
        %p428 = pneg %p326
        %p429 = pneg %p323
        %s430 = sand.u32 %s313, 1
        %s431 = scalar_lea.sflag [#allocation4], %s430
        %s432 = sand.u32 %s313, 1
        %s433 = smul.addr %s432, 16
        %s434 = scalar_lea.vmem [#allocation3], %s433
        %s435 = smul.u32 2, %s27
        %p436 = scmp.lt.s32.totalorder %s435, 3
        %s437 = scalar_select %p436, %s435, 3
        %s438 = smul.addr %s437, 8
        %s439 = scalar_lea.vmem %s0, %s438
        %s440 = smul.u32 2, %s27
        %s441 = smul.u32 2, %s27
        %v445 = vld [vmem:[%s439] sm:$0xff]
        %v446 = vld [vmem:[%s439 + $0x8] sm:$0xff]
        %v447 = vld [vmem:[%s1] sm:$0x1]
        %v448 = vld [vmem:[%s2] sm:$0x1]
        %vm449 = vcmask 261120
        %v450 = vsel %vm449, %v445, 0.0
        %451 = vadd.xlane.f32.xlu0 %v450
        %v452 = vpop.xlane.xlu0 %451
        %v453 = vsel %vm449, %v446, 0.0
        %454 = vadd.xlane.f32.xlu0 %v453
        %v455 = vpop.xlane.xlu0 %454
        %v456 = vrcp.pop 32.0
        %v457 = vmul.f32 %v452, %v456
        %v458 = vmul.f32 %v455, %v456
        %v459 = vsub.f32 %v445, %v457
        %v460 = vsub.f32 %v446, %v458
        %v461 = vmul.f32 %v459, %v459
        %v462 = vmul.f32 %v460, %v460
        %v463 = vsel %vm449, %v461, 0.0
        %464 = vadd.xlane.f32.xlu0 %v463
        %v465 = vpop.xlane.xlu0 %464
        %v466 = vsel %vm449, %v462, 0.0
        %467 = vadd.xlane.f32.xlu0 %v466
        %v468 = vpop.xlane.xlu0 %467
        %v469 = vmul.f32 %v465, %v456
        %v470 = vmul.f32 %v468, %v456
        %v471 = vadd.f32 %v469, 1e-05
        %v472 = vadd.f32 %v470, 1e-05
        %v473 = vrsqrt.pop %v471
        %v474 = vrsqrt.pop %v472
        %v475 = vmul.f32 %v459, %v473
        %v476 = vmul.f32 %v460, %v474
        %v478 = vlaneseq
        %v479 = vshrl.u32 %v478, 7
        %v480 = vsub.s32 0, %v479
        %v481 = vrot.slane %v447, %v480
        %v483 = vmul.f32 %v475, %v481
        %v484 = vmul.f32 %v476, %v481
        %v486 = vlaneseq
        %v487 = vshrl.u32 %v486, 7
        %v488 = vsub.s32 0, %v487
        %v489 = vrot.slane %v448, %v488
        %v491 = vadd.f32 %v483, %v489
        %v492 = vadd.f32 %v484, %v489
        %v493 = vpack.c.bf16 %v492, %v491
        %v494 = vld [vmem:[%s3] sm:$0xf]
        %v495 = vld [vmem:[%s3 + $0x4] sm:$0xf]
        %v496 = vld [vmem:[%s3 + $0x8] sm:$0xf]
        %v497 = vld [vmem:[%s3 + $0xc] sm:$0xf]
        %v498 = vld [vmem:[%s4] sm:$0x1]
        %v500 = vlaneseq
        %v501 = vshrl.u32 %v500, 7
        %v502 = vsub.s32 0, %v501
        %v503 = vrot.slane %v498, %v502
        %v509 = vunpack.c.l.b16 %v494
        %v510 = vunpack.c.l.b16 %v495
        %v511 = vunpack.c.l.b16 %v496
        %v512 = vunpack.c.l.b16 %v497
        %v513 = vpack.c.b16 %v510, %v509
        %v514 = vpack.c.b16 %v512, %v511
        %v518 = vsel %vm449, %v493, 0
        %520 = vmatprep.subr.bf16.mxu0 0
        %521 = vmatpush1.bf16.msra.mxu0 %v513
        %522 = vmatprep.subr.bf16.mxu0 0
        %523 = vmatpush1.bf16.msra.mxu0 %v514
        %524 = vmatprep.subr.bf16.mxu0 0
        %525 = vmatpush1.bf16.msra.mxu0 0
        %526 = vmatprep.subr.bf16.mxu0 0
        %527 = vmatpush1.bf16.msra.mxu0 0
        %528 = vmatprep.subr.bf16.mxu0 0
        %529 = vmatpush1.bf16.msra.mxu0 0
        %530 = vmatprep.subr.bf16.mxu0 0
        %531 = vmatpush1.bf16.msra.mxu0 0
        %532 = vmatprep.subr.bf16.mxu0 0
        %533 = vmatpush1.bf16.msra.mxu0 0
        %534 = vmatprep.subr.bf16.mxu0 0
        %535 = vmatpush1.bf16.msra.mxu0 0
        %536 = vmatprep.subr.bf16.mxu0 0
        %537 = vmatpush1.bf16.msra.mxu0 0
        %538 = vmatprep.subr.bf16.mxu0 0
        %539 = vmatpush1.bf16.msra.mxu0 0
        %540 = vmatprep.subr.bf16.mxu0 0
        %541 = vmatpush1.bf16.msra.mxu0 0
        %542 = vmatprep.subr.bf16.mxu0 0
        %543 = vmatpush1.bf16.msra.mxu0 0
        %544 = vmatprep.subr.bf16.mxu0 0
        %545 = vmatpush1.bf16.msra.mxu0 0
        %546 = vmatprep.subr.bf16.mxu0 0
        %547 = vmatpush1.bf16.msra.mxu0 0
        %548 = vmatprep.subr.bf16.mxu0 0
        %549 = vmatpush1.bf16.msra.mxu0 0
        %550 = vmatprep.subr.bf16.mxu0 0
        %551 = vmatpush1.bf16.msra.mxu0 0
        %552 = vmatprep.mubr.bf16.mxu0 0
        %553 = vmatmul.mubr.bf16.gmra.mrb[0].mxu0 %v518
        %v554 = vpop.f32.mrb[0].mxu0
        %v555 = vadd.f32 %v503, %v554
        %v556 = vpop.f32.mrb[0].mxu0
        %v557 = vpop.f32.mrb[0].mxu0
        %v558 = vadd.f32 %v503, %v557
        %v559 = vpop.f32.mrb[0].mxu0
        %560 = vdwg.mxu0
        %v561 = vpack.c.bf16 %v558, %v555
        %v563 = vunpack.c.l.b16 %v561
        %v564 = vunpack.c.h.b16 %v561
        %v565 = vpack.c.b16 %v563, %v563
        %v566 = vpack.c.b16 %v564, %v564
        %567 = vrot.lane.b32.xlu0 %v565, 96
        %v568 = vpop.permute.xlu0 %567
        %vm569 = vcmask 64512
        %v571 = vsel %vm569, %v565, 0
        %v574 = vsel %vm569, %v568, 0
        %576 = vmatprep.subr.bf16.mxu0 0
        %577 = vmatpush1.bf16.xpose.msra.mxu0 %v574
        %578 = vmatprep.subr.bf16.mxu0 0
        %579 = vmatpush1.bf16.xpose.msra.mxu0 0
        %580 = vmatprep.subr.bf16.mxu0 0
        %581 = vmatpush1.bf16.xpose.msra.mxu0 0
        %582 = vmatprep.subr.bf16.mxu0 0
        %583 = vmatpush1.bf16.xpose.msra.mxu0 0
        %584 = vmatprep.subr.bf16.mxu0 0
        %585 = vmatpush1.bf16.xpose.msra.mxu0 0
        %586 = vmatprep.subr.bf16.mxu0 0
        %587 = vmatpush1.bf16.xpose.msra.mxu0 0
        %588 = vmatprep.subr.bf16.mxu0 0
        %589 = vmatpush1.bf16.xpose.msra.mxu0 0
        %590 = vmatprep.subr.bf16.mxu0 0
        %591 = vmatpush1.bf16.xpose.msra.mxu0 0
        %592 = vmatprep.subr.bf16.mxu0 0
        %593 = vmatpush1.bf16.xpose.msra.mxu0 0
        %594 = vmatprep.subr.bf16.mxu0 0
        %595 = vmatpush1.bf16.xpose.msra.mxu0 0
        %596 = vmatprep.subr.bf16.mxu0 0
        %597 = vmatpush1.bf16.xpose.msra.mxu0 0
        %598 = vmatprep.subr.bf16.mxu0 0
        %599 = vmatpush1.bf16.xpose.msra.mxu0 0
        %600 = vmatprep.subr.bf16.mxu0 0
        %601 = vmatpush1.bf16.xpose.msra.mxu0 0
        %602 = vmatprep.subr.bf16.mxu0 0
        %603 = vmatpush1.bf16.xpose.msra.mxu0 0
        %604 = vmatprep.subr.bf16.mxu0 0
        %605 = vmatpush1.bf16.xpose.msra.mxu0 0
        %606 = vmatprep.subr.bf16.mxu0 0
        %607 = vmatpush1.bf16.xpose.msra.mxu0 0
        %608 = vmatprep.mubr.bf16.mxu0 0
        %609 = vmatmul.mubr.bf16.gmra.mrb[0].mxu0 %v571
        %v610 = vpop.f32.mrb[0].mxu0
        %v611 = vadd.f32 0.0, %v610
        %v612 = vpop.f32.mrb[0].mxu0
        %v613 = vpop.f32.mrb[0].mxu0
        %v614 = vpop.f32.mrb[0].mxu0
        %615 = vdwg.mxu0
        %616 = vrot.lane.b32.xlu0 %v566, 96
        %v617 = vpop.permute.xlu0 %616
        %v619 = vsel %vm569, %v566, 0
        %v622 = vsel %vm569, %v617, 0
        %624 = vmatprep.subr.bf16.mxu0 0
        %625 = vmatpush1.bf16.xpose.msra.mxu0 %v622
        %626 = vmatprep.subr.bf16.mxu0 0
        %627 = vmatpush1.bf16.xpose.msra.mxu0 0
        %628 = vmatprep.subr.bf16.mxu0 0
        %629 = vmatpush1.bf16.xpose.msra.mxu0 0
        %630 = vmatprep.subr.bf16.mxu0 0
        %631 = vmatpush1.bf16.xpose.msra.mxu0 0
        %632 = vmatprep.subr.bf16.mxu0 0
        %633 = vmatpush1.bf16.xpose.msra.mxu0 0
        %634 = vmatprep.subr.bf16.mxu0 0
        %635 = vmatpush1.bf16.xpose.msra.mxu0 0
        %636 = vmatprep.subr.bf16.mxu0 0
        %637 = vmatpush1.bf16.xpose.msra.mxu0 0
        %638 = vmatprep.subr.bf16.mxu0 0
        %639 = vmatpush1.bf16.xpose.msra.mxu0 0
        %640 = vmatprep.subr.bf16.mxu0 0
        %641 = vmatpush1.bf16.xpose.msra.mxu0 0
        %642 = vmatprep.subr.bf16.mxu0 0
        %643 = vmatpush1.bf16.xpose.msra.mxu0 0
        %644 = vmatprep.subr.bf16.mxu0 0
        %645 = vmatpush1.bf16.xpose.msra.mxu0 0
        %646 = vmatprep.subr.bf16.mxu0 0
        %647 = vmatpush1.bf16.xpose.msra.mxu0 0
        %648 = vmatprep.subr.bf16.mxu0 0
        %649 = vmatpush1.bf16.xpose.msra.mxu0 0
        %650 = vmatprep.subr.bf16.mxu0 0
        %651 = vmatpush1.bf16.xpose.msra.mxu0 0
        %652 = vmatprep.subr.bf16.mxu0 0
        %653 = vmatpush1.bf16.xpose.msra.mxu0 0
        %654 = vmatprep.subr.bf16.mxu0 0
        %655 = vmatpush1.bf16.xpose.msra.mxu0 0
        %656 = vmatprep.mubr.bf16.mxu0 0
        %657 = vmatmul.mubr.bf16.gmra.mrb[0].mxu0 %v619
        %v658 = vpop.f32.mrb[0].mxu0
        %v659 = vadd.f32 0.0, %v658
        %v660 = vpop.f32.mrb[0].mxu0
        %v661 = vpop.f32.mrb[0].mxu0
        %v662 = vpop.f32.mrb[0].mxu0
        %663 = vdwg.mxu0
        %v664 = vsel %vm569, %v611, -inf
        %665 = vmax.xlane.f32.xlu0 %v664
        %v666 = vpop.xlane.xlu0 %665
        %v667 = vsel %vm569, %v659, -inf
        %668 = vmax.xlane.f32.xlu0 %v667
        %v669 = vpop.xlane.xlu0 %668
        %v670 = vsub.f32 %v611, %v666
        %v671 = vsub.f32 %v659, %v669
        %v672 = vmul.f32 %v670, 1.442695
        %v673 = vpow.pop %v672
        %v674 = vmul.f32 %v671, 1.442695
        %v675 = vpow.pop %v674
        %v676 = vsel %vm569, %v673, 0.0
        %677 = vadd.xlane.f32.xlu0 %v676
        %v678 = vpop.xlane.xlu0 %677
        %v679 = vsel %vm569, %v675, 0.0
        %680 = vadd.xlane.f32.xlu0 %v679
        %v681 = vpop.xlane.xlu0 %680
        %v682 = vpack.c.bf16 %v673, %v673
        %v683 = vpack.c.bf16 %v675, %v675
        %684 = vrot.lane.b32.xlu0 %v565, 64
        %v685 = vpop.permute.xlu0 %684
        %v687 = vsel %vm569, %v682, 0
        %vm689 = vcmask 1043456
        %v691 = vsel %vm689, %v685, 0
        %693 = vmatprep.subr.bf16.mxu0 0
        %694 = vmatpush1.bf16.msra.mxu0 %v691
        %695 = vmatprep.subr.bf16.mxu0 0
        %696 = vmatpush1.bf16.msra.mxu0 0
        %697 = vmatprep.subr.bf16.mxu0 0
        %698 = vmatpush1.bf16.msra.mxu0 0
        %699 = vmatprep.subr.bf16.mxu0 0
        %700 = vmatpush1.bf16.msra.mxu0 0
        %701 = vmatprep.subr.bf16.mxu0 0
        %702 = vmatpush1.bf16.msra.mxu0 0
        %703 = vmatprep.subr.bf16.mxu0 0
        %704 = vmatpush1.bf16.msra.mxu0 0
        %705 = vmatprep.subr.bf16.mxu0 0
        %706 = vmatpush1.bf16.msra.mxu0 0
        %707 = vmatprep.subr.bf16.mxu0 0
        %708 = vmatpush1.bf16.msra.mxu0 0
        %709 = vmatprep.subr.bf16.mxu0 0
        %710 = vmatpush1.bf16.msra.mxu0 0
        %711 = vmatprep.subr.bf16.mxu0 0
        %712 = vmatpush1.bf16.msra.mxu0 0
        %713 = vmatprep.subr.bf16.mxu0 0
        %714 = vmatpush1.bf16.msra.mxu0 0
        %715 = vmatprep.subr.bf16.mxu0 0
        %716 = vmatpush1.bf16.msra.mxu0 0
        %717 = vmatprep.subr.bf16.mxu0 0
        %718 = vmatpush1.bf16.msra.mxu0 0
        %719 = vmatprep.subr.bf16.mxu0 0
        %720 = vmatpush1.bf16.msra.mxu0 0
        %721 = vmatprep.subr.bf16.mxu0 0
        %722 = vmatpush1.bf16.msra.mxu0 0
        %723 = vmatprep.subr.bf16.mxu0 0
        %724 = vmatpush1.bf16.msra.mxu0 0
        %725 = vmatprep.mubr.bf16.mxu0 0
        %726 = vmatmul.mubr.bf16.gmra.mrb[0].mxu0 %v687
        %v727 = vpop.f32.mrb[0].mxu0
        %v728 = vadd.f32 0.0, %v727
        %v729 = vpop.f32.mrb[0].mxu0
        %v730 = vpop.f32.mrb[0].mxu0
        %v731 = vpop.f32.mrb[0].mxu0
        %732 = vdwg.mxu0
        %733 = vrot.lane.b32.xlu0 %v566, 64
        %v734 = vpop.permute.xlu0 %733
        %v736 = vsel %vm569, %v683, 0
        %v739 = vsel %vm689, %v734, 0
        %741 = vmatprep.subr.bf16.mxu0 0
        %742 = vmatpush1.bf16.msra.mxu0 %v739
        %743 = vmatprep.subr.bf16.mxu0 0
        %744 = vmatpush1.bf16.msra.mxu0 0
        %745 = vmatprep.subr.bf16.mxu0 0
        %746 = vmatpush1.bf16.msra.mxu0 0
        %747 = vmatprep.subr.bf16.mxu0 0
        %748 = vmatpush1.bf16.msra.mxu0 0
        %749 = vmatprep.subr.bf16.mxu0 0
        %750 = vmatpush1.bf16.msra.mxu0 0
        %751 = vmatprep.subr.bf16.mxu0 0
        %752 = vmatpush1.bf16.msra.mxu0 0
        %753 = vmatprep.subr.bf16.mxu0 0
        %754 = vmatpush1.bf16.msra.mxu0 0
        %755 = vmatprep.subr.bf16.mxu0 0
        %756 = vmatpush1.bf16.msra.mxu0 0
        %757 = vmatprep.subr.bf16.mxu0 0
        %758 = vmatpush1.bf16.msra.mxu0 0
        %759 = vmatprep.subr.bf16.mxu0 0
        %760 = vmatpush1.bf16.msra.mxu0 0
        %761 = vmatprep.subr.bf16.mxu0 0
        %762 = vmatpush1.bf16.msra.mxu0 0
        %763 = vmatprep.subr.bf16.mxu0 0
        %764 = vmatpush1.bf16.msra.mxu0 0
        %765 = vmatprep.subr.bf16.mxu0 0
        %766 = vmatpush1.bf16.msra.mxu0 0
        %767 = vmatprep.subr.bf16.mxu0 0
        %768 = vmatpush1.bf16.msra.mxu0 0
        %769 = vmatprep.subr.bf16.mxu0 0
        %770 = vmatpush1.bf16.msra.mxu0 0
        %771 = vmatprep.subr.bf16.mxu0 0
        %772 = vmatpush1.bf16.msra.mxu0 0
        %773 = vmatprep.mubr.bf16.mxu0 0
        %774 = vmatmul.mubr.bf16.gmra.mrb[0].mxu0 %v736
        %v775 = vpop.f32.mrb[0].mxu0
        %v776 = vadd.f32 0.0, %v775
        %v777 = vpop.f32.mrb[0].mxu0
        %v778 = vpop.f32.mrb[0].mxu0
        %v779 = vpop.f32.mrb[0].mxu0
        %780 = vdwg.mxu0
        %v781 = vrcp.pop %v678
        %v782 = vrcp.pop %v681
        %v783 = vmul.f32 %v728, %v781
        %v784 = vmul.f32 %v776, %v782
        %785 = vst.msk [vmem:[#allocation2] sm:$0xff] %vm569, %v783
        %786 = vst.msk [vmem:[#allocation2 + $0x8] sm:$0xff] %vm569, %v784
        %787 = vrot.lane.b32.xlu0 %v565, 120
        %v788 = vpop.permute.xlu0 %787
        %789 = vrot.lane.b32.xlu0 %v565, 88
        %v790 = vpop.permute.xlu0 %789
        %v792 = vsel %vm569, %v788, 0
        %v795 = vsel %vm569, %v790, 0
        %797 = vmatprep.subr.bf16.mxu0 0
        %798 = vmatpush1.bf16.xpose.msra.mxu0 %v795
        %799 = vmatprep.subr.bf16.mxu0 0
        %800 = vmatpush1.bf16.xpose.msra.mxu0 0
        %801 = vmatprep.subr.bf16.mxu0 0
        %802 = vmatpush1.bf16.xpose.msra.mxu0 0
        %803 = vmatprep.subr.bf16.mxu0 0
        %804 = vmatpush1.bf16.xpose.msra.mxu0 0
        %805 = vmatprep.subr.bf16.mxu0 0
        %806 = vmatpush1.bf16.xpose.msra.mxu0 0
        %807 = vmatprep.subr.bf16.mxu0 0
        %808 = vmatpush1.bf16.xpose.msra.mxu0 0
        %809 = vmatprep.subr.bf16.mxu0 0
        %810 = vmatpush1.bf16.xpose.msra.mxu0 0
        %811 = vmatprep.subr.bf16.mxu0 0
        %812 = vmatpush1.bf16.xpose.msra.mxu0 0
        %813 = vmatprep.subr.bf16.mxu0 0
        %814 = vmatpush1.bf16.xpose.msra.mxu0 0
        %815 = vmatprep.subr.bf16.mxu0 0
        %816 = vmatpush1.bf16.xpose.msra.mxu0 0
        %817 = vmatprep.subr.bf16.mxu0 0
        %818 = vmatpush1.bf16.xpose.msra.mxu0 0
        %819 = vmatprep.subr.bf16.mxu0 0
        %820 = vmatpush1.bf16.xpose.msra.mxu0 0
        %821 = vmatprep.subr.bf16.mxu0 0
        %822 = vmatpush1.bf16.xpose.msra.mxu0 0
        %823 = vmatprep.subr.bf16.mxu0 0
        %824 = vmatpush1.bf16.xpose.msra.mxu0 0
        %825 = vmatprep.subr.bf16.mxu0 0
        %826 = vmatpush1.bf16.xpose.msra.mxu0 0
        %827 = vmatprep.subr.bf16.mxu0 0
        %828 = vmatpush1.bf16.xpose.msra.mxu0 0
        %829 = vmatprep.mubr.bf16.mxu0 0
        %830 = vmatmul.mubr.bf16.gmra.mrb[0].mxu0 %v792
        %v831 = vpop.f32.mrb[0].mxu0
        %v832 = vadd.f32 0.0, %v831
        %v833 = vpop.f32.mrb[0].mxu0
        %v834 = vpop.f32.mrb[0].mxu0
        %v835 = vpop.f32.mrb[0].mxu0
        %836 = vdwg.mxu0
        %837 = vrot.lane.b32.xlu0 %v566, 120
        %v838 = vpop.permute.xlu0 %837
        %839 = vrot.lane.b32.xlu0 %v566, 88
        %v840 = vpop.permute.xlu0 %839
        %v842 = vsel %vm569, %v838, 0
        %v845 = vsel %vm569, %v840, 0
        %847 = vmatprep.subr.bf16.mxu0 0
        %848 = vmatpush1.bf16.xpose.msra.mxu0 %v845
        %849 = vmatprep.subr.bf16.mxu0 0
        %850 = vmatpush1.bf16.xpose.msra.mxu0 0
        %851 = vmatprep.subr.bf16.mxu0 0
        %852 = vmatpush1.bf16.xpose.msra.mxu0 0
        %853 = vmatprep.subr.bf16.mxu0 0
        %854 = vmatpush1.bf16.xpose.msra.mxu0 0
        %855 = vmatprep.subr.bf16.mxu0 0
        %856 = vmatpush1.bf16.xpose.msra.mxu0 0
        %857 = vmatprep.subr.bf16.mxu0 0
        %858 = vmatpush1.bf16.xpose.msra.mxu0 0
        %859 = vmatprep.subr.bf16.mxu0 0
        %860 = vmatpush1.bf16.xpose.msra.mxu0 0
        %861 = vmatprep.subr.bf16.mxu0 0
        %862 = vmatpush1.bf16.xpose.msra.mxu0 0
        %863 = vmatprep.subr.bf16.mxu0 0
        %864 = vmatpush1.bf16.xpose.msra.mxu0 0
        %865 = vmatprep.subr.bf16.mxu0 0
        %866 = vmatpush1.bf16.xpose.msra.mxu0 0
        %867 = vmatprep.subr.bf16.mxu0 0
        %868 = vmatpush1.bf16.xpose.msra.mxu0 0
        %869 = vmatprep.subr.bf16.mxu0 0
        %870 = vmatpush1.bf16.xpose.msra.mxu0 0
        %871 = vmatprep.subr.bf16.mxu0 0
        %872 = vmatpush1.bf16.xpose.msra.mxu0 0
        %873 = vmatprep.subr.bf16.mxu0 0
        %874 = vmatpush1.bf16.xpose.msra.mxu0 0
        %875 = vmatprep.subr.bf16.mxu0 0
        %876 = vmatpush1.bf16.xpose.msra.mxu0 0
        %877 = vmatprep.subr.bf16.mxu0 0
        %878 = vmatpush1.bf16.xpose.msra.mxu0 0
        %879 = vmatprep.mubr.bf16.mxu0 0
        %880 = vmatmul.mubr.bf16.gmra.mrb[0].mxu0 %v842
        %v881 = vpop.f32.mrb[0].mxu0
        %v882 = vadd.f32 0.0, %v881
        %v883 = vpop.f32.mrb[0].mxu0
        %v884 = vpop.f32.mrb[0].mxu0
        %v885 = vpop.f32.mrb[0].mxu0
        %886 = vdwg.mxu0
        %v887 = vsel %vm569, %v832, -inf
        %888 = vmax.xlane.f32.xlu0 %v887
        %v889 = vpop.xlane.xlu0 %888
        %v890 = vsel %vm569, %v882, -inf
        %891 = vmax.xlane.f32.xlu0 %v890
        %v892 = vpop.xlane.xlu0 %891
        %v893 = vsub.f32 %v832, %v889
        %v894 = vsub.f32 %v882, %v892
        %v895 = vmul.f32 %v893, 1.442695
        %v896 = vpow.pop %v895
        %v897 = vmul.f32 %v894, 1.442695
        %v898 = vpow.pop %v897
        %v899 = vsel %vm569, %v896, 0.0
        %900 = vadd.xlane.f32.xlu0 %v899
        %v901 = vpop.xlane.xlu0 %900
        %v902 = vsel %vm569, %v898, 0.0
        %903 = vadd.xlane.f32.xlu0 %v902
        %v904 = vpop.xlane.xlu0 %903
        %v905 = vpack.c.bf16 %v896, %v896
        %v906 = vpack.c.bf16 %v898, %v898
        %907 = vrot.lane.b32.xlu0 %v565, 56
        %v908 = vpop.permute.xlu0 %907
        %v910 = vsel %vm569, %v905, 0
        %v913 = vsel %vm689, %v908, 0
        %915 = vmatprep.subr.bf16.mxu0 0
        %916 = vmatpush1.bf16.msra.mxu0 %v913
        %917 = vmatprep.subr.bf16.mxu0 0
        %918 = vmatpush1.bf16.msra.mxu0 0
        %919 = vmatprep.subr.bf16.mxu0 0
        %920 = vmatpush1.bf16.msra.mxu0 0
        %921 = vmatprep.subr.bf16.mxu0 0
        %922 = vmatpush1.bf16.msra.mxu0 0
        %923 = vmatprep.subr.bf16.mxu0 0
        %924 = vmatpush1.bf16.msra.mxu0 0
        %925 = vmatprep.subr.bf16.mxu0 0
        %926 = vmatpush1.bf16.msra.mxu0 0
        %927 = vmatprep.subr.bf16.mxu0 0
        %928 = vmatpush1.bf16.msra.mxu0 0
        %929 = vmatprep.subr.bf16.mxu0 0
        %930 = vmatpush1.bf16.msra.mxu0 0
        %931 = vmatprep.subr.bf16.mxu0 0
        %932 = vmatpush1.bf16.msra.mxu0 0
        %933 = vmatprep.subr.bf16.mxu0 0
        %934 = vmatpush1.bf16.msra.mxu0 0
        %935 = vmatprep.subr.bf16.mxu0 0
        %936 = vmatpush1.bf16.msra.mxu0 0
        %937 = vmatprep.subr.bf16.mxu0 0
        %938 = vmatpush1.bf16.msra.mxu0 0
        %939 = vmatprep.subr.bf16.mxu0 0
        %940 = vmatpush1.bf16.msra.mxu0 0
        %941 = vmatprep.subr.bf16.mxu0 0
        %942 = vmatpush1.bf16.msra.mxu0 0
        %943 = vmatprep.subr.bf16.mxu0 0
        %944 = vmatpush1.bf16.msra.mxu0 0
        %945 = vmatprep.subr.bf16.mxu0 0
        %946 = vmatpush1.bf16.msra.mxu0 0
        %947 = vmatprep.mubr.bf16.mxu0 0
        %948 = vmatmul.mubr.bf16.gmra.mrb[0].mxu0 %v910
        %v949 = vpop.f32.mrb[0].mxu0
        %v950 = vadd.f32 0.0, %v949
        %v951 = vpop.f32.mrb[0].mxu0
        %v952 = vpop.f32.mrb[0].mxu0
        %v953 = vpop.f32.mrb[0].mxu0
        %954 = vdwg.mxu0
        %955 = vrot.lane.b32.xlu0 %v566, 56
        %v956 = vpop.permute.xlu0 %955
        %v958 = vsel %vm569, %v906, 0
        %v961 = vsel %vm689, %v956, 0
        %963 = vmatprep.subr.bf16.mxu0 0
        %964 = vmatpush1.bf16.msra.mxu0 %v961
        %965 = vmatprep.subr.bf16.mxu0 0
        %966 = vmatpush1.bf16.msra.mxu0 0
        %967 = vmatprep.subr.bf16.mxu0 0
        %968 = vmatpush1.bf16.msra.mxu0 0
        %969 = vmatprep.subr.bf16.mxu0 0
        %970 = vmatpush1.bf16.msra.mxu0 0
        %971 = vmatprep.subr.bf16.mxu0 0
        %972 = vmatpush1.bf16.msra.mxu0 0
        %973 = vmatprep.subr.bf16.mxu0 0
        %974 = vmatpush1.bf16.msra.mxu0 0
        %975 = vmatprep.subr.bf16.mxu0 0
        %976 = vmatpush1.bf16.msra.mxu0 0
        %977 = vmatprep.subr.bf16.mxu0 0
        %978 = vmatpush1.bf16.msra.mxu0 0
        %979 = vmatprep.subr.bf16.mxu0 0
        %980 = vmatpush1.bf16.msra.mxu0 0
        %981 = vmatprep.subr.bf16.mxu0 0
        %982 = vmatpush1.bf16.msra.mxu0 0
        %983 = vmatprep.subr.bf16.mxu0 0
        %984 = vmatpush1.bf16.msra.mxu0 0
        %985 = vmatprep.subr.bf16.mxu0 0
        %986 = vmatpush1.bf16.msra.mxu0 0
        %987 = vmatprep.subr.bf16.mxu0 0
        %988 = vmatpush1.bf16.msra.mxu0 0
        %989 = vmatprep.subr.bf16.mxu0 0
        %990 = vmatpush1.bf16.msra.mxu0 0
        %991 = vmatprep.subr.bf16.mxu0 0
        %992 = vmatpush1.bf16.msra.mxu0 0
        %993 = vmatprep.subr.bf16.mxu0 0
        %994 = vmatpush1.bf16.msra.mxu0 0
        %995 = vmatprep.mubr.bf16.mxu0 0
        %996 = vmatmul.mubr.bf16.gmra.mrb[0].mxu0 %v958
        %v997 = vpop.f32.mrb[0].mxu0
        %v998 = vadd.f32 0.0, %v997
        %v999 = vpop.f32.mrb[0].mxu0
        %v1000 = vpop.f32.mrb[0].mxu0
        %v1001 = vpop.f32.mrb[0].mxu0
        %1002 = vdwg.mxu0
        %v1003 = vrcp.pop %v901
        %v1004 = vrcp.pop %v904
        %v1005 = vmul.f32 %v950, %v1003
        %v1006 = vmul.f32 %v998, %v1004
        %1009 = vrot.lane.b32.xlu0 %v1005, 8
        %v1010 = vpop.permute.xlu0 %1009
        %1011 = vrot.lane.b32.xlu0 %v1006, 8
        %v1012 = vpop.permute.xlu0 %1011
        %vm1015 = vcmask 130112
        %1016 = vst.msk [vmem:[#allocation2] sm:$0xff] %vm1015, %v1010
        %1017 = vst.msk [vmem:[#allocation2 + $0x8] sm:$0xff] %vm1015, %v1012
        %1018 = vrot.lane.b32.xlu0 %v565, 112
        %v1019 = vpop.permute.xlu0 %1018
        %1020 = vrot.lane.b32.xlu0 %v565, 80
        %v1021 = vpop.permute.xlu0 %1020
        %v1023 = vsel %vm569, %v1019, 0
        %v1026 = vsel %vm569, %v1021, 0
        %1028 = vmatprep.subr.bf16.mxu0 0
        %1029 = vmatpush1.bf16.xpose.msra.mxu0 %v1026
        %1030 = vmatprep.subr.bf16.mxu0 0
        %1031 = vmatpush1.bf16.xpose.msra.mxu0 0
        %1032 = vmatprep.subr.bf16.mxu0 0
        %1033 = vmatpush1.bf16.xpose.msra.mxu0 0
        %1034 = vmatprep.subr.bf16.mxu0 0
        %1035 = vmatpush1.bf16.xpose.msra.mxu0 0
        %1036 = vmatprep.subr.bf16.mxu0 0
        %1037 = vmatpush1.bf16.xpose.msra.mxu0 0
        %1038 = vmatprep.subr.bf16.mxu0 0
        %1039 = vmatpush1.bf16.xpose.msra.mxu0 0
        %1040 = vmatprep.subr.bf16.mxu0 0
        %1041 = vmatpush1.bf16.xpose.msra.mxu0 0
        %1042 = vmatprep.subr.bf16.mxu0 0
        %1043 = vmatpush1.bf16.xpose.msra.mxu0 0
        %1044 = vmatprep.subr.bf16.mxu0 0
        %1045 = vmatpush1.bf16.xpose.msra.mxu0 0
        %1046 = vmatprep.subr.bf16.mxu0 0
        %1047 = vmatpush1.bf16.xpose.msra.mxu0 0
        %1048 = vmatprep.subr.bf16.mxu0 0
        %1049 = vmatpush1.bf16.xpose.msra.mxu0 0
        %1050 = vmatprep.subr.bf16.mxu0 0
        %1051 = vmatpush1.bf16.xpose.msra.mxu0 0
        %1052 = vmatprep.subr.bf16.mxu0 0
        %1053 = vmatpush1.bf16.xpose.msra.mxu0 0
        %1054 = vmatprep.subr.bf16.mxu0 0
        %1055 = vmatpush1.bf16.xpose.msra.mxu0 0
        %1056 = vmatprep.subr.bf16.mxu0 0
        %1057 = vmatpush1.bf16.xpose.msra.mxu0 0
        %1058 = vmatprep.subr.bf16.mxu0 0
        %1059 = vmatpush1.bf16.xpose.msra.mxu0 0
        %1060 = vmatprep.mubr.bf16.mxu0 0
        %1061 = vmatmul.mubr.bf16.gmra.mrb[0].mxu0 %v1023
        %v1062 = vpop.f32.mrb[0].mxu0
        %v1063 = vadd.f32 0.0, %v1062
        %v1064 = vpop.f32.mrb[0].mxu0
        %v1065 = vpop.f32.mrb[0].mxu0
        %v1066 = vpop.f32.mrb[0].mxu0
        %1067 = vdwg.mxu0
        %1068 = vrot.lane.b32.xlu0 %v566, 112
        %v1069 = vpop.permute.xlu0 %1068
        %1070 = vrot.lane.b32.xlu0 %v566, 80
        %v1071 = vpop.permute.xlu0 %1070
        %v1073 = vsel %vm569, %v1069, 0
        %v1076 = vsel %vm569, %v1071, 0
        %1078 = vmatprep.subr.bf16.mxu0 0
        %1079 = vmatpush1.bf16.xpose.msra.mxu0 %v1076
        %1080 = vmatprep.subr.bf16.mxu0 0
        %1081 = vmatpush1.bf16.xpose.msra.mxu0 0
        %1082 = vmatprep.subr.bf16.mxu0 0
        %1083 = vmatpush1.bf16.xpose.msra.mxu0 0
        %1084 = vmatprep.subr.bf16.mxu0 0
        %1085 = vmatpush1.bf16.xpose.msra.mxu0 0
        %1086 = vmatprep.subr.bf16.mxu0 0
        %1087 = vmatpush1.bf16.xpose.msra.mxu0 0
        %1088 = vmatprep.subr.bf16.mxu0 0
        %1089 = vmatpush1.bf16.xpose.msra.mxu0 0
        %1090 = vmatprep.subr.bf16.mxu0 0
        %1091 = vmatpush1.bf16.xpose.msra.mxu0 0
        %1092 = vmatprep.subr.bf16.mxu0 0
        %1093 = vmatpush1.bf16.xpose.msra.mxu0 0
        %1094 = vmatprep.subr.bf16.mxu0 0
        %1095 = vmatpush1.bf16.xpose.msra.mxu0 0
        %1096 = vmatprep.subr.bf16.mxu0 0
        %1097 = vmatpush1.bf16.xpose.msra.mxu0 0
        %1098 = vmatprep.subr.bf16.mxu0 0
        %1099 = vmatpush1.bf16.xpose.msra.mxu0 0
        %1100 = vmatprep.subr.bf16.mxu0 0
        %1101 = vmatpush1.bf16.xpose.msra.mxu0 0
        %1102 = vmatprep.subr.bf16.mxu0 0
        %1103 = vmatpush1.bf16.xpose.msra.mxu0 0
        %1104 = vmatprep.subr.bf16.mxu0 0
        %1105 = vmatpush1.bf16.xpose.msra.mxu0 0
        %1106 = vmatprep.subr.bf16.mxu0 0
        %1107 = vmatpush1.bf16.xpose.msra.mxu0 0
        %1108 = vmatprep.subr.bf16.mxu0 0
        %1109 = vmatpush1.bf16.xpose.msra.mxu0 0
        %1110 = vmatprep.mubr.bf16.mxu0 0
        %1111 = vmatmul.mubr.bf16.gmra.mrb[0].mxu0 %v1073
        %v1112 = vpop.f32.mrb[0].mxu0
        %v1113 = vadd.f32 0.0, %v1112
        %v1114 = vpop.f32.mrb[0].mxu0
        %v1115 = vpop.f32.mrb[0].mxu0
        %v1116 = vpop.f32.mrb[0].mxu0
        %1117 = vdwg.mxu0
        %v1118 = vsel %vm569, %v1063, -inf
        %1119 = vmax.xlane.f32.xlu0 %v1118
        %v1120 = vpop.xlane.xlu0 %1119
        %v1121 = vsel %vm569, %v1113, -inf
        %1122 = vmax.xlane.f32.xlu0 %v1121
        %v1123 = vpop.xlane.xlu0 %1122
        %v1124 = vsub.f32 %v1063, %v1120
        %v1125 = vsub.f32 %v1113, %v1123
        %v1126 = vmul.f32 %v1124, 1.442695
        %v1127 = vpow.pop %v1126
        %v1128 = vmul.f32 %v1125, 1.442695
        %v1129 = vpow.pop %v1128
        %v1130 = vsel %vm569, %v1127, 0.0
        %1131 = vadd.xlane.f32.xlu0 %v1130
        %v1132 = vpop.xlane.xlu0 %1131
        %v1133 = vsel %vm569, %v1129, 0.0
        %1134 = vadd.xlane.f32.xlu0 %v1133
        %v1135 = vpop.xlane.xlu0 %1134
        %v1136 = vpack.c.bf16 %v1127, %v1127
        %v1137 = vpack.c.bf16 %v1129, %v1129
        %1138 = vrot.lane.b32.xlu0 %v565, 48
        %v1139 = vpop.permute.xlu0 %1138
        %v1141 = vsel %vm569, %v1136, 0
        %v1144 = vsel %vm689, %v1139, 0
        %1146 = vmatprep.subr.bf16.mxu0 0
        %1147 = vmatpush1.bf16.msra.mxu0 %v1144
        %1148 = vmatprep.subr.bf16.mxu0 0
        %1149 = vmatpush1.bf16.msra.mxu0 0
        %1150 = vmatprep.subr.bf16.mxu0 0
        %1151 = vmatpush1.bf16.msra.mxu0 0
        %1152 = vmatprep.subr.bf16.mxu0 0
        %1153 = vmatpush1.bf16.msra.mxu0 0
        %1154 = vmatprep.subr.bf16.mxu0 0
        %1155 = vmatpush1.bf16.msra.mxu0 0
        %1156 = vmatprep.subr.bf16.mxu0 0
        %1157 = vmatpush1.bf16.msra.mxu0 0
        %1158 = vmatprep.subr.bf16.mxu0 0
        %1159 = vmatpush1.bf16.msra.mxu0 0
        %1160 = vmatprep.subr.bf16.mxu0 0
        %1161 = vmatpush1.bf16.msra.mxu0 0
        %1162 = vmatprep.subr.bf16.mxu0 0
        %1163 = vmatpush1.bf16.msra.mxu0 0
        %1164 = vmatprep.subr.bf16.mxu0 0
        %1165 = vmatpush1.bf16.msra.mxu0 0
        %1166 = vmatprep.subr.bf16.mxu0 0
        %1167 = vmatpush1.bf16.msra.mxu0 0
        %1168 = vmatprep.subr.bf16.mxu0 0
        %1169 = vmatpush1.bf16.msra.mxu0 0
        %1170 = vmatprep.subr.bf16.mxu0 0
        %1171 = vmatpush1.bf16.msra.mxu0 0
        %1172 = vmatprep.subr.bf16.mxu0 0
        %1173 = vmatpush1.bf16.msra.mxu0 0
        %1174 = vmatprep.subr.bf16.mxu0 0
        %1175 = vmatpush1.bf16.msra.mxu0 0
        %1176 = vmatprep.subr.bf16.mxu0 0
        %1177 = vmatpush1.bf16.msra.mxu0 0
        %1178 = vmatprep.mubr.bf16.mxu0 0
        %1179 = vmatmul.mubr.bf16.gmra.mrb[0].mxu0 %v1141
        %v1180 = vpop.f32.mrb[0].mxu0
        %v1181 = vadd.f32 0.0, %v1180
        %v1182 = vpop.f32.mrb[0].mxu0
        %v1183 = vpop.f32.mrb[0].mxu0
        %v1184 = vpop.f32.mrb[0].mxu0
        %1185 = vdwg.mxu0
        %1186 = vrot.lane.b32.xlu0 %v566, 48
        %v1187 = vpop.permute.xlu0 %1186
        %v1189 = vsel %vm569, %v1137, 0
        %v1192 = vsel %vm689, %v1187, 0
        %1194 = vmatprep.subr.bf16.mxu0 0
        %1195 = vmatpush1.bf16.msra.mxu0 %v1192
        %1196 = vmatprep.subr.bf16.mxu0 0
        %1197 = vmatpush1.bf16.msra.mxu0 0
        %1198 = vmatprep.subr.bf16.mxu0 0
        %1199 = vmatpush1.bf16.msra.mxu0 0
        %1200 = vmatprep.subr.bf16.mxu0 0
        %1201 = vmatpush1.bf16.msra.mxu0 0
        %1202 = vmatprep.subr.bf16.mxu0 0
        %1203 = vmatpush1.bf16.msra.mxu0 0
        %1204 = vmatprep.subr.bf16.mxu0 0
        %1205 = vmatpush1.bf16.msra.mxu0 0
        %1206 = vmatprep.subr.bf16.mxu0 0
        %1207 = vmatpush1.bf16.msra.mxu0 0
        %1208 = vmatprep.subr.bf16.mxu0 0
        %1209 = vmatpush1.bf16.msra.mxu0 0
        %1210 = vmatprep.subr.bf16.mxu0 0
        %1211 = vmatpush1.bf16.msra.mxu0 0
        %1212 = vmatprep.subr.bf16.mxu0 0
        %1213 = vmatpush1.bf16.msra.mxu0 0
        %1214 = vmatprep.subr.bf16.mxu0 0
        %1215 = vmatpush1.bf16.msra.mxu0 0
        %1216 = vmatprep.subr.bf16.mxu0 0
        %1217 = vmatpush1.bf16.msra.mxu0 0
        %1218 = vmatprep.subr.bf16.mxu0 0
        %1219 = vmatpush1.bf16.msra.mxu0 0
        %1220 = vmatprep.subr.bf16.mxu0 0
        %1221 = vmatpush1.bf16.msra.mxu0 0
        %1222 = vmatprep.subr.bf16.mxu0 0
        %1223 = vmatpush1.bf16.msra.mxu0 0
        %1224 = vmatprep.subr.bf16.mxu0 0
        %1225 = vmatpush1.bf16.msra.mxu0 0
        %1226 = vmatprep.mubr.bf16.mxu0 0
        %1227 = vmatmul.mubr.bf16.gmra.mrb[0].mxu0 %v1189
        %v1228 = vpop.f32.mrb[0].mxu0
        %v1229 = vadd.f32 0.0, %v1228
        %v1230 = vpop.f32.mrb[0].mxu0
        %v1231 = vpop.f32.mrb[0].mxu0
        %v1232 = vpop.f32.mrb[0].mxu0
        %1233 = vdwg.mxu0
        %v1234 = vrcp.pop %v1132
        %v1235 = vrcp.pop %v1135
        %v1236 = vmul.f32 %v1181, %v1234
        %v1237 = vmul.f32 %v1229, %v1235
        %1240 = vrot.lane.b32.xlu0 %v1236, 16
        %v1241 = vpop.permute.xlu0 %1240
        %1242 = vrot.lane.b32.xlu0 %v1237, 16
        %v1243 = vpop.permute.xlu0 %1242
        %vm1246 = vcmask 195712
        %1247 = vst.msk [vmem:[#allocation2] sm:$0xff] %vm1246, %v1241
        %1248 = vst.msk [vmem:[#allocation2 + $0x8] sm:$0xff] %vm1246, %v1243
        %1249 = vrot.lane.b32.xlu0 %v565, 104
        %v1250 = vpop.permute.xlu0 %1249
        %1251 = vrot.lane.b32.xlu0 %v565, 72
        %v1252 = vpop.permute.xlu0 %1251
        %v1254 = vsel %vm569, %v1250, 0
        %v1257 = vsel %vm569, %v1252, 0
        %1259 = vmatprep.subr.bf16.mxu0 0
        %1260 = vmatpush1.bf16.xpose.msra.mxu0 %v1257
        %1261 = vmatprep.subr.bf16.mxu0 0
        %1262 = vmatpush1.bf16.xpose.msra.mxu0 0
        %1263 = vmatprep.subr.bf16.mxu0 0
        %1264 = vmatpush1.bf16.xpose.msra.mxu0 0
        %1265 = vmatprep.subr.bf16.mxu0 0
        %1266 = vmatpush1.bf16.xpose.msra.mxu0 0
        %1267 = vmatprep.subr.bf16.mxu0 0
        %1268 = vmatpush1.bf16.xpose.msra.mxu0 0
        %1269 = vmatprep.subr.bf16.mxu0 0
        %1270 = vmatpush1.bf16.xpose.msra.mxu0 0
        %1271 = vmatprep.subr.bf16.mxu0 0
        %1272 = vmatpush1.bf16.xpose.msra.mxu0 0
        %1273 = vmatprep.subr.bf16.mxu0 0
        %1274 = vmatpush1.bf16.xpose.msra.mxu0 0
        %1275 = vmatprep.subr.bf16.mxu0 0
        %1276 = vmatpush1.bf16.xpose.msra.mxu0 0
        %1277 = vmatprep.subr.bf16.mxu0 0
        %1278 = vmatpush1.bf16.xpose.msra.mxu0 0
        %1279 = vmatprep.subr.bf16.mxu0 0
        %1280 = vmatpush1.bf16.xpose.msra.mxu0 0
        %1281 = vmatprep.subr.bf16.mxu0 0
        %1282 = vmatpush1.bf16.xpose.msra.mxu0 0
        %1283 = vmatprep.subr.bf16.mxu0 0
        %1284 = vmatpush1.bf16.xpose.msra.mxu0 0
        %1285 = vmatprep.subr.bf16.mxu0 0
        %1286 = vmatpush1.bf16.xpose.msra.mxu0 0
        %1287 = vmatprep.subr.bf16.mxu0 0
        %1288 = vmatpush1.bf16.xpose.msra.mxu0 0
        %1289 = vmatprep.subr.bf16.mxu0 0
        %1290 = vmatpush1.bf16.xpose.msra.mxu0 0
        %1291 = vmatprep.mubr.bf16.mxu0 0
        %1292 = vmatmul.mubr.bf16.gmra.mrb[0].mxu0 %v1254
        %v1293 = vpop.f32.mrb[0].mxu0
        %v1294 = vadd.f32 0.0, %v1293
        %v1295 = vpop.f32.mrb[0].mxu0
        %v1296 = vpop.f32.mrb[0].mxu0
        %v1297 = vpop.f32.mrb[0].mxu0
        %1298 = vdwg.mxu0
        %1299 = vrot.lane.b32.xlu0 %v566, 104
        %v1300 = vpop.permute.xlu0 %1299
        %1301 = vrot.lane.b32.xlu0 %v566, 72
        %v1302 = vpop.permute.xlu0 %1301
        %v1304 = vsel %vm569, %v1300, 0
        %v1307 = vsel %vm569, %v1302, 0
        %1309 = vmatprep.subr.bf16.mxu0 0
        %1310 = vmatpush1.bf16.xpose.msra.mxu0 %v1307
        %1311 = vmatprep.subr.bf16.mxu0 0
        %1312 = vmatpush1.bf16.xpose.msra.mxu0 0
        %1313 = vmatprep.subr.bf16.mxu0 0
        %1314 = vmatpush1.bf16.xpose.msra.mxu0 0
        %1315 = vmatprep.subr.bf16.mxu0 0
        %1316 = vmatpush1.bf16.xpose.msra.mxu0 0
        %1317 = vmatprep.subr.bf16.mxu0 0
        %1318 = vmatpush1.bf16.xpose.msra.mxu0 0
        %1319 = vmatprep.subr.bf16.mxu0 0
        %1320 = vmatpush1.bf16.xpose.msra.mxu0 0
        %1321 = vmatprep.subr.bf16.mxu0 0
        %1322 = vmatpush1.bf16.xpose.msra.mxu0 0
        %1323 = vmatprep.subr.bf16.mxu0 0
        %1324 = vmatpush1.bf16.xpose.msra.mxu0 0
        %1325 = vmatprep.subr.bf16.mxu0 0
        %1326 = vmatpush1.bf16.xpose.msra.mxu0 0
        %1327 = vmatprep.subr.bf16.mxu0 0
        %1328 = vmatpush1.bf16.xpose.msra.mxu0 0
        %1329 = vmatprep.subr.bf16.mxu0 0
        %1330 = vmatpush1.bf16.xpose.msra.mxu0 0
        %1331 = vmatprep.subr.bf16.mxu0 0
        %1332 = vmatpush1.bf16.xpose.msra.mxu0 0
        %1333 = vmatprep.subr.bf16.mxu0 0
        %1334 = vmatpush1.bf16.xpose.msra.mxu0 0
        %1335 = vmatprep.subr.bf16.mxu0 0
        %1336 = vmatpush1.bf16.xpose.msra.mxu0 0
        %1337 = vmatprep.subr.bf16.mxu0 0
        %1338 = vmatpush1.bf16.xpose.msra.mxu0 0
        %1339 = vmatprep.subr.bf16.mxu0 0
        %1340 = vmatpush1.bf16.xpose.msra.mxu0 0
        %1341 = vmatprep.mubr.bf16.mxu0 0
        %1342 = vmatmul.mubr.bf16.gmra.mrb[0].mxu0 %v1304
        %v1343 = vpop.f32.mrb[0].mxu0
        %v1344 = vadd.f32 0.0, %v1343
        %v1345 = vpop.f32.mrb[0].mxu0
        %v1346 = vpop.f32.mrb[0].mxu0
        %v1347 = vpop.f32.mrb[0].mxu0
        %1348 = vdwg.mxu0
        %v1349 = vsel %vm569, %v1294, -inf
        %1350 = vmax.xlane.f32.xlu0 %v1349
        %v1351 = vpop.xlane.xlu0 %1350
        %v1352 = vsel %vm569, %v1344, -inf
        %1353 = vmax.xlane.f32.xlu0 %v1352
        %v1354 = vpop.xlane.xlu0 %1353
        %v1355 = vsub.f32 %v1294, %v1351
        %v1356 = vsub.f32 %v1344, %v1354
        %v1357 = vmul.f32 %v1355, 1.442695
        %v1358 = vpow.pop %v1357
        %v1359 = vmul.f32 %v1356, 1.442695
        %v1360 = vpow.pop %v1359
        %v1361 = vsel %vm569, %v1358, 0.0
        %1362 = vadd.xlane.f32.xlu0 %v1361
        %v1363 = vpop.xlane.xlu0 %1362
        %v1364 = vsel %vm569, %v1360, 0.0
        %1365 = vadd.xlane.f32.xlu0 %v1364
        %v1366 = vpop.xlane.xlu0 %1365
        %v1367 = vpack.c.bf16 %v1358, %v1358
        %v1368 = vpack.c.bf16 %v1360, %v1360
        %1369 = vrot.lane.b32.xlu0 %v565, 40
        %v1370 = vpop.permute.xlu0 %1369
        %v1372 = vsel %vm569, %v1367, 0
        %v1375 = vsel %vm689, %v1370, 0
        %1377 = vmatprep.subr.bf16.mxu0 0
        %1378 = vmatpush1.bf16.msra.mxu0 %v1375
        %1379 = vmatprep.subr.bf16.mxu0 0
        %1380 = vmatpush1.bf16.msra.mxu0 0
        %1381 = vmatprep.subr.bf16.mxu0 0
        %1382 = vmatpush1.bf16.msra.mxu0 0
        %1383 = vmatprep.subr.bf16.mxu0 0
        %1384 = vmatpush1.bf16.msra.mxu0 0
        %1385 = vmatprep.subr.bf16.mxu0 0
        %1386 = vmatpush1.bf16.msra.mxu0 0
        %1387 = vmatprep.subr.bf16.mxu0 0
        %1388 = vmatpush1.bf16.msra.mxu0 0
        %1389 = vmatprep.subr.bf16.mxu0 0
        %1390 = vmatpush1.bf16.msra.mxu0 0
        %1391 = vmatprep.subr.bf16.mxu0 0
        %1392 = vmatpush1.bf16.msra.mxu0 0
        %1393 = vmatprep.subr.bf16.mxu0 0
        %1394 = vmatpush1.bf16.msra.mxu0 0
        %1395 = vmatprep.subr.bf16.mxu0 0
        %1396 = vmatpush1.bf16.msra.mxu0 0
        %1397 = vmatprep.subr.bf16.mxu0 0
        %1398 = vmatpush1.bf16.msra.mxu0 0
        %1399 = vmatprep.subr.bf16.mxu0 0
        %1400 = vmatpush1.bf16.msra.mxu0 0
        %1401 = vmatprep.subr.bf16.mxu0 0
        %1402 = vmatpush1.bf16.msra.mxu0 0
        %1403 = vmatprep.subr.bf16.mxu0 0
        %1404 = vmatpush1.bf16.msra.mxu0 0
        %1405 = vmatprep.subr.bf16.mxu0 0
        %1406 = vmatpush1.bf16.msra.mxu0 0
        %1407 = vmatprep.subr.bf16.mxu0 0
        %1408 = vmatpush1.bf16.msra.mxu0 0
        %1409 = vmatprep.mubr.bf16.mxu0 0
        %1410 = vmatmul.mubr.bf16.gmra.mrb[0].mxu0 %v1372
        %v1411 = vpop.f32.mrb[0].mxu0
        %v1412 = vadd.f32 0.0, %v1411
        %v1413 = vpop.f32.mrb[0].mxu0
        %v1414 = vpop.f32.mrb[0].mxu0
        %v1415 = vpop.f32.mrb[0].mxu0
        %1416 = vdwg.mxu0
        %1417 = vrot.lane.b32.xlu0 %v566, 40
        %v1418 = vpop.permute.xlu0 %1417
        %v1420 = vsel %vm569, %v1368, 0
        %v1423 = vsel %vm689, %v1418, 0
        %1425 = vmatprep.subr.bf16.mxu0 0
        %1426 = vmatpush1.bf16.msra.mxu0 %v1423
        %1427 = vmatprep.subr.bf16.mxu0 0
        %1428 = vmatpush1.bf16.msra.mxu0 0
        %1429 = vmatprep.subr.bf16.mxu0 0
        %1430 = vmatpush1.bf16.msra.mxu0 0
        %1431 = vmatprep.subr.bf16.mxu0 0
        %1432 = vmatpush1.bf16.msra.mxu0 0
        %1433 = vmatprep.subr.bf16.mxu0 0
        %1434 = vmatpush1.bf16.msra.mxu0 0
        %1435 = vmatprep.subr.bf16.mxu0 0
        %1436 = vmatpush1.bf16.msra.mxu0 0
        %1437 = vmatprep.subr.bf16.mxu0 0
        %1438 = vmatpush1.bf16.msra.mxu0 0
        %1439 = vmatprep.subr.bf16.mxu0 0
        %1440 = vmatpush1.bf16.msra.mxu0 0
        %1441 = vmatprep.subr.bf16.mxu0 0
        %1442 = vmatpush1.bf16.msra.mxu0 0
        %1443 = vmatprep.subr.bf16.mxu0 0
        %1444 = vmatpush1.bf16.msra.mxu0 0
        %1445 = vmatprep.subr.bf16.mxu0 0
        %1446 = vmatpush1.bf16.msra.mxu0 0
        %1447 = vmatprep.subr.bf16.mxu0 0
        %1448 = vmatpush1.bf16.msra.mxu0 0
        %1449 = vmatprep.subr.bf16.mxu0 0
        %1450 = vmatpush1.bf16.msra.mxu0 0
        %1451 = vmatprep.subr.bf16.mxu0 0
        %1452 = vmatpush1.bf16.msra.mxu0 0
        %1453 = vmatprep.subr.bf16.mxu0 0
        %1454 = vmatpush1.bf16.msra.mxu0 0
        %1455 = vmatprep.subr.bf16.mxu0 0
        %1456 = vmatpush1.bf16.msra.mxu0 0
        %1457 = vmatprep.mubr.bf16.mxu0 0
        %1458 = vmatmul.mubr.bf16.gmra.mrb[0].mxu0 %v1420
        %v1459 = vpop.f32.mrb[0].mxu0
        %v1460 = vadd.f32 0.0, %v1459
        %v1461 = vpop.f32.mrb[0].mxu0
        %v1462 = vpop.f32.mrb[0].mxu0
        %v1463 = vpop.f32.mrb[0].mxu0
        %1464 = vdwg.mxu0
        %v1465 = vrcp.pop %v1363
        %v1466 = vrcp.pop %v1366
        %v1467 = vmul.f32 %v1412, %v1465
        %v1468 = vmul.f32 %v1460, %v1466
        %1471 = vrot.lane.b32.xlu0 %v1467, 24
        %v1472 = vpop.permute.xlu0 %1471
        %1473 = vrot.lane.b32.xlu0 %v1468, 24
        %v1474 = vpop.permute.xlu0 %1473
        %vm1477 = vcmask 261312
        %1478 = vst.msk [vmem:[#allocation2] sm:$0xff] %vm1477, %v1472
        %1479 = vst.msk [vmem:[#allocation2 + $0x8] sm:$0xff] %vm1477, %v1474
        %v1480 = vld [vmem:[#allocation2] sm:$0xff]
        %v1481 = vld [vmem:[#allocation2 + $0x8] sm:$0xff]
        %v1482 = vpack.c.bf16 %v1481, %v1480
        %v1483 = vld [vmem:[%s5] sm:$0xf]
        %v1484 = vld [vmem:[%s5 + $0x4] sm:$0xf]
        %v1485 = vld [vmem:[%s5 + $0x8] sm:$0xf]
        %v1486 = vld [vmem:[%s5 + $0xc] sm:$0xf]
        %v1487 = vld [vmem:[%s6] sm:$0x1]
        %v1489 = vlaneseq
        %v1490 = vshrl.u32 %v1489, 7
        %v1491 = vsub.s32 0, %v1490
        %v1492 = vrot.slane %v1487, %v1491
        %v1498 = vunpack.c.l.b16 %v1483
        %v1499 = vunpack.c.l.b16 %v1484
        %v1500 = vunpack.c.l.b16 %v1485
        %v1501 = vunpack.c.l.b16 %v1486
        %v1502 = vpack.c.b16 %v1499, %v1498
        %v1503 = vpack.c.b16 %v1501, %v1500
        %v1507 = vsel %vm449, %v1482, 0
        %1509 = vmatprep.subr.bf16.mxu0 0
        %1510 = vmatpush1.bf16.msra.mxu0 %v1502
        %1511 = vmatprep.subr.bf16.mxu0 0
        %1512 = vmatpush1.bf16.msra.mxu0 %v1503
        %1513 = vmatprep.subr.bf16.mxu0 0
        %1514 = vmatpush1.bf16.msra.mxu0 0
        %1515 = vmatprep.subr.bf16.mxu0 0
        %1516 = vmatpush1.bf16.msra.mxu0 0
        %1517 = vmatprep.subr.bf16.mxu0 0
        %1518 = vmatpush1.bf16.msra.mxu0 0
        %1519 = vmatprep.subr.bf16.mxu0 0
        %1520 = vmatpush1.bf16.msra.mxu0 0
        %1521 = vmatprep.subr.bf16.mxu0 0
        %1522 = vmatpush1.bf16.msra.mxu0 0
        %1523 = vmatprep.subr.bf16.mxu0 0
        %1524 = vmatpush1.bf16.msra.mxu0 0
        %1525 = vmatprep.subr.bf16.mxu0 0
        %1526 = vmatpush1.bf16.msra.mxu0 0
        %1527 = vmatprep.subr.bf16.mxu0 0
        %1528 = vmatpush1.bf16.msra.mxu0 0
        %1529 = vmatprep.subr.bf16.mxu0 0
        %1530 = vmatpush1.bf16.msra.mxu0 0
        %1531 = vmatprep.subr.bf16.mxu0 0
        %1532 = vmatpush1.bf16.msra.mxu0 0
        %1533 = vmatprep.subr.bf16.mxu0 0
        %1534 = vmatpush1.bf16.msra.mxu0 0
        %1535 = vmatprep.subr.bf16.mxu0 0
        %1536 = vmatpush1.bf16.msra.mxu0 0
        %1537 = vmatprep.subr.bf16.mxu0 0
        %1538 = vmatpush1.bf16.msra.mxu0 0
        %1539 = vmatprep.subr.bf16.mxu0 0
        %1540 = vmatpush1.bf16.msra.mxu0 0
        %1541 = vmatprep.mubr.bf16.mxu0 0
        %1542 = vmatmul.mubr.bf16.gmra.mrb[0].mxu0 %v1507
        %v1543 = vpop.f32.mrb[0].mxu0
        %v1544 = vadd.f32 %v1492, %v1543
        %v1545 = vpop.f32.mrb[0].mxu0
        %v1546 = vpop.f32.mrb[0].mxu0
        %v1547 = vadd.f32 %v1492, %v1546
        %v1548 = vpop.f32.mrb[0].mxu0
        %1549 = vdwg.mxu0
        %v1550 = vadd.f32 %v445, %v1544
        %v1551 = vadd.f32 %v446, %v1547
        %v1552 = vld [vmem:[%s7] sm:$0x1]
        %v1553 = vld [vmem:[%s8] sm:$0x1]
        %v1554 = vsel %vm449, %v1550, 0.0
        %1555 = vadd.xlane.f32.xlu0 %v1554
        %v1556 = vpop.xlane.xlu0 %1555
        %v1557 = vsel %vm449, %v1551, 0.0
        %1558 = vadd.xlane.f32.xlu0 %v1557
        %v1559 = vpop.xlane.xlu0 %1558
        %v1560 = vmul.f32 %v1556, %v456
        %v1561 = vmul.f32 %v1559, %v456
        %v1562 = vsub.f32 %v1550, %v1560
        %v1563 = vsub.f32 %v1551, %v1561
        %v1564 = vmul.f32 %v1562, %v1562
        %v1565 = vmul.f32 %v1563, %v1563
        %v1566 = vsel %vm449, %v1564, 0.0
        %1567 = vadd.xlane.f32.xlu0 %v1566
        %v1568 = vpop.xlane.xlu0 %1567
        %v1569 = vsel %vm449, %v1565, 0.0
        %1570 = vadd.xlane.f32.xlu0 %v1569
        %v1571 = vpop.xlane.xlu0 %1570
        %v1572 = vmul.f32 %v1568, %v456
        %v1573 = vmul.f32 %v1571, %v456
        %v1574 = vadd.f32 %v1572, 1e-05
        %v1575 = vadd.f32 %v1573, 1e-05
        %v1576 = vrsqrt.pop %v1574
        %v1577 = vrsqrt.pop %v1575
        %v1578 = vmul.f32 %v1562, %v1576
        %v1579 = vmul.f32 %v1563, %v1577
        %v1581 = vlaneseq
        %v1582 = vshrl.u32 %v1581, 7
        %v1583 = vsub.s32 0, %v1582
        %v1584 = vrot.slane %v1552, %v1583
        %v1586 = vmul.f32 %v1578, %v1584
        %v1587 = vmul.f32 %v1579, %v1584
        %v1589 = vlaneseq
        %v1590 = vshrl.u32 %v1589, 7
        %v1591 = vsub.s32 0, %v1590
        %v1592 = vrot.slane %v1553, %v1591
        %v1594 = vadd.f32 %v1586, %v1592
        %v1595 = vadd.f32 %v1587, %v1592
        %v1596 = vpack.c.bf16 %v1595, %v1594
        %v1597 = vld [vmem:[%s9] sm:$0xf]
        %v1598 = vld [vmem:[%s9 + $0x4] sm:$0xf]
        %v1599 = vld [vmem:[%s9 + $0x8] sm:$0xf]
        %v1600 = vld [vmem:[%s9 + $0xc] sm:$0xf]
        %v1601 = vld [vmem:[%s10] sm:$0x1]
        %v1603 = vlaneseq
        %v1604 = vshrl.u32 %v1603, 7
        %v1605 = vsub.s32 0, %v1604
        %v1606 = vrot.slane %v1601, %v1605
        %v1612 = vunpack.c.l.b16 %v1597
        %v1613 = vunpack.c.l.b16 %v1598
        %v1614 = vunpack.c.l.b16 %v1599
        %v1615 = vunpack.c.l.b16 %v1600
        %v1616 = vpack.c.b16 %v1613, %v1612
        %v1617 = vpack.c.b16 %v1615, %v1614
        %v1621 = vsel %vm449, %v1596, 0
        %1623 = vmatprep.subr.bf16.mxu0 0
        %1624 = vmatpush1.bf16.msra.mxu0 %v1616
        %1625 = vmatprep.subr.bf16.mxu0 0
        %1626 = vmatpush1.bf16.msra.mxu0 %v1617
        %1627 = vmatprep.subr.bf16.mxu0 0
        %1628 = vmatpush1.bf16.msra.mxu0 0
        %1629 = vmatprep.subr.bf16.mxu0 0
        %1630 = vmatpush1.bf16.msra.mxu0 0
        %1631 = vmatprep.subr.bf16.mxu0 0
        %1632 = vmatpush1.bf16.msra.mxu0 0
        %1633 = vmatprep.subr.bf16.mxu0 0
        %1634 = vmatpush1.bf16.msra.mxu0 0
        %1635 = vmatprep.subr.bf16.mxu0 0
        %1636 = vmatpush1.bf16.msra.mxu0 0
        %1637 = vmatprep.subr.bf16.mxu0 0
        %1638 = vmatpush1.bf16.msra.mxu0 0
        %1639 = vmatprep.subr.bf16.mxu0 0
        %1640 = vmatpush1.bf16.msra.mxu0 0
        %1641 = vmatprep.subr.bf16.mxu0 0
        %1642 = vmatpush1.bf16.msra.mxu0 0
        %1643 = vmatprep.subr.bf16.mxu0 0
        %1644 = vmatpush1.bf16.msra.mxu0 0
        %1645 = vmatprep.subr.bf16.mxu0 0
        %1646 = vmatpush1.bf16.msra.mxu0 0
        %1647 = vmatprep.subr.bf16.mxu0 0
        %1648 = vmatpush1.bf16.msra.mxu0 0
        %1649 = vmatprep.subr.bf16.mxu0 0
        %1650 = vmatpush1.bf16.msra.mxu0 0
        %1651 = vmatprep.subr.bf16.mxu0 0
        %1652 = vmatpush1.bf16.msra.mxu0 0
        %1653 = vmatprep.subr.bf16.mxu0 0
        %1654 = vmatpush1.bf16.msra.mxu0 0
        %1655 = vmatprep.mubr.bf16.mxu0 0
        %1656 = vmatmul.mubr.bf16.gmra.mrb[0].mxu0 %v1621
        %v1657 = vpop.f32.mrb[0].mxu0
        %v1658 = vadd.f32 %v1606, %v1657
        %v1659 = vpop.f32.mrb[0].mxu0
        %v1660 = vpop.f32.mrb[0].mxu0
        %v1661 = vadd.f32 %v1606, %v1660
        %v1662 = vpop.f32.mrb[0].mxu0
        %1663 = vdwg.mxu0
        %v1664 = vpack.c.bf16 %v1661, %v1658
        %v1665 = vmul.bf16 %v1664, 1071267802
        %v1666 = vxor.u32 %v1665, 2147516416
        %v1668 = vmul.bf16 %v1666, 1069105081
        %v1669 = vpow.bf16.pop %v1668
        %v1670 = vadd.bf16 %v1669, 1065369472
        %v1671 = vrcp.bf16.pop %v1670
        %v1672 = vmul.bf16 1065369472, %v1671
        %v1673 = vmul.bf16 %v1664, %v1672
        %v1674 = vld [vmem:[%s11] sm:$0xf]
        %v1675 = vld [vmem:[%s11 + $0x4] sm:$0xf]
        %v1676 = vld [vmem:[%s11 + $0x8] sm:$0xf]
        %v1677 = vld [vmem:[%s11 + $0xc] sm:$0xf]
        %v1678 = vld [vmem:[%s11 + $0x10] sm:$0xf]
        %v1679 = vld [vmem:[%s11 + $0x14] sm:$0xf]
        %v1680 = vld [vmem:[%s11 + $0x18] sm:$0xf]
        %v1681 = vld [vmem:[%s11 + $0x1c] sm:$0xf]
        %v1682 = vld [vmem:[%s11 + $0x20] sm:$0xf]
        %v1683 = vld [vmem:[%s11 + $0x24] sm:$0xf]
        %v1684 = vld [vmem:[%s11 + $0x28] sm:$0xf]
        %v1685 = vld [vmem:[%s11 + $0x2c] sm:$0xf]
        %v1686 = vld [vmem:[%s11 + $0x30] sm:$0xf]
        %v1687 = vld [vmem:[%s11 + $0x34] sm:$0xf]
        %v1688 = vld [vmem:[%s11 + $0x38] sm:$0xf]
        %v1689 = vld [vmem:[%s11 + $0x3c] sm:$0xf]
        %v1690 = vld [vmem:[%s12] sm:$0x1]
        %v1692 = vlaneseq
        %v1693 = vshrl.u32 %v1692, 7
        %v1694 = vsub.s32 0, %v1693
        %v1695 = vrot.slane %v1690, %v1694
        %v1713 = vunpack.c.l.b16 %v1674
        %v1714 = vunpack.c.l.b16 %v1675
        %v1715 = vunpack.c.l.b16 %v1676
        %v1716 = vunpack.c.l.b16 %v1677
        %v1717 = vunpack.c.l.b16 %v1678
        %v1718 = vunpack.c.l.b16 %v1679
        %v1719 = vunpack.c.l.b16 %v1680
        %v1720 = vunpack.c.l.b16 %v1681
        %v1721 = vunpack.c.l.b16 %v1682
        %v1722 = vunpack.c.l.b16 %v1683
        %v1723 = vunpack.c.l.b16 %v1684
        %v1724 = vunpack.c.l.b16 %v1685
        %v1725 = vunpack.c.l.b16 %v1686
        %v1726 = vunpack.c.l.b16 %v1687
        %v1727 = vunpack.c.l.b16 %v1688
        %v1728 = vunpack.c.l.b16 %v1689
        %v1729 = vpack.c.b16 %v1714, %v1713
        %v1730 = vpack.c.b16 %v1716, %v1715
        %v1731 = vpack.c.b16 %v1718, %v1717
        %v1732 = vpack.c.b16 %v1720, %v1719
        %v1733 = vpack.c.b16 %v1722, %v1721
        %v1734 = vpack.c.b16 %v1724, %v1723
        %v1735 = vpack.c.b16 %v1726, %v1725
        %v1736 = vpack.c.b16 %v1728, %v1727
        %1745 = vmatprep.subr.bf16.mxu0 0
        %1746 = vmatpush1.bf16.msra.mxu0 %v1729
        %1747 = vmatprep.subr.bf16.mxu0 0
        %1748 = vmatpush1.bf16.msra.mxu0 %v1730
        %1749 = vmatprep.subr.bf16.mxu0 0
        %1750 = vmatpush1.bf16.msra.mxu0 %v1731
        %1751 = vmatprep.subr.bf16.mxu0 0
        %1752 = vmatpush1.bf16.msra.mxu0 %v1732
        %1753 = vmatprep.subr.bf16.mxu0 0
        %1754 = vmatpush1.bf16.msra.mxu0 %v1733
        %1755 = vmatprep.subr.bf16.mxu0 0
        %1756 = vmatpush1.bf16.msra.mxu0 %v1734
        %1757 = vmatprep.subr.bf16.mxu0 0
        %1758 = vmatpush1.bf16.msra.mxu0 %v1735
        %1759 = vmatprep.subr.bf16.mxu0 0
        %1760 = vmatpush1.bf16.msra.mxu0 %v1736
        %1761 = vmatprep.subr.bf16.mxu0 0
        %1762 = vmatpush1.bf16.msra.mxu0 0
        %1763 = vmatprep.subr.bf16.mxu0 0
        %1764 = vmatpush1.bf16.msra.mxu0 0
        %1765 = vmatprep.subr.bf16.mxu0 0
        %1766 = vmatpush1.bf16.msra.mxu0 0
        %1767 = vmatprep.subr.bf16.mxu0 0
        %1768 = vmatpush1.bf16.msra.mxu0 0
        %1769 = vmatprep.subr.bf16.mxu0 0
        %1770 = vmatpush1.bf16.msra.mxu0 0
        %1771 = vmatprep.subr.bf16.mxu0 0
        %1772 = vmatpush1.bf16.msra.mxu0 0
        %1773 = vmatprep.subr.bf16.mxu0 0
        %1774 = vmatpush1.bf16.msra.mxu0 0
        %1775 = vmatprep.subr.bf16.mxu0 0
        %1776 = vmatpush1.bf16.msra.mxu0 0
        %1777 = vmatprep.mubr.bf16.mxu0 0
        %1778 = vmatmul.mubr.bf16.gmra.mrb[0].mxu0 %v1673
        %v1779 = vpop.f32.mrb[0].mxu0
        %v1780 = vadd.f32 %v1695, %v1779
        %v1781 = vpop.f32.mrb[0].mxu0
        %v1782 = vpop.f32.mrb[0].mxu0
        %v1783 = vadd.f32 %v1695, %v1782
        %v1784 = vpop.f32.mrb[0].mxu0
        %1785 = vdwg.mxu0
        %v1786 = vadd.f32 %v1550, %v1780
        %v1787 = vadd.f32 %v1551, %v1783
        %1788 = vst.msk [vmem:[%s434] sm:$0xff] %vm449, %v1786
        %1789 = vst.msk [vmem:[%s434 + $0x8] sm:$0xff] %vm449, %v1787
        %s1790 = sand.u32 %s313, 1
        %s1791 = scalar_lea.sflag [#allocation4], %s1790
        %s1792 = sand.u32 %s313, 1
        %s1793 = smul.addr %s1792, 16
        %s1794 = scalar_lea.vmem [#allocation3], %s1793
        // Predicated region
        $region73: #{tpu_custom_call.1} parent=71 // pred_check
          %p1795 = pneg %p323
        $region74: #{tpu_custom_call.1} parent=71 // pred_check_branch
          %1797 = sbr.rel (%p1795) target = $region76
        $region75: #{tpu_custom_call.1} parent=71 // pred_region
          %s1798 = smul.u32 2, %s27
          %s1800 = ssub.s32 256, 256
          %1801 = vsyncadd %s1791, %s1800
          %s1802 = smul.addr %s1798, 128
          %s1803 = scalar_lea.hbm %s13, %s1802
          %s1804 = sshll.u32 %s1794, 4
          %s1805 = int_to_ptr.vmem [resolvable:$true] %s1804
          %1810 = dma.vmem_to_hbm [thread:$0]  %s1805, 256, %s1803, %s1791, 128, 128, 8
        $region76: #{tpu_custom_call.1} parent=71 // pred_fallthru
          _
      $region72: #{tpu_custom_call.1} parent=5 // pred_fallthru
        _
      %p1811 = scmp.le.s32.totalorder 2, %s22
      // Predicated region
      $region77: #{tpu_custom_call.1} parent=5 // pred_check
        %p1812 = pneg %p1811
      $region78: #{tpu_custom_call.1} parent=5 // pred_check_branch
        %1814 = sbr.rel (%p1812) target = $region80
      $region79: #{tpu_custom_call.1} parent=5 // pred_region
        %s1815 = ssub.s32 %s22, 2
        // Predicated region
        $region81: #{tpu_custom_call.1} parent=79 // pred_check
          %p1816 = pneg %p329
        $region82: #{tpu_custom_call.1} parent=79 // pred_check_branch
          %1818 = sbr.rel (%p1816) target = $region84
        $region83: #{tpu_custom_call.1} parent=79 // pred_region
          %s1819 = sand.u32 %s314, 1
          %s1820 = scalar_lea.sflag [#allocation4], %s1819
          %s1821 = sand.u32 %s314, 1
          %s1822 = smul.addr %s1821, 16
          %s1823 = scalar_lea.vmem [#allocation3], %s1822
          %1824 = dma.done %s1820, 256
        $region84: #{tpu_custom_call.1} parent=79 // pred_fallthru
          _
      $region80: #{tpu_custom_call.1} parent=5 // pred_fallthru
        _
    $region6: #{tpu_custom_call.1} parent=1 // loop_footer
      %s26 = sadd.s32 1, %s22
    $region7: #{tpu_custom_call.1} parent=1 // loop_footer_branch
      %21 = sbr.rel target = $region3
    $region8: #{tpu_custom_call.1} parent=1 // loop_exit
      _
    %1825 = vsyncpa [#allocation4], 1
    %s1826 = scalar_lea.sflag [#allocation4], 1
    %1827 = vsyncpa %s1826, 1

</llo_original>
